<compile_context>
chip_gen: v5e
topology: v5e:2x2
jax: 0.10.0
libtpu: 0.0.40
codegen_flags: <defaults>
</compile_context>

<pallas_src>
import functools

import jax
import jax.numpy as jnp
from jax import lax
from jax.experimental import pallas as pl
from jax.experimental.pallas import tpu as pltpu

HEAD_PAD = 128  # lane-dense width of the fused classifier/regressor head


# ---------------------------------------------------------------------------
# In-kernel helpers (traced once inside each fused kernel)
# ---------------------------------------------------------------------------
def _split_biases(bias_ref, wl_ref, wc_ref, wfc1_ref, wtr1_ref, whd_ref,
                  whh_ref, wout_ref):
    """Slice the packed (1, sum) f32 bias row.  Order must match init_params."""
    D = wl_ref.shape[0]
    R = wc_ref.shape[1]
    F1 = wfc1_ref.shape[1]
    T1 = wtr1_ref.shape[1]
    HP = whd_ref.shape[1]
    H3 = 3 * whh_ref.shape[0]
    V = wout_ref.shape[1]
    sizes = [("bl", D), ("bh", D), ("bc", R), ("ba", R), ("bf", R),
             ("bfc1", F1), ("btr1", T1), ("bhd", HP), ("binit", R),
             ("bih", H3), ("bhh", H3), ("bout", V)]
    out, off = {}, 0
    for name, n in sizes:           # all offsets/sizes are multiples of 128
        out[name] = bias_ref[:, off:off + n]
        off += n
    return out


def _encoder_core(x_ref, add_ref, wl_ref, wh_ref, wc_ref, wa_ref, wf_ref,
                  wfc1_ref, wtr1_ref, whd_ref, winit_ref, b, head_ref,
                  num_functions):
    """Pool -> linears -> fused heads (argmax/one-hot/sigmoid) -> init hidden.

    Writes head_ref (2, HEAD_PAD); returns hidden (1, R) f32 (stays in VMEM/vregs).
    """
    f32, bf16 = jnp.float32, jnp.bfloat16

    def mm(a, w_ref):               # bf16 operands, f32 accumulation
        return jnp.dot(a.astype(bf16), w_ref[...], preferred_element_type=f32)

    def relu(v):
        return jnp.maximum(v, 0.0)

    xv = x_ref[...]                                   # (BN, D) f32
    n_rows = xv.shape[0]
    last_msg = xv[n_rows - 1:n_rows, :]               # (1, D)
    hist_avg = jnp.mean(xv, axis=0, keepdims=True)    # (1, D)

    last_feat = relu(mm(last_msg, wl_ref) + b["bl"])
    hist_feat = relu(mm(hist_avg, wh_ref) + b["bh"])

    # concat-K matmuls (lane concat of (1,*) vregs is free, fills MXU depth)
    rep_conv = relu(mm(jnp.concatenate([last_feat, hist_feat], axis=1),
                       wc_ref) + b["bc"])                              # (1, R)
    add_feat = relu(mm(add_ref[...], wa_ref) + b["ba"])                # (1, R)
    final_rep = relu(mm(jnp.concatenate([rep_conv, add_feat], axis=1),
                        wf_ref) + b["bf"])                             # (1, R)

    func_h = relu(mm(final_rep, wfc1_ref) + b["bfc1"])                 # (1, 256)
    time_h = relu(mm(final_rep, wtr1_ref) + b["btr1"])                 # (1, 128)

    # fused lane-dense head: cols [0:NF) = function logits, col NF = time score
    head_raw = mm(jnp.concatenate([func_h, time_h], axis=1),
                  whd_ref) + b["bhd"]                                  # (1, 128)

    HP = whd_ref.shape[1]
    lane = lax.broadcasted_iota(jnp.int32, (1, HP), 1)
    lane_f = lane.astype(f32)
    masked = jnp.where(lane < num_functions, head_raw, jnp.float32(-1e30))
    fmax = jnp.max(masked, axis=1, keepdims=True)
    cand = jnp.where(masked == fmax, lane_f, jnp.float32(HP))
    fidx = jnp.min(cand, axis=1, keepdims=True)                        # first argmax
    head_ref[0:1, :] = (lane_f == fidx).astype(f32)                    # one-hot (padded)
    tscore = jax.nn.sigmoid(head_raw[:, num_functions:num_functions + 1])
    head_ref[1:2, :] = jnp.broadcast_to(tscore, (1, HP))

    return mm(final_rep, winit_ref) + b["binit"]                       # (1, R)


# ---------------------------------------------------------------------------
# Fused kernel 1: encoder + heads + teacher-forcing GRU + output projection
# ---------------------------------------------------------------------------
def _fused_tf_kernel(x_ref, add_ref, tokemb_ref,
                     wl_ref, wh_ref, wc_ref, wa_ref, wf_ref,
                     wfc1_ref, wtr1_ref, whd_ref, winit_ref,
                     wih_ref, whh_ref, wout_ref, bias_ref,
                     head_ref, logits_ref, gi_scr, *, num_functions):
    f32, bf16 = jnp.float32, jnp.bfloat16
    b = _split_biases(bias_ref, wl_ref, wc_ref, wfc1_ref, wtr1_ref, whd_ref,
                      whh_ref, wout_ref)
    hidden = _encoder_core(x_ref, add_ref, wl_ref, wh_ref, wc_ref, wa_ref,
                           wf_ref, wfc1_ref, wtr1_ref, whd_ref, winit_ref,
                           b, head_ref, num_functions)

    T = tokemb_ref.shape[0]
    H = whh_ref.shape[0]

    # Hoisted input projection: one (T,E)x(E,3H) matmul instead of T tiny ones.
    gi_scr[...] = jnp.dot(tokemb_ref[...].astype(bf16), wih_ref[...],
                          preferred_element_type=f32) + b["bih"]

    whh = whh_ref[...]
    bhh = b["bhh"]
    h = hidden
    hs = []
    for t in range(T):                       # static T -> fully unrolled
        gi = gi_scr[t:t + 1, :]              # (1, 3H)
        gh = jnp.dot(h.astype(bf16), whh, preferred_element_type=f32) + bhh
        r = jax.nn.sigmoid(gi[:, :H] + gh[:, :H])
        z = jax.nn.sigmoid(gi[:, H:2 * H] + gh[:, H:2 * H])
        n_ = jnp.tanh(gi[:, 2 * H:] + r * gh[:, 2 * H:])
        h = (1.0 - z) * n_ + z * h
        hs.append(h)                         # stays in vregs (T*H f32 = 16 vregs)

    hseq = jnp.concatenate(hs, axis=0)       # (T, H)
    # Fused output projection: single lane-dense (T, V) store.
    logits_ref[...] = jnp.dot(hseq.astype(bf16), wout_ref[...],
                              preferred_element_type=f32) + b["bout"]


# ---------------------------------------------------------------------------
# Fused kernel 2: encoder + heads + whole greedy-decode loop
# ---------------------------------------------------------------------------
def _fused_greedy_kernel(x_ref, add_ref, emb_ref,
                         wl_ref, wh_ref, wc_ref, wa_ref, wf_ref,
                         wfc1_ref, wtr1_ref, whd_ref, winit_ref,
                         wih_ref, whh_ref, wout_ref, bias_ref,
                         head_ref, tok_ref, *, num_functions, max_gen_len):
    f32, bf16 = jnp.float32, jnp.bfloat16
    b = _split_biases(bias_ref, wl_ref, wc_ref, wfc1_ref, wtr1_ref, whd_ref,
                      whh_ref, wout_ref)
    hidden = _encoder_core(x_ref, add_ref, wl_ref, wh_ref, wc_ref, wa_ref,
                           wf_ref, wfc1_ref, wtr1_ref, whd_ref, winit_ref,
                           b, head_ref, num_functions)

    V = emb_ref.shape[0]
    H = whh_ref.shape[0]

    emb_b = emb_ref[...].astype(bf16)        # hoisted bf16 table for one-hot matmul
    wih = wih_ref[...]
    whh = whh_ref[...]
    wout = wout_ref[...]
    bih, bhh, bout = b["bih"], b["bhh"], b["bout"]
    lane = lax.broadcasted_iota(jnp.int32, (1, V), 1).astype(f32)      # (1, V)

    h = hidden
    dec_in = emb_ref[1:2, :]                 # start token id = 1, (1, E) f32
    for t in range(max_gen_len):             # static -> fully unrolled
        gi = jnp.dot(dec_in.astype(bf16), wih, preferred_element_type=f32) + bih
        gh = jnp.dot(h.astype(bf16), whh, preferred_element_type=f32) + bhh
        r = jax.nn.sigmoid(gi[:, :H] + gh[:, :H])
        z = jax.nn.sigmoid(gi[:, H:2 * H] + gh[:, H:2 * H])
        n_ = jnp.tanh(gi[:, 2 * H:] + r * gh[:, 2 * H:])
        h = (1.0 - z) * n_ + z * h

        logits = jnp.dot(h.astype(bf16), wout, preferred_element_type=f32) + bout

        # argmax (first max index) via masked-iota min -- vector ops only
        maxv = jnp.max(logits, axis=1, keepdims=True)
        cand = jnp.where(logits == maxv, lane, jnp.float32(V))
        pred_f = jnp.min(cand, axis=1, keepdims=True)                  # (1, 1)

        # token id broadcast across a full 128-lane row (lane-dense store)
        tok_ref[t:t + 1, :] = jnp.broadcast_to(pred_f.astype(jnp.int32), (1, 128))

        # embedding lookup as one-hot @ bf16 table (MXU, no gather)
        onehot = (lane == pred_f).astype(bf16)                         # (1, V)
        dec_in = jnp.dot(onehot, emb_b, preferred_element_type=f32)    # (1, E)


# ---------------------------------------------------------------------------
# Parameter construction (deterministic, PyTorch-style uniform init)
# ---------------------------------------------------------------------------
def _linear_init(key, fan_in, fan_out):
    k = 1.0 / float(fan_in) ** 0.5
    kw, kb = jax.random.split(key)
    w = jax.random.uniform(kw, (fan_in, fan_out), jnp.float32, -k, k)
    b = jax.random.uniform(kb, (1, fan_out), jnp.float32, -k, k)
    return w, b


def init_params(key, input_dim, rep_dim, num_functions, vocab_size, embedding_dim):
    assert num_functions + 1 <= HEAD_PAD
    bf16 = jnp.bfloat16
    keys = jax.random.split(key, 16)

    wl, bl = _linear_init(keys[0], input_dim, input_dim)
    wh_, bh_ = _linear_init(keys[1], input_dim, input_dim)
    wc, bc = _linear_init(keys[2], 2 * input_dim, rep_dim)
    wa, ba = _linear_init(keys[3], 4 * embedding_dim, rep_dim)
    wf, bf_ = _linear_init(keys[4], 2 * rep_dim, rep_dim)
    wfc1, bfc1 = _linear_init(keys[5], rep_dim, 256)
    fc2_w, fc2_b = _linear_init(keys[6], 256, num_functions)
    wtr1, btr1 = _linear_init(keys[7], rep_dim, 128)
    tr2_w, tr2_b = _linear_init(keys[8], 128, 1)
    winit, binit = _linear_init(keys[9], rep_dim, rep_dim)

    # Lane-dense fused head weight: [func_h ; time_h] (1,384) @ (384,128)
    hw = jnp.zeros((256 + 128, HEAD_PAD), jnp.float32)
    hw = hw.at[:256, :num_functions].set(fc2_w)
    hw = hw.at[256:, num_functions:num_functions + 1].set(tr2_w)
    hb = jnp.zeros((1, HEAD_PAD), jnp.float32)
    hb = hb.at[:, :num_functions].set(fc2_b[0])
    hb = hb.at[:, num_functions:num_functions + 1].set(tr2_b[0])

    emb = jax.random.normal(keys[10], (vocab_size, embedding_dim), jnp.float32)

    kg = 1.0 / float(rep_dim) ** 0.5
    gk = jax.random.split(keys[11], 4)
    wih = jax.random.uniform(gk[0], (embedding_dim, 3 * rep_dim), jnp.float32, -kg, kg)
    whh = jax.random.uniform(gk[1], (rep_dim, 3 * rep_dim), jnp.float32, -kg, kg)
    bih = jax.random.uniform(gk[2], (1, 3 * rep_dim), jnp.float32, -kg, kg)
    bhh = jax.random.uniform(gk[3], (1, 3 * rep_dim), jnp.float32, -kg, kg)
    wout, bout = _linear_init(keys[12], rep_dim, vocab_size)

    p = {
        # bf16 weight storage (MXU-native operands; f32 accumulation in-kernel)
        "linear_last_w": wl.astype(bf16),
        "linear_hist_w": wh_.astype(bf16),
        "combined_w": wc.astype(bf16),
        "additional_w": wa.astype(bf16),
        "final_w": wf.astype(bf16),
        "fc1_w": wfc1.astype(bf16),
        "tr1_w": wtr1.astype(bf16),
        "heads_w": hw.astype(bf16),
        "init_hidden_w": winit.astype(bf16),
        "gru_wih": wih.astype(bf16),
        "gru_whh": whh.astype(bf16),
        "out_w": wout.astype(bf16),
        # f32 table (used by XLA gathers in the wrapper; cast in-kernel for matmul)
        "token_embeddings": emb,
        # single packed f32 bias row (order MUST match _split_biases)
        "bias_pack": jnp.concatenate(
            [bl, bh_, bc, ba, bf_, bfc1, btr1, hb, binit, bih, bhh, bout], axis=1),
    }
    return p


def _weight_args(p):
    return (p["linear_last_w"], p["linear_hist_w"], p["combined_w"],
            p["additional_w"], p["final_w"], p["fc1_w"], p["tr1_w"],
            p["heads_w"], p["init_hidden_w"], p["gru_wih"], p["gru_whh"],
            p["out_w"], p["bias_pack"])


# ---------------------------------------------------------------------------
# Forward pass (mirrors ChatSessionToQueryStrModel.forward)
# ---------------------------------------------------------------------------
def forward(params, x, user_name_tokens, user_qq_tokens, target_name_tokens,
            target_qq_tokens, decoder_input_tokens=None, *,
            num_functions=6, max_gen_len=8):
    if x.ndim == 3:
        B, N, D = x.shape
        x = x.reshape(B * N, D)              # matches PyTorch x.view(B*N, D)

    emb_table = params["token_embeddings"]

    def tok_mean(tokens):                    # (1, L) -> (1, E); tiny gather glue
        return jnp.mean(jnp.take(emb_table, tokens[0], axis=0), axis=0, keepdims=True)

    add_in = jnp.concatenate(
        [tok_mean(user_name_tokens), tok_mean(user_qq_tokens),
         tok_mean(target_name_tokens), tok_mean(target_qq_tokens)], axis=1)

    H = params["gru_whh"].shape[0]
    V = params["out_w"].shape[1]

    if decoder_input_tokens is not None:
        tok_emb = jnp.take(emb_table, decoder_input_tokens[0], axis=0)   # (T, E)
        T = tok_emb.shape[0]
        head, logits = pl.pallas_call(
            functools.partial(_fused_tf_kernel, num_functions=num_functions),
            out_shape=(jax.ShapeDtypeStruct((2, HEAD_PAD), jnp.float32),
                       jax.ShapeDtypeStruct((T, V), jnp.float32)),
            scratch_shapes=[pltpu.VMEM((T, 3 * H), jnp.float32)],
        )(x, add_in, tok_emb, *_weight_args(params))
        query_text = logits[None]                                        # (1, T, V)
    else:
        head, tok_rows = pl.pallas_call(
            functools.partial(_fused_greedy_kernel, num_functions=num_functions,
                              max_gen_len=max_gen_len),
            out_shape=(jax.ShapeDtypeStruct((2, HEAD_PAD), jnp.float32),
                       jax.ShapeDtypeStruct((max_gen_len, 128), jnp.int32)),
        )(x, add_in, emb_table, *_weight_args(params))
        query_text = tok_rows[:, 0][None, :]                             # (1, max_gen_len)

    function_onehot = head[0:1, :num_functions]      # one-hot computed in-kernel
    time_score = head[1:2, 0:1]                      # sigmoid applied in-kernel
    return function_onehot, time_score, query_text


# ---------------------------------------------------------------------------
# Demo
# ---------------------------------------------------------------------------
if __name__ == "__main__":
    # small-but-consistent hyperparameters
    INPUT_DIM, REP_DIM = 128, 256
    NUM_FUNCTIONS, VOCAB, EMB, MAX_GEN = 6, 512, 64, 8

    key = jax.random.PRNGKey(0)
    kp, kx, kt = jax.random.split(key, 3)
    params = init_params(kp, INPUT_DIM, REP_DIM, NUM_FUNCTIONS, VOCAB, EMB)

    x = jax.random.normal(kx, (2, 4, INPUT_DIM), jnp.float32)   # (B, N, D)
    tks = jax.random.split(kt, 5)
    user_name_tokens = jax.random.randint(tks[0], (1, 3), 0, VOCAB)
    user_qq_tokens = jax.random.randint(tks[1], (1, 4), 0, VOCAB)
    target_name_tokens = jax.random.randint(tks[2], (1, 3), 0, VOCAB)
    target_qq_tokens = jax.random.randint(tks[3], (1, 4), 0, VOCAB)
    decoder_input_tokens = jax.random.randint(tks[4], (1, 8), 0, VOCAB)

    fwd = jax.jit(forward, static_argnames=("num_functions", "max_gen_len"))

    # teacher-forcing branch
    onehot, tscore, logits = fwd(
        params, x, user_name_tokens, user_qq_tokens, target_name_tokens,
        target_qq_tokens, decoder_input_tokens,
        num_functions=NUM_FUNCTIONS, max_gen_len=MAX_GEN)
    jax.block_until_ready((onehot, tscore, logits))
    assert onehot.shape == (1, NUM_FUNCTIONS)
    assert float(jnp.sum(onehot)) == 1.0
    assert tscore.shape == (1, 1)
    assert 0.0 <= float(tscore[0, 0]) <= 1.0
    assert logits.shape == (1, 8, VOCAB)
    assert bool(jnp.all(jnp.isfinite(logits)))

    # greedy-decode branch
    onehot2, tscore2, tokens = fwd(
        params, x, user_name_tokens, user_qq_tokens, target_name_tokens,
        target_qq_tokens, None,
        num_functions=NUM_FUNCTIONS, max_gen_len=MAX_GEN)
    jax.block_until_ready((onehot2, tscore2, tokens))
    assert tokens.shape == (1, MAX_GEN)
    assert bool(jnp.all((tokens >= 0) & (tokens < VOCAB)))

    print("KERNEL_OK")
</pallas_src>

<mosaic_0001>
module attributes {stable_mosaic.version = 11 : i64} {
  func.func @_fused_tf_kernel(%arg0: memref<8x128xf32, #tpu.memory_space<vmem>>, %arg1: memref<1x256xf32, #tpu.memory_space<vmem>>, %arg2: memref<8x64xf32, #tpu.memory_space<vmem>>, %arg3: memref<128x128xbf16, #tpu.memory_space<vmem>>, %arg4: memref<128x128xbf16, #tpu.memory_space<vmem>>, %arg5: memref<256x256xbf16, #tpu.memory_space<vmem>>, %arg6: memref<256x256xbf16, #tpu.memory_space<vmem>>, %arg7: memref<512x256xbf16, #tpu.memory_space<vmem>>, %arg8: memref<256x256xbf16, #tpu.memory_space<vmem>>, %arg9: memref<256x128xbf16, #tpu.memory_space<vmem>>, %arg10: memref<384x128xbf16, #tpu.memory_space<vmem>>, %arg11: memref<256x256xbf16, #tpu.memory_space<vmem>>, %arg12: memref<64x768xbf16, #tpu.memory_space<vmem>>, %arg13: memref<256x768xbf16, #tpu.memory_space<vmem>>, %arg14: memref<256x512xbf16, #tpu.memory_space<vmem>>, %arg15: memref<1x3840xf32, #tpu.memory_space<vmem>>, %arg16: memref<2x128xf32, #tpu.memory_space<vmem>>, %arg17: memref<8x512xf32, #tpu.memory_space<vmem>>, %arg18: memref<8x768xf32, #tpu.memory_space<vmem>>) attributes {dimension_semantics = [], scalar_prefetch = 0 : i64, scratch_operands = 1 : i64, tpu.core_type = #tpu.core_type<tc>} {
    %c0 = arith.constant 0 : index
    %c0_0 = arith.constant 0 : index
    %0 = vector.load %arg15[%c0, %c0_0] : memref<1x3840xf32, #tpu.memory_space<vmem>>, vector<1x128xf32>
    %c0_1 = arith.constant 0 : index
    %c128 = arith.constant 128 : index
    %1 = vector.load %arg15[%c0_1, %c128] : memref<1x3840xf32, #tpu.memory_space<vmem>>, vector<1x128xf32>
    %c0_2 = arith.constant 0 : index
    %c256 = arith.constant 256 : index
    %2 = vector.load %arg15[%c0_2, %c256] : memref<1x3840xf32, #tpu.memory_space<vmem>>, vector<1x256xf32>
    %c0_3 = arith.constant 0 : index
    %c512 = arith.constant 512 : index
    %3 = vector.load %arg15[%c0_3, %c512] : memref<1x3840xf32, #tpu.memory_space<vmem>>, vector<1x256xf32>
    %c0_4 = arith.constant 0 : index
    %c768 = arith.constant 768 : index
    %4 = vector.load %arg15[%c0_4, %c768] : memref<1x3840xf32, #tpu.memory_space<vmem>>, vector<1x256xf32>
    %c0_5 = arith.constant 0 : index
    %c1024 = arith.constant 1024 : index
    %5 = vector.load %arg15[%c0_5, %c1024] : memref<1x3840xf32, #tpu.memory_space<vmem>>, vector<1x256xf32>
    %c0_6 = arith.constant 0 : index
    %c1280 = arith.constant 1280 : index
    %6 = vector.load %arg15[%c0_6, %c1280] : memref<1x3840xf32, #tpu.memory_space<vmem>>, vector<1x128xf32>
    %c0_7 = arith.constant 0 : index
    %c1408 = arith.constant 1408 : index
    %7 = vector.load %arg15[%c0_7, %c1408] : memref<1x3840xf32, #tpu.memory_space<vmem>>, vector<1x128xf32>
    %c0_8 = arith.constant 0 : index
    %c1536 = arith.constant 1536 : index
    %8 = vector.load %arg15[%c0_8, %c1536] : memref<1x3840xf32, #tpu.memory_space<vmem>>, vector<1x256xf32>
    %c0_9 = arith.constant 0 : index
    %c1792 = arith.constant 1792 : index
    %9 = vector.load %arg15[%c0_9, %c1792] : memref<1x3840xf32, #tpu.memory_space<vmem>>, vector<1x768xf32>
    %c0_10 = arith.constant 0 : index
    %c2560 = arith.constant 2560 : index
    %10 = vector.load %arg15[%c0_10, %c2560] : memref<1x3840xf32, #tpu.memory_space<vmem>>, vector<1x768xf32>
    %c0_11 = arith.constant 0 : index
    %c3328 = arith.constant 3328 : index
    %11 = vector.load %arg15[%c0_11, %c3328] : memref<1x3840xf32, #tpu.memory_space<vmem>>, vector<1x512xf32>
    %c0_12 = arith.constant 0 : index
    %c0_13 = arith.constant 0 : index
    %12 = vector.load %arg0[%c0_12, %c0_13] : memref<8x128xf32, #tpu.memory_space<vmem>>, vector<8x128xf32>
    %13 = vector.extract_strided_slice %12 {offsets = [7, 0], sizes = [1, 128], strides = [1, 1]} : vector<8x128xf32> to vector<1x128xf32>
    %cst = arith.constant dense<0.000000e+00> : vector<128xf32>
    %14 = vector.multi_reduction <add>, %12, %cst [0] : vector<8x128xf32> to vector<128xf32>
    %15 = vector.shape_cast %14 : vector<128xf32> to vector<1x128xf32>
    %cst_14 = arith.constant 8.000000e+00 : f32
    %16 = vector.broadcast %cst_14 : f32 to vector<1x128xf32>
    %17 = arith.divf %15, %16 : vector<1x128xf32>
    %18 = arith.truncf %13 : vector<1x128xf32> to vector<1x128xbf16>
    %c0_15 = arith.constant 0 : index
    %c0_16 = arith.constant 0 : index
    %19 = vector.load %arg3[%c0_15, %c0_16] : memref<128x128xbf16, #tpu.memory_space<vmem>>, vector<128x128xbf16>
    %cst_17 = arith.constant dense<0.000000e+00> : vector<1x128xf32>
    %20 = tpu.matmul %18, %19, %cst_17 {dimension_numbers = #tpu.dot_dimension_numbers<[1], [0], [0], [1], [0, 0, 1, 1], [], []>} : vector<1x128xbf16>, vector<128x128xbf16>, vector<1x128xf32> -> vector<1x128xf32>
    %21 = arith.addf %20, %0 : vector<1x128xf32>
    %cst_18 = arith.constant 0.000000e+00 : f32
    %22 = vector.broadcast %cst_18 : f32 to vector<1x128xf32>
    %23 = arith.maximumf %21, %22 : vector<1x128xf32>
    %24 = arith.truncf %17 : vector<1x128xf32> to vector<1x128xbf16>
    %c0_19 = arith.constant 0 : index
    %c0_20 = arith.constant 0 : index
    %25 = vector.load %arg4[%c0_19, %c0_20] : memref<128x128xbf16, #tpu.memory_space<vmem>>, vector<128x128xbf16>
    %cst_21 = arith.constant dense<0.000000e+00> : vector<1x128xf32>
    %26 = tpu.matmul %24, %25, %cst_21 {dimension_numbers = #tpu.dot_dimension_numbers<[1], [0], [0], [1], [0, 0, 1, 1], [], []>} : vector<1x128xbf16>, vector<128x128xbf16>, vector<1x128xf32> -> vector<1x128xf32>
    %27 = arith.addf %26, %1 : vector<1x128xf32>
    %cst_22 = arith.constant 0.000000e+00 : f32
    %28 = vector.broadcast %cst_22 : f32 to vector<1x128xf32>
    %29 = arith.maximumf %27, %28 : vector<1x128xf32>
    %30 = tpu.concatenate %23, %29 in 1 : vector<1x128xf32>, vector<1x128xf32> -> vector<1x256xf32>
    %31 = arith.truncf %30 : vector<1x256xf32> to vector<1x256xbf16>
    %c0_23 = arith.constant 0 : index
    %c0_24 = arith.constant 0 : index
    %32 = vector.load %arg5[%c0_23, %c0_24] : memref<256x256xbf16, #tpu.memory_space<vmem>>, vector<256x256xbf16>
    %cst_25 = arith.constant dense<0.000000e+00> : vector<1x256xf32>
    %33 = tpu.matmul %31, %32, %cst_25 {dimension_numbers = #tpu.dot_dimension_numbers<[1], [0], [0], [1], [0, 0, 1, 1], [], []>} : vector<1x256xbf16>, vector<256x256xbf16>, vector<1x256xf32> -> vector<1x256xf32>
    %34 = arith.addf %33, %2 : vector<1x256xf32>
    %cst_26 = arith.constant 0.000000e+00 : f32
    %35 = vector.broadcast %cst_26 : f32 to vector<1x256xf32>
    %36 = arith.maximumf %34, %35 : vector<1x256xf32>
    %c0_27 = arith.constant 0 : index
    %c0_28 = arith.constant 0 : index
    %37 = vector.load %arg1[%c0_27, %c0_28] : memref<1x256xf32, #tpu.memory_space<vmem>>, vector<1x256xf32>
    %38 = arith.truncf %37 : vector<1x256xf32> to vector<1x256xbf16>
    %c0_29 = arith.constant 0 : index
    %c0_30 = arith.constant 0 : index
    %39 = vector.load %arg6[%c0_29, %c0_30] : memref<256x256xbf16, #tpu.memory_space<vmem>>, vector<256x256xbf16>
    %cst_31 = arith.constant dense<0.000000e+00> : vector<1x256xf32>
    %40 = tpu.matmul %38, %39, %cst_31 {dimension_numbers = #tpu.dot_dimension_numbers<[1], [0], [0], [1], [0, 0, 1, 1], [], []>} : vector<1x256xbf16>, vector<256x256xbf16>, vector<1x256xf32> -> vector<1x256xf32>
    %41 = arith.addf %40, %3 : vector<1x256xf32>
    %cst_32 = arith.constant 0.000000e+00 : f32
    %42 = vector.broadcast %cst_32 : f32 to vector<1x256xf32>
    %43 = arith.maximumf %41, %42 : vector<1x256xf32>
    %44 = tpu.concatenate %36, %43 in 1 : vector<1x256xf32>, vector<1x256xf32> -> vector<1x512xf32>
    %45 = arith.truncf %44 : vector<1x512xf32> to vector<1x512xbf16>
    %c0_33 = arith.constant 0 : index
    %c0_34 = arith.constant 0 : index
    %46 = vector.load %arg7[%c0_33, %c0_34] : memref<512x256xbf16, #tpu.memory_space<vmem>>, vector<512x256xbf16>
    %cst_35 = arith.constant dense<0.000000e+00> : vector<1x256xf32>
    %47 = tpu.matmul %45, %46, %cst_35 {dimension_numbers = #tpu.dot_dimension_numbers<[1], [0], [0], [1], [0, 0, 1, 1], [], []>} : vector<1x512xbf16>, vector<512x256xbf16>, vector<1x256xf32> -> vector<1x256xf32>
    %48 = arith.addf %47, %4 : vector<1x256xf32>
    %cst_36 = arith.constant 0.000000e+00 : f32
    %49 = vector.broadcast %cst_36 : f32 to vector<1x256xf32>
    %50 = arith.maximumf %48, %49 : vector<1x256xf32>
    %51 = arith.truncf %50 : vector<1x256xf32> to vector<1x256xbf16>
    %c0_37 = arith.constant 0 : index
    %c0_38 = arith.constant 0 : index
    %52 = vector.load %arg8[%c0_37, %c0_38] : memref<256x256xbf16, #tpu.memory_space<vmem>>, vector<256x256xbf16>
    %cst_39 = arith.constant dense<0.000000e+00> : vector<1x256xf32>
    %53 = tpu.matmul %51, %52, %cst_39 {dimension_numbers = #tpu.dot_dimension_numbers<[1], [0], [0], [1], [0, 0, 1, 1], [], []>} : vector<1x256xbf16>, vector<256x256xbf16>, vector<1x256xf32> -> vector<1x256xf32>
    %54 = arith.addf %53, %5 : vector<1x256xf32>
    %cst_40 = arith.constant 0.000000e+00 : f32
    %55 = vector.broadcast %cst_40 : f32 to vector<1x256xf32>
    %56 = arith.maximumf %54, %55 : vector<1x256xf32>
    %57 = arith.truncf %50 : vector<1x256xf32> to vector<1x256xbf16>
    %c0_41 = arith.constant 0 : index
    %c0_42 = arith.constant 0 : index
    %58 = vector.load %arg9[%c0_41, %c0_42] : memref<256x128xbf16, #tpu.memory_space<vmem>>, vector<256x128xbf16>
    %cst_43 = arith.constant dense<0.000000e+00> : vector<1x128xf32>
    %59 = tpu.matmul %57, %58, %cst_43 {dimension_numbers = #tpu.dot_dimension_numbers<[1], [0], [0], [1], [0, 0, 1, 1], [], []>} : vector<1x256xbf16>, vector<256x128xbf16>, vector<1x128xf32> -> vector<1x128xf32>
    %60 = arith.addf %59, %6 : vector<1x128xf32>
    %cst_44 = arith.constant 0.000000e+00 : f32
    %61 = vector.broadcast %cst_44 : f32 to vector<1x128xf32>
    %62 = arith.maximumf %60, %61 : vector<1x128xf32>
    %63 = tpu.concatenate %56, %62 in 1 : vector<1x256xf32>, vector<1x128xf32> -> vector<1x384xf32>
    %64 = arith.truncf %63 : vector<1x384xf32> to vector<1x384xbf16>
    %c0_45 = arith.constant 0 : index
    %c0_46 = arith.constant 0 : index
    %65 = vector.load %arg10[%c0_45, %c0_46] : memref<384x128xbf16, #tpu.memory_space<vmem>>, vector<384x128xbf16>
    %cst_47 = arith.constant dense<0.000000e+00> : vector<1x128xf32>
    %66 = tpu.matmul %64, %65, %cst_47 {dimension_numbers = #tpu.dot_dimension_numbers<[1], [0], [0], [1], [0, 0, 1, 1], [], []>} : vector<1x384xbf16>, vector<384x128xbf16>, vector<1x128xf32> -> vector<1x128xf32>
    %67 = arith.addf %66, %7 : vector<1x128xf32>
    %68 = tpu.iota {dimensions = array<i32: 1>} : vector<1x128xi32>
    %69 = arith.sitofp %68 : vector<1x128xi32> to vector<1x128xf32>
    %c6_i32 = arith.constant 6 : i32
    %70 = vector.broadcast %c6_i32 : i32 to vector<1x128xi32>
    %71 = arith.cmpi slt, %68, %70 : vector<1x128xi32>
    %cst_48 = arith.constant -1.000000e+30 : f32
    %72 = vector.broadcast %cst_48 : f32 to vector<1x128xf32>
    %73 = arith.select %71, %67, %72 : vector<1x128xi1>, vector<1x128xf32>
    %cst_49 = arith.constant dense<0xFF800000> : vector<1xf32>
    %74 = vector.multi_reduction <maximumf>, %73, %cst_49 [1] : vector<1x128xf32> to vector<1xf32>
    %75 = vector.shape_cast %74 : vector<1xf32> to vector<1x1xf32>
    %76 = vector.broadcast %75 : vector<1x1xf32> to vector<1x128xf32>
    %77 = arith.cmpf oeq, %73, %76 : vector<1x128xf32>
    %cst_50 = arith.constant 1.280000e+02 : f32
    %78 = vector.broadcast %cst_50 : f32 to vector<1x128xf32>
    %79 = arith.select %77, %69, %78 : vector<1x128xi1>, vector<1x128xf32>
    %cst_51 = arith.constant dense<0x7F800000> : vector<1xf32>
    %80 = vector.multi_reduction <minimumf>, %79, %cst_51 [1] : vector<1x128xf32> to vector<1xf32>
    %81 = vector.shape_cast %80 : vector<1xf32> to vector<1x1xf32>
    %82 = vector.broadcast %81 : vector<1x1xf32> to vector<1x128xf32>
    %83 = arith.cmpf oeq, %69, %82 : vector<1x128xf32>
    %84 = arith.extui %83 : vector<1x128xi1> to vector<1x128xi32>
    %85 = arith.sitofp %84 : vector<1x128xi32> to vector<1x128xf32>
    %c0_52 = arith.constant 0 : index
    %c0_53 = arith.constant 0 : index
    %86 = vector.load %arg16[%c0_52, %c0_53] : memref<2x128xf32, #tpu.memory_space<vmem>>, vector<1x128xf32>
    tpu.vector_store %arg16[%c0_52, %c0_53], %85 {strides = array<i32>} : memref<2x128xf32, #tpu.memory_space<vmem>>, vector<1x128xf32>,
    %87 = vector.extract_strided_slice %67 {offsets = [0, 6], sizes = [1, 1], strides = [1, 1]} : vector<1x128xf32> to vector<1x1xf32>
    %88 = arith.negf %87 : vector<1x1xf32>
    %89 = math.exp %88 : vector<1x1xf32>
    %cst_54 = arith.constant 1.000000e+00 : f32
    %90 = vector.broadcast %cst_54 : f32 to vector<1x1xf32>
    %91 = arith.addf %90, %89 : vector<1x1xf32>
    %92 = arith.divf %90, %91 : vector<1x1xf32>
    %93 = vector.shape_cast %92 : vector<1x1xf32> to vector<1x1xf32>
    %94 = vector.broadcast %93 : vector<1x1xf32> to vector<1x128xf32>
    %c1 = arith.constant 1 : index
    %c0_55 = arith.constant 0 : index
    %95 = vector.load %arg16[%c1, %c0_55] : memref<2x128xf32, #tpu.memory_space<vmem>>, vector<1x128xf32>
    tpu.vector_store %arg16[%c1, %c0_55], %94 {strides = array<i32>} : memref<2x128xf32, #tpu.memory_space<vmem>>, vector<1x128xf32>,
    %96 = arith.truncf %50 : vector<1x256xf32> to vector<1x256xbf16>
    %c0_56 = arith.constant 0 : index
    %c0_57 = arith.constant 0 : index
    %97 = vector.load %arg11[%c0_56, %c0_57] : memref<256x256xbf16, #tpu.memory_space<vmem>>, vector<256x256xbf16>
    %cst_58 = arith.constant dense<0.000000e+00> : vector<1x256xf32>
    %98 = tpu.matmul %96, %97, %cst_58 {dimension_numbers = #tpu.dot_dimension_numbers<[1], [0], [0], [1], [0, 0, 1, 1], [], []>} : vector<1x256xbf16>, vector<256x256xbf16>, vector<1x256xf32> -> vector<1x256xf32>
    %99 = arith.addf %98, %8 : vector<1x256xf32>
    %c0_59 = arith.constant 0 : index
    %c0_60 = arith.constant 0 : index
    %100 = vector.load %arg2[%c0_59, %c0_60] : memref<8x64xf32, #tpu.memory_space<vmem>>, vector<8x64xf32>
    %101 = arith.truncf %100 : vector<8x64xf32> to vector<8x64xbf16>
    %c0_61 = arith.constant 0 : index
    %c0_62 = arith.constant 0 : index
    %102 = vector.load %arg12[%c0_61, %c0_62] : memref<64x768xbf16, #tpu.memory_space<vmem>>, vector<64x768xbf16>
    %cst_63 = arith.constant dense<0.000000e+00> : vector<8x768xf32>
    %103 = tpu.matmul %101, %102, %cst_63 {dimension_numbers = #tpu.dot_dimension_numbers<[1], [0], [0], [1], [0, 0, 1, 1], [], []>} : vector<8x64xbf16>, vector<64x768xbf16>, vector<8x768xf32> -> vector<8x768xf32>
    %104 = vector.broadcast %9 : vector<1x768xf32> to vector<8x768xf32>
    %105 = arith.addf %103, %104 : vector<8x768xf32>
    %c0_64 = arith.constant 0 : index
    %c0_65 = arith.constant 0 : index
    %106 = vector.load %arg18[%c0_64, %c0_65] : memref<8x768xf32, #tpu.memory_space<vmem>>, vector<8x768xf32>
    tpu.vector_store %arg18[%c0_64, %c0_65], %105 {strides = array<i32>} : memref<8x768xf32, #tpu.memory_space<vmem>>, vector<8x768xf32>,
    %c0_66 = arith.constant 0 : index
    %c0_67 = arith.constant 0 : index
    %107 = vector.load %arg13[%c0_66, %c0_67] : memref<256x768xbf16, #tpu.memory_space<vmem>>, vector<256x768xbf16>
    %c0_68 = arith.constant 0 : index
    %c0_69 = arith.constant 0 : index
    %108 = vector.load %arg18[%c0_68, %c0_69] : memref<8x768xf32, #tpu.memory_space<vmem>>, vector<1x768xf32>
    %109 = arith.truncf %99 : vector<1x256xf32> to vector<1x256xbf16>
    %cst_70 = arith.constant dense<0.000000e+00> : vector<1x768xf32>
    %110 = tpu.matmul %109, %107, %cst_70 {dimension_numbers = #tpu.dot_dimension_numbers<[1], [0], [0], [1], [0, 0, 1, 1], [], []>} : vector<1x256xbf16>, vector<256x768xbf16>, vector<1x768xf32> -> vector<1x768xf32>
    %111 = arith.addf %110, %10 : vector<1x768xf32>
    %112 = vector.extract_strided_slice %108 {offsets = [0, 0], sizes = [1, 256], strides = [1, 1]} : vector<1x768xf32> to vector<1x256xf32>
    %113 = vector.extract_strided_slice %111 {offsets = [0, 0], sizes = [1, 256], strides = [1, 1]} : vector<1x768xf32> to vector<1x256xf32>
    %114 = arith.addf %112, %113 : vector<1x256xf32>
    %115 = arith.negf %114 : vector<1x256xf32>
    %116 = math.exp %115 : vector<1x256xf32>
    %cst_71 = arith.constant 1.000000e+00 : f32
    %117 = vector.broadcast %cst_71 : f32 to vector<1x256xf32>
    %118 = arith.addf %117, %116 : vector<1x256xf32>
    %119 = arith.divf %117, %118 : vector<1x256xf32>
    %120 = vector.extract_strided_slice %108 {offsets = [0, 256], sizes = [1, 256], strides = [1, 1]} : vector<1x768xf32> to vector<1x256xf32>
    %121 = vector.extract_strided_slice %111 {offsets = [0, 256], sizes = [1, 256], strides = [1, 1]} : vector<1x768xf32> to vector<1x256xf32>
    %122 = arith.addf %120, %121 : vector<1x256xf32>
    %123 = arith.negf %122 : vector<1x256xf32>
    %124 = math.exp %123 : vector<1x256xf32>
    %cst_72 = arith.constant 1.000000e+00 : f32
    %125 = vector.broadcast %cst_72 : f32 to vector<1x256xf32>
    %126 = arith.addf %125, %124 : vector<1x256xf32>
    %127 = arith.divf %125, %126 : vector<1x256xf32>
    %128 = vector.extract_strided_slice %108 {offsets = [0, 512], sizes = [1, 256], strides = [1, 1]} : vector<1x768xf32> to vector<1x256xf32>
    %129 = vector.extract_strided_slice %111 {offsets = [0, 512], sizes = [1, 256], strides = [1, 1]} : vector<1x768xf32> to vector<1x256xf32>
    %130 = arith.mulf %119, %129 : vector<1x256xf32>
    %131 = arith.addf %128, %130 : vector<1x256xf32>
    %132 = math.tanh %131 : vector<1x256xf32>
    %cst_73 = arith.constant 1.000000e+00 : f32
    %133 = vector.broadcast %cst_73 : f32 to vector<1x256xf32>
    %134 = arith.subf %133, %127 : vector<1x256xf32>
    %135 = arith.mulf %134, %132 : vector<1x256xf32>
    %136 = arith.mulf %127, %99 : vector<1x256xf32>
    %137 = arith.addf %135, %136 : vector<1x256xf32>
    %c1_74 = arith.constant 1 : index
    %c0_75 = arith.constant 0 : index
    %138 = vector.load %arg18[%c1_74, %c0_75] : memref<8x768xf32, #tpu.memory_space<vmem>>, vector<1x768xf32>
    %139 = arith.truncf %137 : vector<1x256xf32> to vector<1x256xbf16>
    %cst_76 = arith.constant dense<0.000000e+00> : vector<1x768xf32>
    %140 = tpu.matmul %139, %107, %cst_76 {dimension_numbers = #tpu.dot_dimension_numbers<[1], [0], [0], [1], [0, 0, 1, 1], [], []>} : vector<1x256xbf16>, vector<256x768xbf16>, vector<1x768xf32> -> vector<1x768xf32>
    %141 = arith.addf %140, %10 : vector<1x768xf32>
    %142 = vector.extract_strided_slice %138 {offsets = [0, 0], sizes = [1, 256], strides = [1, 1]} : vector<1x768xf32> to vector<1x256xf32>
    %143 = vector.extract_strided_slice %141 {offsets = [0, 0], sizes = [1, 256], strides = [1, 1]} : vector<1x768xf32> to vector<1x256xf32>
    %144 = arith.addf %142, %143 : vector<1x256xf32>
    %145 = arith.negf %144 : vector<1x256xf32>
    %146 = math.exp %145 : vector<1x256xf32>
    %cst_77 = arith.constant 1.000000e+00 : f32
    %147 = vector.broadcast %cst_77 : f32 to vector<1x256xf32>
    %148 = arith.addf %147, %146 : vector<1x256xf32>
    %149 = arith.divf %147, %148 : vector<1x256xf32>
    %150 = vector.extract_strided_slice %138 {offsets = [0, 256], sizes = [1, 256], strides = [1, 1]} : vector<1x768xf32> to vector<1x256xf32>
    %151 = vector.extract_strided_slice %141 {offsets = [0, 256], sizes = [1, 256], strides = [1, 1]} : vector<1x768xf32> to vector<1x256xf32>
    %152 = arith.addf %150, %151 : vector<1x256xf32>
    %153 = arith.negf %152 : vector<1x256xf32>
    %154 = math.exp %153 : vector<1x256xf32>
    %cst_78 = arith.constant 1.000000e+00 : f32
    %155 = vector.broadcast %cst_78 : f32 to vector<1x256xf32>
    %156 = arith.addf %155, %154 : vector<1x256xf32>
    %157 = arith.divf %155, %156 : vector<1x256xf32>
    %158 = vector.extract_strided_slice %138 {offsets = [0, 512], sizes = [1, 256], strides = [1, 1]} : vector<1x768xf32> to vector<1x256xf32>
    %159 = vector.extract_strided_slice %141 {offsets = [0, 512], sizes = [1, 256], strides = [1, 1]} : vector<1x768xf32> to vector<1x256xf32>
    %160 = arith.mulf %149, %159 : vector<1x256xf32>
    %161 = arith.addf %158, %160 : vector<1x256xf32>
    %162 = math.tanh %161 : vector<1x256xf32>
    %cst_79 = arith.constant 1.000000e+00 : f32
    %163 = vector.broadcast %cst_79 : f32 to vector<1x256xf32>
    %164 = arith.subf %163, %157 : vector<1x256xf32>
    %165 = arith.mulf %164, %162 : vector<1x256xf32>
    %166 = arith.mulf %157, %137 : vector<1x256xf32>
    %167 = arith.addf %165, %166 : vector<1x256xf32>
    %c2 = arith.constant 2 : index
    %c0_80 = arith.constant 0 : index
    %168 = vector.load %arg18[%c2, %c0_80] : memref<8x768xf32, #tpu.memory_space<vmem>>, vector<1x768xf32>
    %169 = arith.truncf %167 : vector<1x256xf32> to vector<1x256xbf16>
    %cst_81 = arith.constant dense<0.000000e+00> : vector<1x768xf32>
    %170 = tpu.matmul %169, %107, %cst_81 {dimension_numbers = #tpu.dot_dimension_numbers<[1], [0], [0], [1], [0, 0, 1, 1], [], []>} : vector<1x256xbf16>, vector<256x768xbf16>, vector<1x768xf32> -> vector<1x768xf32>
    %171 = arith.addf %170, %10 : vector<1x768xf32>
    %172 = vector.extract_strided_slice %168 {offsets = [0, 0], sizes = [1, 256], strides = [1, 1]} : vector<1x768xf32> to vector<1x256xf32>
    %173 = vector.extract_strided_slice %171 {offsets = [0, 0], sizes = [1, 256], strides = [1, 1]} : vector<1x768xf32> to vector<1x256xf32>
    %174 = arith.addf %172, %173 : vector<1x256xf32>
    %175 = arith.negf %174 : vector<1x256xf32>
    %176 = math.exp %175 : vector<1x256xf32>
    %cst_82 = arith.constant 1.000000e+00 : f32
    %177 = vector.broadcast %cst_82 : f32 to vector<1x256xf32>
    %178 = arith.addf %177, %176 : vector<1x256xf32>
    %179 = arith.divf %177, %178 : vector<1x256xf32>
    %180 = vector.extract_strided_slice %168 {offsets = [0, 256], sizes = [1, 256], strides = [1, 1]} : vector<1x768xf32> to vector<1x256xf32>
    %181 = vector.extract_strided_slice %171 {offsets = [0, 256], sizes = [1, 256], strides = [1, 1]} : vector<1x768xf32> to vector<1x256xf32>
    %182 = arith.addf %180, %181 : vector<1x256xf32>
    %183 = arith.negf %182 : vector<1x256xf32>
    %184 = math.exp %183 : vector<1x256xf32>
    %cst_83 = arith.constant 1.000000e+00 : f32
    %185 = vector.broadcast %cst_83 : f32 to vector<1x256xf32>
    %186 = arith.addf %185, %184 : vector<1x256xf32>
    %187 = arith.divf %185, %186 : vector<1x256xf32>
    %188 = vector.extract_strided_slice %168 {offsets = [0, 512], sizes = [1, 256], strides = [1, 1]} : vector<1x768xf32> to vector<1x256xf32>
    %189 = vector.extract_strided_slice %171 {offsets = [0, 512], sizes = [1, 256], strides = [1, 1]} : vector<1x768xf32> to vector<1x256xf32>
    %190 = arith.mulf %179, %189 : vector<1x256xf32>
    %191 = arith.addf %188, %190 : vector<1x256xf32>
    %192 = math.tanh %191 : vector<1x256xf32>
    %cst_84 = arith.constant 1.000000e+00 : f32
    %193 = vector.broadcast %cst_84 : f32 to vector<1x256xf32>
    %194 = arith.subf %193, %187 : vector<1x256xf32>
    %195 = arith.mulf %194, %192 : vector<1x256xf32>
    %196 = arith.mulf %187, %167 : vector<1x256xf32>
    %197 = arith.addf %195, %196 : vector<1x256xf32>
    %c3 = arith.constant 3 : index
    %c0_85 = arith.constant 0 : index
    %198 = vector.load %arg18[%c3, %c0_85] : memref<8x768xf32, #tpu.memory_space<vmem>>, vector<1x768xf32>
    %199 = arith.truncf %197 : vector<1x256xf32> to vector<1x256xbf16>
    %cst_86 = arith.constant dense<0.000000e+00> : vector<1x768xf32>
    %200 = tpu.matmul %199, %107, %cst_86 {dimension_numbers = #tpu.dot_dimension_numbers<[1], [0], [0], [1], [0, 0, 1, 1], [], []>} : vector<1x256xbf16>, vector<256x768xbf16>, vector<1x768xf32> -> vector<1x768xf32>
    %201 = arith.addf %200, %10 : vector<1x768xf32>
    %202 = vector.extract_strided_slice %198 {offsets = [0, 0], sizes = [1, 256], strides = [1, 1]} : vector<1x768xf32> to vector<1x256xf32>
    %203 = vector.extract_strided_slice %201 {offsets = [0, 0], sizes = [1, 256], strides = [1, 1]} : vector<1x768xf32> to vector<1x256xf32>
    %204 = arith.addf %202, %203 : vector<1x256xf32>
    %205 = arith.negf %204 : vector<1x256xf32>
    %206 = math.exp %205 : vector<1x256xf32>
    %cst_87 = arith.constant 1.000000e+00 : f32
    %207 = vector.broadcast %cst_87 : f32 to vector<1x256xf32>
    %208 = arith.addf %207, %206 : vector<1x256xf32>
    %209 = arith.divf %207, %208 : vector<1x256xf32>
    %210 = vector.extract_strided_slice %198 {offsets = [0, 256], sizes = [1, 256], strides = [1, 1]} : vector<1x768xf32> to vector<1x256xf32>
    %211 = vector.extract_strided_slice %201 {offsets = [0, 256], sizes = [1, 256], strides = [1, 1]} : vector<1x768xf32> to vector<1x256xf32>
    %212 = arith.addf %210, %211 : vector<1x256xf32>
    %213 = arith.negf %212 : vector<1x256xf32>
    %214 = math.exp %213 : vector<1x256xf32>
    %cst_88 = arith.constant 1.000000e+00 : f32
    %215 = vector.broadcast %cst_88 : f32 to vector<1x256xf32>
    %216 = arith.addf %215, %214 : vector<1x256xf32>
    %217 = arith.divf %215, %216 : vector<1x256xf32>
    %218 = vector.extract_strided_slice %198 {offsets = [0, 512], sizes = [1, 256], strides = [1, 1]} : vector<1x768xf32> to vector<1x256xf32>
    %219 = vector.extract_strided_slice %201 {offsets = [0, 512], sizes = [1, 256], strides = [1, 1]} : vector<1x768xf32> to vector<1x256xf32>
    %220 = arith.mulf %209, %219 : vector<1x256xf32>
    %221 = arith.addf %218, %220 : vector<1x256xf32>
    %222 = math.tanh %221 : vector<1x256xf32>
    %cst_89 = arith.constant 1.000000e+00 : f32
    %223 = vector.broadcast %cst_89 : f32 to vector<1x256xf32>
    %224 = arith.subf %223, %217 : vector<1x256xf32>
    %225 = arith.mulf %224, %222 : vector<1x256xf32>
    %226 = arith.mulf %217, %197 : vector<1x256xf32>
    %227 = arith.addf %225, %226 : vector<1x256xf32>
    %c4 = arith.constant 4 : index
    %c0_90 = arith.constant 0 : index
    %228 = vector.load %arg18[%c4, %c0_90] : memref<8x768xf32, #tpu.memory_space<vmem>>, vector<1x768xf32>
    %229 = arith.truncf %227 : vector<1x256xf32> to vector<1x256xbf16>
    %cst_91 = arith.constant dense<0.000000e+00> : vector<1x768xf32>
    %230 = tpu.matmul %229, %107, %cst_91 {dimension_numbers = #tpu.dot_dimension_numbers<[1], [0], [0], [1], [0, 0, 1, 1], [], []>} : vector<1x256xbf16>, vector<256x768xbf16>, vector<1x768xf32> -> vector<1x768xf32>
    %231 = arith.addf %230, %10 : vector<1x768xf32>
    %232 = vector.extract_strided_slice %228 {offsets = [0, 0], sizes = [1, 256], strides = [1, 1]} : vector<1x768xf32> to vector<1x256xf32>
    %233 = vector.extract_strided_slice %231 {offsets = [0, 0], sizes = [1, 256], strides = [1, 1]} : vector<1x768xf32> to vector<1x256xf32>
    %234 = arith.addf %232, %233 : vector<1x256xf32>
    %235 = arith.negf %234 : vector<1x256xf32>
    %236 = math.exp %235 : vector<1x256xf32>
    %cst_92 = arith.constant 1.000000e+00 : f32
    %237 = vector.broadcast %cst_92 : f32 to vector<1x256xf32>
    %238 = arith.addf %237, %236 : vector<1x256xf32>
    %239 = arith.divf %237, %238 : vector<1x256xf32>
    %240 = vector.extract_strided_slice %228 {offsets = [0, 256], sizes = [1, 256], strides = [1, 1]} : vector<1x768xf32> to vector<1x256xf32>
    %241 = vector.extract_strided_slice %231 {offsets = [0, 256], sizes = [1, 256], strides = [1, 1]} : vector<1x768xf32> to vector<1x256xf32>
    %242 = arith.addf %240, %241 : vector<1x256xf32>
    %243 = arith.negf %242 : vector<1x256xf32>
    %244 = math.exp %243 : vector<1x256xf32>
    %cst_93 = arith.constant 1.000000e+00 : f32
    %245 = vector.broadcast %cst_93 : f32 to vector<1x256xf32>
    %246 = arith.addf %245, %244 : vector<1x256xf32>
    %247 = arith.divf %245, %246 : vector<1x256xf32>
    %248 = vector.extract_strided_slice %228 {offsets = [0, 512], sizes = [1, 256], strides = [1, 1]} : vector<1x768xf32> to vector<1x256xf32>
    %249 = vector.extract_strided_slice %231 {offsets = [0, 512], sizes = [1, 256], strides = [1, 1]} : vector<1x768xf32> to vector<1x256xf32>
    %250 = arith.mulf %239, %249 : vector<1x256xf32>
    %251 = arith.addf %248, %250 : vector<1x256xf32>
    %252 = math.tanh %251 : vector<1x256xf32>
    %cst_94 = arith.constant 1.000000e+00 : f32
    %253 = vector.broadcast %cst_94 : f32 to vector<1x256xf32>
    %254 = arith.subf %253, %247 : vector<1x256xf32>
    %255 = arith.mulf %254, %252 : vector<1x256xf32>
    %256 = arith.mulf %247, %227 : vector<1x256xf32>
    %257 = arith.addf %255, %256 : vector<1x256xf32>
    %c5 = arith.constant 5 : index
    %c0_95 = arith.constant 0 : index
    %258 = vector.load %arg18[%c5, %c0_95] : memref<8x768xf32, #tpu.memory_space<vmem>>, vector<1x768xf32>
    %259 = arith.truncf %257 : vector<1x256xf32> to vector<1x256xbf16>
    %cst_96 = arith.constant dense<0.000000e+00> : vector<1x768xf32>
    %260 = tpu.matmul %259, %107, %cst_96 {dimension_numbers = #tpu.dot_dimension_numbers<[1], [0], [0], [1], [0, 0, 1, 1], [], []>} : vector<1x256xbf16>, vector<256x768xbf16>, vector<1x768xf32> -> vector<1x768xf32>
    %261 = arith.addf %260, %10 : vector<1x768xf32>
    %262 = vector.extract_strided_slice %258 {offsets = [0, 0], sizes = [1, 256], strides = [1, 1]} : vector<1x768xf32> to vector<1x256xf32>
    %263 = vector.extract_strided_slice %261 {offsets = [0, 0], sizes = [1, 256], strides = [1, 1]} : vector<1x768xf32> to vector<1x256xf32>
    %264 = arith.addf %262, %263 : vector<1x256xf32>
    %265 = arith.negf %264 : vector<1x256xf32>
    %266 = math.exp %265 : vector<1x256xf32>
    %cst_97 = arith.constant 1.000000e+00 : f32
    %267 = vector.broadcast %cst_97 : f32 to vector<1x256xf32>
    %268 = arith.addf %267, %266 : vector<1x256xf32>
    %269 = arith.divf %267, %268 : vector<1x256xf32>
    %270 = vector.extract_strided_slice %258 {offsets = [0, 256], sizes = [1, 256], strides = [1, 1]} : vector<1x768xf32> to vector<1x256xf32>
    %271 = vector.extract_strided_slice %261 {offsets = [0, 256], sizes = [1, 256], strides = [1, 1]} : vector<1x768xf32> to vector<1x256xf32>
    %272 = arith.addf %270, %271 : vector<1x256xf32>
    %273 = arith.negf %272 : vector<1x256xf32>
    %274 = math.exp %273 : vector<1x256xf32>
    %cst_98 = arith.constant 1.000000e+00 : f32
    %275 = vector.broadcast %cst_98 : f32 to vector<1x256xf32>
    %276 = arith.addf %275, %274 : vector<1x256xf32>
    %277 = arith.divf %275, %276 : vector<1x256xf32>
    %278 = vector.extract_strided_slice %258 {offsets = [0, 512], sizes = [1, 256], strides = [1, 1]} : vector<1x768xf32> to vector<1x256xf32>
    %279 = vector.extract_strided_slice %261 {offsets = [0, 512], sizes = [1, 256], strides = [1, 1]} : vector<1x768xf32> to vector<1x256xf32>
    %280 = arith.mulf %269, %279 : vector<1x256xf32>
    %281 = arith.addf %278, %280 : vector<1x256xf32>
    %282 = math.tanh %281 : vector<1x256xf32>
    %cst_99 = arith.constant 1.000000e+00 : f32
    %283 = vector.broadcast %cst_99 : f32 to vector<1x256xf32>
    %284 = arith.subf %283, %277 : vector<1x256xf32>
    %285 = arith.mulf %284, %282 : vector<1x256xf32>
    %286 = arith.mulf %277, %257 : vector<1x256xf32>
    %287 = arith.addf %285, %286 : vector<1x256xf32>
    %c6 = arith.constant 6 : index
    %c0_100 = arith.constant 0 : index
    %288 = vector.load %arg18[%c6, %c0_100] : memref<8x768xf32, #tpu.memory_space<vmem>>, vector<1x768xf32>
    %289 = arith.truncf %287 : vector<1x256xf32> to vector<1x256xbf16>
    %cst_101 = arith.constant dense<0.000000e+00> : vector<1x768xf32>
    %290 = tpu.matmul %289, %107, %cst_101 {dimension_numbers = #tpu.dot_dimension_numbers<[1], [0], [0], [1], [0, 0, 1, 1], [], []>} : vector<1x256xbf16>, vector<256x768xbf16>, vector<1x768xf32> -> vector<1x768xf32>
    %291 = arith.addf %290, %10 : vector<1x768xf32>
    %292 = vector.extract_strided_slice %288 {offsets = [0, 0], sizes = [1, 256], strides = [1, 1]} : vector<1x768xf32> to vector<1x256xf32>
    %293 = vector.extract_strided_slice %291 {offsets = [0, 0], sizes = [1, 256], strides = [1, 1]} : vector<1x768xf32> to vector<1x256xf32>
    %294 = arith.addf %292, %293 : vector<1x256xf32>
    %295 = arith.negf %294 : vector<1x256xf32>
    %296 = math.exp %295 : vector<1x256xf32>
    %cst_102 = arith.constant 1.000000e+00 : f32
    %297 = vector.broadcast %cst_102 : f32 to vector<1x256xf32>
    %298 = arith.addf %297, %296 : vector<1x256xf32>
    %299 = arith.divf %297, %298 : vector<1x256xf32>
    %300 = vector.extract_strided_slice %288 {offsets = [0, 256], sizes = [1, 256], strides = [1, 1]} : vector<1x768xf32> to vector<1x256xf32>
    %301 = vector.extract_strided_slice %291 {offsets = [0, 256], sizes = [1, 256], strides = [1, 1]} : vector<1x768xf32> to vector<1x256xf32>
    %302 = arith.addf %300, %301 : vector<1x256xf32>
    %303 = arith.negf %302 : vector<1x256xf32>
    %304 = math.exp %303 : vector<1x256xf32>
    %cst_103 = arith.constant 1.000000e+00 : f32
    %305 = vector.broadcast %cst_103 : f32 to vector<1x256xf32>
    %306 = arith.addf %305, %304 : vector<1x256xf32>
    %307 = arith.divf %305, %306 : vector<1x256xf32>
    %308 = vector.extract_strided_slice %288 {offsets = [0, 512], sizes = [1, 256], strides = [1, 1]} : vector<1x768xf32> to vector<1x256xf32>
    %309 = vector.extract_strided_slice %291 {offsets = [0, 512], sizes = [1, 256], strides = [1, 1]} : vector<1x768xf32> to vector<1x256xf32>
    %310 = arith.mulf %299, %309 : vector<1x256xf32>
    %311 = arith.addf %308, %310 : vector<1x256xf32>
    %312 = math.tanh %311 : vector<1x256xf32>
    %cst_104 = arith.constant 1.000000e+00 : f32
    %313 = vector.broadcast %cst_104 : f32 to vector<1x256xf32>
    %314 = arith.subf %313, %307 : vector<1x256xf32>
    %315 = arith.mulf %314, %312 : vector<1x256xf32>
    %316 = arith.mulf %307, %287 : vector<1x256xf32>
    %317 = arith.addf %315, %316 : vector<1x256xf32>
    %c7 = arith.constant 7 : index
    %c0_105 = arith.constant 0 : index
    %318 = vector.load %arg18[%c7, %c0_105] : memref<8x768xf32, #tpu.memory_space<vmem>>, vector<1x768xf32>
    %319 = arith.truncf %317 : vector<1x256xf32> to vector<1x256xbf16>
    %cst_106 = arith.constant dense<0.000000e+00> : vector<1x768xf32>
    %320 = tpu.matmul %319, %107, %cst_106 {dimension_numbers = #tpu.dot_dimension_numbers<[1], [0], [0], [1], [0, 0, 1, 1], [], []>} : vector<1x256xbf16>, vector<256x768xbf16>, vector<1x768xf32> -> vector<1x768xf32>
    %321 = arith.addf %320, %10 : vector<1x768xf32>
    %322 = vector.extract_strided_slice %318 {offsets = [0, 0], sizes = [1, 256], strides = [1, 1]} : vector<1x768xf32> to vector<1x256xf32>
    %323 = vector.extract_strided_slice %321 {offsets = [0, 0], sizes = [1, 256], strides = [1, 1]} : vector<1x768xf32> to vector<1x256xf32>
    %324 = arith.addf %322, %323 : vector<1x256xf32>
    %325 = arith.negf %324 : vector<1x256xf32>
    %326 = math.exp %325 : vector<1x256xf32>
    %cst_107 = arith.constant 1.000000e+00 : f32
    %327 = vector.broadcast %cst_107 : f32 to vector<1x256xf32>
    %328 = arith.addf %327, %326 : vector<1x256xf32>
    %329 = arith.divf %327, %328 : vector<1x256xf32>
    %330 = vector.extract_strided_slice %318 {offsets = [0, 256], sizes = [1, 256], strides = [1, 1]} : vector<1x768xf32> to vector<1x256xf32>
    %331 = vector.extract_strided_slice %321 {offsets = [0, 256], sizes = [1, 256], strides = [1, 1]} : vector<1x768xf32> to vector<1x256xf32>
    %332 = arith.addf %330, %331 : vector<1x256xf32>
    %333 = arith.negf %332 : vector<1x256xf32>
    %334 = math.exp %333 : vector<1x256xf32>
    %cst_108 = arith.constant 1.000000e+00 : f32
    %335 = vector.broadcast %cst_108 : f32 to vector<1x256xf32>
    %336 = arith.addf %335, %334 : vector<1x256xf32>
    %337 = arith.divf %335, %336 : vector<1x256xf32>
    %338 = vector.extract_strided_slice %318 {offsets = [0, 512], sizes = [1, 256], strides = [1, 1]} : vector<1x768xf32> to vector<1x256xf32>
    %339 = vector.extract_strided_slice %321 {offsets = [0, 512], sizes = [1, 256], strides = [1, 1]} : vector<1x768xf32> to vector<1x256xf32>
    %340 = arith.mulf %329, %339 : vector<1x256xf32>
    %341 = arith.addf %338, %340 : vector<1x256xf32>
    %342 = math.tanh %341 : vector<1x256xf32>
    %cst_109 = arith.constant 1.000000e+00 : f32
    %343 = vector.broadcast %cst_109 : f32 to vector<1x256xf32>
    %344 = arith.subf %343, %337 : vector<1x256xf32>
    %345 = arith.mulf %344, %342 : vector<1x256xf32>
    %346 = arith.mulf %337, %317 : vector<1x256xf32>
    %347 = arith.addf %345, %346 : vector<1x256xf32>
    %348 = tpu.concatenate %137, %167, %197, %227, %257, %287, %317, %347 in 0 : vector<1x256xf32>, vector<1x256xf32>, vector<1x256xf32>, vector<1x256xf32>, vector<1x256xf32>, vector<1x256xf32>, vector<1x256xf32>, vector<1x256xf32> -> vector<8x256xf32>
    %349 = arith.truncf %348 : vector<8x256xf32> to vector<8x256xbf16>
    %c0_110 = arith.constant 0 : index
    %c0_111 = arith.constant 0 : index
    %350 = vector.load %arg14[%c0_110, %c0_111] : memref<256x512xbf16, #tpu.memory_space<vmem>>, vector<256x512xbf16>
    %cst_112 = arith.constant dense<0.000000e+00> : vector<8x512xf32>
    %351 = tpu.matmul %349, %350, %cst_112 {dimension_numbers = #tpu.dot_dimension_numbers<[1], [0], [0], [1], [0, 0, 1, 1], [], []>} : vector<8x256xbf16>, vector<256x512xbf16>, vector<8x512xf32> -> vector<8x512xf32>
    %352 = vector.broadcast %11 : vector<1x512xf32> to vector<8x512xf32>
    %353 = arith.addf %351, %352 : vector<8x512xf32>
    %c0_113 = arith.constant 0 : index
    %c0_114 = arith.constant 0 : index
    %354 = vector.load %arg17[%c0_113, %c0_114] : memref<8x512xf32, #tpu.memory_space<vmem>>, vector<8x512xf32>
    tpu.vector_store %arg17[%c0_113, %c0_114], %353 {strides = array<i32>} : memref<8x512xf32, #tpu.memory_space<vmem>>, vector<8x512xf32>,
    return
  }
}

</mosaic_0001>

<llo_original>
// kernel: forward.1
$region0: #{forward.1}
  #allocation0 [shape = 'u32[]', space=smem, size = 0x4, offset = 0x4, fixed_abs, tag = 'smem constant byte address 0x4 - core index']
  #allocation1 [shape = 'u32[72,128]{1,0:T(1,128)}', space=vmem, size = 0x9000, scoped, tag = 'internal scratch']
  #allocation2 [shape = 'f32[8,768]{1,0:T(8,128)}', space=vmem, size = 0x6000, scoped, tag = 'scratch operand']
  %s0 = inlined_call_operand.vmem [shape: f32[8,128], index: 0, kind: input, shape index: {}]
  %s1 = inlined_call_operand.vmem [shape: f32[1,256], index: 1, kind: input, shape index: {}]
  %s2 = inlined_call_operand.vmem [shape: f32[8,64], index: 2, kind: input, shape index: {}]
  %s3 = inlined_call_operand.vmem [shape: bf16[128,128], index: 3, kind: input, shape index: {}]
  %s4 = inlined_call_operand.hbm [shape: bf16[128,128], index: 4, kind: input, shape index: {}]
  %s5 = inlined_call_operand.hbm [shape: bf16[256,256], index: 5, kind: input, shape index: {}]
  %s6 = inlined_call_operand.hbm [shape: bf16[256,256], index: 6, kind: input, shape index: {}]
  %s7 = inlined_call_operand.hbm [shape: bf16[512,256], index: 7, kind: input, shape index: {}]
  %s8 = inlined_call_operand.hbm [shape: bf16[256,256], index: 8, kind: input, shape index: {}]
  %s9 = inlined_call_operand.hbm [shape: bf16[256,128], index: 9, kind: input, shape index: {}]
  %s10 = inlined_call_operand.hbm [shape: bf16[384,128], index: 10, kind: input, shape index: {}]
  %s11 = inlined_call_operand.hbm [shape: bf16[256,256], index: 11, kind: input, shape index: {}]
  %s12 = inlined_call_operand.hbm [shape: bf16[64,768], index: 12, kind: input, shape index: {}]
  %s13 = inlined_call_operand.vmem [shape: bf16[256,768], index: 13, kind: input, shape index: {}]
  %s14 = inlined_call_operand.hbm [shape: bf16[256,512], index: 14, kind: input, shape index: {}]
  %s15 = inlined_call_operand.vmem [shape: f32[1,3840], index: 15, kind: input, shape index: {}]
  %s16 = inlined_call_operand.vmem [shape: f32[2,128], index: 16, kind: output, shape index: {0}]
  %s17 = inlined_call_operand.hbm [shape: f32[8,512], index: 17, kind: output, shape index: {1}]
  %18 = xla_tuple %s16, %s17
  %s19 = sld [smem:[#allocation0]]
  $region122: #{forward.1} parent=0
    _
  %s21 = ssub.s32 1, %s19
  %s22 = scalar_select 0, %s21, %s19
  $region1: #{forward.1} parent=0
    #allocation3 [shape = 'u8[32768]{0}', space=vmem, size = 0x8000, scoped, tag = 'input window, operand 4, single buffered']
    #allocation4 [shape = 's32[1]{0}', space=sflag, size = 0x4, scoped, tag = 'scoped memory for forward.1']
    #allocation5 [shape = 's32[1]{0}', space=sflag, size = 0x4, scoped, tag = 'scoped memory for forward.1']
    #allocation6 [shape = 'u8[131072]{0}', space=vmem, size = 0x20000, scoped, tag = 'input window, operand 5, single buffered']
    #allocation7 [shape = 's32[1]{0}', space=sflag, size = 0x4, scoped, tag = 'scoped memory for forward.1']
    #allocation8 [shape = 'u8[131072]{0}', space=vmem, size = 0x20000, scoped, tag = 'input window, operand 6, single buffered']
    #allocation9 [shape = 'u8[262144]{0}', space=vmem, size = 0x40000, scoped, tag = 'input window, operand 7, single buffered']
    #allocation10 [shape = 's32[1]{0}', space=sflag, size = 0x4, scoped, tag = 'scoped memory for forward.1']
    #allocation11 [shape = 'u8[131072]{0}', space=vmem, size = 0x20000, scoped, tag = 'input window, operand 8, single buffered']
    #allocation12 [shape = 'u8[65536]{0}', space=vmem, size = 0x10000, scoped, tag = 'input window, operand 9, single buffered']
    #allocation13 [shape = 's32[1]{0}', space=sflag, size = 0x4, scoped, tag = 'scoped memory for forward.1']
    #allocation14 [shape = 'u8[98304]{0}', space=vmem, size = 0x18000, scoped, tag = 'input window, operand 10, single buffered']
    #allocation15 [shape = 'u8[131072]{0}', space=vmem, size = 0x20000, scoped, tag = 'input window, operand 11, single buffered']
    #allocation16 [shape = 's32[1]{0}', space=sflag, size = 0x4, scoped, tag = 'scoped memory for forward.1']
    #allocation17 [shape = 'u8[98304]{0}', space=vmem, size = 0x18000, scoped, tag = 'input window, operand 12, single buffered']
    #allocation18 [shape = 'u8[262144]{0}', space=vmem, size = 0x40000, scoped, tag = 'input window, operand 14, single buffered']
    #allocation19 [shape = 's32[1]{0}', space=sflag, size = 0x4, scoped, tag = 'scoped memory for forward.1']
    #allocation20 [shape = 'u8[16384]{0}', space=vmem, size = 0x4000, scoped, tag = 'output window, operand 1, single buffered']
    %23 = vsyncpa [#allocation4], 0
    %24 = vsyncpa [#allocation7], 0
    %25 = vsyncpa [#allocation10], 0
    %26 = vsyncpa [#allocation13], 0
    %27 = vsyncpa [#allocation16], 0
    %28 = vsyncpa [#allocation19], 0
    %29 = vsyncpa [#allocation5], 0
    // Predicated region
    $region2: #{forward.1} parent=1 // pred_check
      _
    $region3: #{forward.1} parent=1 // pred_check_branch
      %31 = sbr.rel (0) target = $region5
    $region4: #{forward.1} parent=1 // pred_region
      _
    $region5: #{forward.1} parent=1 // pred_fallthru
      _
    // Predicated region
    $region6: #{forward.1} parent=1 // pred_check
      _
    $region7: #{forward.1} parent=1 // pred_check_branch
      %33 = sbr.rel (0) target = $region9
    $region8: #{forward.1} parent=1 // pred_region
      _
    $region9: #{forward.1} parent=1 // pred_fallthru
      _
    // Predicated region
    $region10: #{forward.1} parent=1 // pred_check
      _
    $region11: #{forward.1} parent=1 // pred_check_branch
      %35 = sbr.rel (0) target = $region13
    $region12: #{forward.1} parent=1 // pred_region
      _
    $region13: #{forward.1} parent=1 // pred_fallthru
      _
    // Predicated region
    $region14: #{forward.1} parent=1 // pred_check
      _
    $region15: #{forward.1} parent=1 // pred_check_branch
      %37 = sbr.rel (0) target = $region17
    $region16: #{forward.1} parent=1 // pred_region
      _
    $region17: #{forward.1} parent=1 // pred_fallthru
      _
    // Predicated region
    $region18: #{forward.1} parent=1 // pred_check
      _
    $region19: #{forward.1} parent=1 // pred_check_branch
      %39 = sbr.rel (0) target = $region21
    $region20: #{forward.1} parent=1 // pred_region
      %41 = vsyncadd [#allocation4], 0
      %s42 = sshll.u32 %s4, 4
      %s43 = int_to_ptr.hbm [resolvable:$true] %s42
      %s44 = sshll.u32 [#allocation3], 4
      %s45 = int_to_ptr.vmem [resolvable:$true] %s44
      %50 = dma.hbm_to_vmem [thread:$0]  %s43, 1024, %s45, [#allocation4], 64, 64, 4
    $region21: #{forward.1} parent=1 // pred_fallthru
      _
    // Predicated region
    $region22: #{forward.1} parent=1 // pred_check
      _
    $region23: #{forward.1} parent=1 // pred_check_branch
      %52 = sbr.rel (0) target = $region25
    $region24: #{forward.1} parent=1 // pred_region
      %54 = vsyncadd [#allocation7], 0
      %s55 = sshll.u32 %s5, 4
      %s56 = int_to_ptr.hbm [resolvable:$true] %s55
      %s57 = sshll.u32 [#allocation6], 4
      %s58 = int_to_ptr.vmem [resolvable:$true] %s57
      %63 = dma.hbm_to_vmem [thread:$0]  %s56, 4096, %s58, [#allocation7], 128, 128, 8
    $region25: #{forward.1} parent=1 // pred_fallthru
      _
    // Predicated region
    $region26: #{forward.1} parent=1 // pred_check
      _
    $region27: #{forward.1} parent=1 // pred_check_branch
      %65 = sbr.rel (0) target = $region29
    $region28: #{forward.1} parent=1 // pred_region
      %67 = vsyncadd [#allocation7], 0
      %s68 = sshll.u32 %s6, 4
      %s69 = int_to_ptr.hbm [resolvable:$true] %s68
      %s70 = sshll.u32 [#allocation8], 4
      %s71 = int_to_ptr.vmem [resolvable:$true] %s70
      %76 = dma.hbm_to_vmem [thread:$0]  %s69, 4096, %s71, [#allocation7], 128, 128, 8
    $region29: #{forward.1} parent=1 // pred_fallthru
      _
    // Predicated region
    $region30: #{forward.1} parent=1 // pred_check
      _
    $region31: #{forward.1} parent=1 // pred_check_branch
      %78 = sbr.rel (0) target = $region33
    $region32: #{forward.1} parent=1 // pred_region
      %80 = vsyncadd [#allocation10], 0
      %s81 = sshll.u32 %s7, 4
      %s82 = int_to_ptr.hbm [resolvable:$true] %s81
      %s83 = sshll.u32 [#allocation9], 4
      %s84 = int_to_ptr.vmem [resolvable:$true] %s83
      %89 = dma.hbm_to_vmem [thread:$0]  %s82, 8192, %s84, [#allocation10], 128, 128, 8
    $region33: #{forward.1} parent=1 // pred_fallthru
      _
    // Predicated region
    $region34: #{forward.1} parent=1 // pred_check
      _
    $region35: #{forward.1} parent=1 // pred_check_branch
      %91 = sbr.rel (0) target = $region37
    $region36: #{forward.1} parent=1 // pred_region
      %93 = vsyncadd [#allocation10], 0
      %s94 = sshll.u32 %s8, 4
      %s95 = int_to_ptr.hbm [resolvable:$true] %s94
      %s96 = sshll.u32 [#allocation11], 4
      %s97 = int_to_ptr.vmem [resolvable:$true] %s96
      %102 = dma.hbm_to_vmem [thread:$0]  %s95, 4096, %s97, [#allocation10], 128, 128, 8
    $region37: #{forward.1} parent=1 // pred_fallthru
      _
    // Predicated region
    $region38: #{forward.1} parent=1 // pred_check
      _
    $region39: #{forward.1} parent=1 // pred_check_branch
      %104 = sbr.rel (0) target = $region41
    $region40: #{forward.1} parent=1 // pred_region
      %106 = vsyncadd [#allocation13], 0
      %s107 = sshll.u32 %s9, 4
      %s108 = int_to_ptr.hbm [resolvable:$true] %s107
      %s109 = sshll.u32 [#allocation12], 4
      %s110 = int_to_ptr.vmem [resolvable:$true] %s109
      %115 = dma.hbm_to_vmem [thread:$0]  %s108, 2048, %s110, [#allocation13], 64, 64, 4
    $region41: #{forward.1} parent=1 // pred_fallthru
      _
    // Predicated region
    $region42: #{forward.1} parent=1 // pred_check
      _
    $region43: #{forward.1} parent=1 // pred_check_branch
      %117 = sbr.rel (0) target = $region45
    $region44: #{forward.1} parent=1 // pred_region
      %119 = vsyncadd [#allocation13], 0
      %s120 = sshll.u32 %s10, 4
      %s121 = int_to_ptr.hbm [resolvable:$true] %s120
      %s122 = sshll.u32 [#allocation14], 4
      %s123 = int_to_ptr.vmem [resolvable:$true] %s122
      %128 = dma.hbm_to_vmem [thread:$0]  %s121, 3072, %s123, [#allocation13], 64, 64, 4
    $region45: #{forward.1} parent=1 // pred_fallthru
      _
    // Predicated region
    $region46: #{forward.1} parent=1 // pred_check
      _
    $region47: #{forward.1} parent=1 // pred_check_branch
      %130 = sbr.rel (0) target = $region49
    $region48: #{forward.1} parent=1 // pred_region
      %132 = vsyncadd [#allocation16], 0
      %s133 = sshll.u32 %s11, 4
      %s134 = int_to_ptr.hbm [resolvable:$true] %s133
      %s135 = sshll.u32 [#allocation15], 4
      %s136 = int_to_ptr.vmem [resolvable:$true] %s135
      %141 = dma.hbm_to_vmem [thread:$0]  %s134, 4096, %s136, [#allocation16], 128, 128, 8
    $region49: #{forward.1} parent=1 // pred_fallthru
      _
    // Predicated region
    $region50: #{forward.1} parent=1 // pred_check
      _
    $region51: #{forward.1} parent=1 // pred_check_branch
      %143 = sbr.rel (0) target = $region53
    $region52: #{forward.1} parent=1 // pred_region
      %145 = vsyncadd [#allocation16], 0
      %s146 = sshll.u32 %s12, 4
      %s147 = int_to_ptr.hbm [resolvable:$true] %s146
      %s148 = sshll.u32 [#allocation17], 4
      %s149 = int_to_ptr.vmem [resolvable:$true] %s148
      %154 = dma.hbm_to_vmem [thread:$0]  %s147, 3072, %s149, [#allocation16], 384, 384, 24
    $region53: #{forward.1} parent=1 // pred_fallthru
      _
    // Predicated region
    $region54: #{forward.1} parent=1 // pred_check
      _
    $region55: #{forward.1} parent=1 // pred_check_branch
      %156 = sbr.rel (0) target = $region57
    $region56: #{forward.1} parent=1 // pred_region
      _
    $region57: #{forward.1} parent=1 // pred_fallthru
      _
    // Predicated region
    $region58: #{forward.1} parent=1 // pred_check
      _
    $region59: #{forward.1} parent=1 // pred_check_branch
      %158 = sbr.rel (0) target = $region61
    $region60: #{forward.1} parent=1 // pred_region
      %160 = vsyncadd [#allocation19], 0
      %s161 = sshll.u32 %s14, 4
      %s162 = int_to_ptr.hbm [resolvable:$true] %s161
      %s163 = sshll.u32 [#allocation18], 4
      %s164 = int_to_ptr.vmem [resolvable:$true] %s163
      %169 = dma.hbm_to_vmem [thread:$0]  %s162, 8192, %s164, [#allocation19], 256, 256, 16
    $region61: #{forward.1} parent=1 // pred_fallthru
      _
    // Predicated region
    $region62: #{forward.1} parent=1 // pred_check
      _
    $region63: #{forward.1} parent=1 // pred_check_branch
      %171 = sbr.rel (0) target = $region65
    $region64: #{forward.1} parent=1 // pred_region
      _
    $region65: #{forward.1} parent=1 // pred_fallthru
      _
    // Predicated region
    $region66: #{forward.1} parent=1 // pred_check
      _
    $region67: #{forward.1} parent=1 // pred_check_branch
      %173 = sbr.rel (0) target = $region69
    $region68: #{forward.1} parent=1 // pred_region
      %175 = dma.done [#allocation4], 1024
    $region69: #{forward.1} parent=1 // pred_fallthru
      _
    // Predicated region
    $region70: #{forward.1} parent=1 // pred_check
      _
    $region71: #{forward.1} parent=1 // pred_check_branch
      %177 = sbr.rel (0) target = $region73
    $region72: #{forward.1} parent=1 // pred_region
      %179 = dma.done [#allocation7], 4096
    $region73: #{forward.1} parent=1 // pred_fallthru
      _
    // Predicated region
    $region74: #{forward.1} parent=1 // pred_check
      _
    $region75: #{forward.1} parent=1 // pred_check_branch
      %181 = sbr.rel (0) target = $region77
    $region76: #{forward.1} parent=1 // pred_region
      %183 = dma.done [#allocation7], 4096
    $region77: #{forward.1} parent=1 // pred_fallthru
      _
    // Predicated region
    $region78: #{forward.1} parent=1 // pred_check
      _
    $region79: #{forward.1} parent=1 // pred_check_branch
      %185 = sbr.rel (0) target = $region81
    $region80: #{forward.1} parent=1 // pred_region
      %187 = dma.done [#allocation10], 8192
    $region81: #{forward.1} parent=1 // pred_fallthru
      _
    // Predicated region
    $region82: #{forward.1} parent=1 // pred_check
      _
    $region83: #{forward.1} parent=1 // pred_check_branch
      %189 = sbr.rel (0) target = $region85
    $region84: #{forward.1} parent=1 // pred_region
      %191 = dma.done [#allocation10], 4096
    $region85: #{forward.1} parent=1 // pred_fallthru
      _
    // Predicated region
    $region86: #{forward.1} parent=1 // pred_check
      _
    $region87: #{forward.1} parent=1 // pred_check_branch
      %193 = sbr.rel (0) target = $region89
    $region88: #{forward.1} parent=1 // pred_region
      %195 = dma.done [#allocation13], 2048
    $region89: #{forward.1} parent=1 // pred_fallthru
      _
    // Predicated region
    $region90: #{forward.1} parent=1 // pred_check
      _
    $region91: #{forward.1} parent=1 // pred_check_branch
      %197 = sbr.rel (0) target = $region93
    $region92: #{forward.1} parent=1 // pred_region
      %199 = dma.done [#allocation13], 3072
    $region93: #{forward.1} parent=1 // pred_fallthru
      _
    // Predicated region
    $region94: #{forward.1} parent=1 // pred_check
      _
    $region95: #{forward.1} parent=1 // pred_check_branch
      %201 = sbr.rel (0) target = $region97
    $region96: #{forward.1} parent=1 // pred_region
      %203 = dma.done [#allocation16], 4096
    $region97: #{forward.1} parent=1 // pred_fallthru
      _
    // Predicated region
    $region98: #{forward.1} parent=1 // pred_check
      _
    $region99: #{forward.1} parent=1 // pred_check_branch
      %205 = sbr.rel (0) target = $region101
    $region100: #{forward.1} parent=1 // pred_region
      %207 = dma.done [#allocation16], 3072
    $region101: #{forward.1} parent=1 // pred_fallthru
      _
    // Predicated region
    $region102: #{forward.1} parent=1 // pred_check
      _
    $region103: #{forward.1} parent=1 // pred_check_branch
      %209 = sbr.rel (0) target = $region105
    $region104: #{forward.1} parent=1 // pred_region
      %211 = dma.done [#allocation19], 8192
    $region105: #{forward.1} parent=1 // pred_fallthru
      _
    %v213 = vld [vmem:[%s15] sm:$0x1]
    %v214 = vld [vmem:[%s15 + $0x1] sm:$0x1]
    %v215 = vld [vmem:[%s15 + $0x2] sm:$0x3]
    %v216 = vld [vmem:[%s15 + $0x4] sm:$0x3]
    %v217 = vld [vmem:[%s15 + $0x6] sm:$0x3]
    %v218 = vld [vmem:[%s15 + $0x8] sm:$0x3]
    %v219 = vld [vmem:[%s15 + $0xa] sm:$0x1]
    %v220 = vld [vmem:[%s15 + $0xb] sm:$0x1]
    %v221 = vld [vmem:[%s15 + $0xc] sm:$0x3]
    %v222 = vld [vmem:[%s15 + $0xe] sm:$0x3f]
    %v223 = vld [vmem:[%s15 + $0x14] sm:$0x3f]
    %v224 = vld [vmem:[%s15 + $0x1a] sm:$0xf]
    %v225 = vld [vmem:[%s0] sm:$0xff]
    %v226 = vrot.slane %v225, 4
    %v227 = vadd.f32 %v225, %v226
    %v228 = vrot.slane %v227, 2
    %v229 = vadd.f32 %v227, %v228
    %v230 = vrot.slane %v229, 1
    %v231 = vadd.f32 %v229, %v230
    %v232 = vrcp.pop 8.0
    %v233 = vmul.f32 8.0, %v232
    %v234 = vsub.f32 1.0, %v233
    %v235 = vmul.f32 %v232, %v234
    %v236 = vadd.f32 %v232, %v235
    %vm237 = vweird.f32 %v232
    %v238 = vsel %vm237, %v232, %v236
    %v239 = vmul.f32 %v231, %v238
    %v240 = vpack.c.bf16 %v225, %v225
    %v241 = vld [vmem:[%s3] sm:$0xf]
    %v242 = vld [vmem:[%s3 + $0x4] sm:$0xf]
    %v243 = vld [vmem:[%s3 + $0x8] sm:$0xf]
    %v244 = vld [vmem:[%s3 + $0xc] sm:$0xf]
    %v245 = vld [vmem:[%s3 + $0x10] sm:$0xf]
    %v246 = vld [vmem:[%s3 + $0x14] sm:$0xf]
    %v247 = vld [vmem:[%s3 + $0x18] sm:$0xf]
    %v248 = vld [vmem:[%s3 + $0x1c] sm:$0xf]
    %v249 = vld [vmem:[%s3 + $0x20] sm:$0xf]
    %v250 = vld [vmem:[%s3 + $0x24] sm:$0xf]
    %v251 = vld [vmem:[%s3 + $0x28] sm:$0xf]
    %v252 = vld [vmem:[%s3 + $0x2c] sm:$0xf]
    %v253 = vld [vmem:[%s3 + $0x30] sm:$0xf]
    %v254 = vld [vmem:[%s3 + $0x34] sm:$0xf]
    %v255 = vld [vmem:[%s3 + $0x38] sm:$0xf]
    %v256 = vld [vmem:[%s3 + $0x3c] sm:$0xf]
    %v258 = vshrl.u32 %v240, 16
    %v260 = vrot.slane %v258, 3
    %v278 = vunpack.c.l.b16 %v241
    %v279 = vunpack.c.l.b16 %v242
    %v280 = vunpack.c.l.b16 %v243
    %v281 = vunpack.c.l.b16 %v244
    %v282 = vunpack.c.l.b16 %v245
    %v283 = vunpack.c.l.b16 %v246
    %v284 = vunpack.c.l.b16 %v247
    %v285 = vunpack.c.l.b16 %v248
    %v286 = vunpack.c.l.b16 %v249
    %v287 = vunpack.c.l.b16 %v250
    %v288 = vunpack.c.l.b16 %v251
    %v289 = vunpack.c.l.b16 %v252
    %v290 = vunpack.c.l.b16 %v253
    %v291 = vunpack.c.l.b16 %v254
    %v292 = vunpack.c.l.b16 %v255
    %v293 = vunpack.c.l.b16 %v256
    %v294 = vpack.c.b16 %v279, %v278
    %v295 = vpack.c.b16 %v281, %v280
    %v296 = vpack.c.b16 %v283, %v282
    %v297 = vpack.c.b16 %v285, %v284
    %v298 = vpack.c.b16 %v287, %v286
    %v299 = vpack.c.b16 %v289, %v288
    %v300 = vpack.c.b16 %v291, %v290
    %v301 = vpack.c.b16 %v293, %v292
    %310 = vmatpush.bf16.msra.mxu0 %v301
    %311 = vmatpush.bf16.msra.mxu0 %v300
    %312 = vmatpush.bf16.msra.mxu0 %v299
    %313 = vmatpush.bf16.msra.mxu0 %v298
    %314 = vmatpush.bf16.msra.mxu0 %v297
    %315 = vmatpush.bf16.msra.mxu0 %v296
    %316 = vmatpush.bf16.msra.mxu0 %v295
    %317 = vmatpush.bf16.msra.mxu0 %v294
    %318 = vmatmul.bf16.gmra.mxu0 %v260
    %v319 = vpop.f32.mrf.mxu0
    %v320 = vadd.f32 %v213, %v319
    %v321 = vpop.f32.mrf.mxu0
    %322 = vdwg.mxu0
    %v323 = vmax.f32 %v320, 0.0
    %v324 = vpack.c.bf16 %v239, %v239
    %v325 = vld [vmem:[#allocation3] sm:$0xf]
    %v326 = vld [vmem:[#allocation3 + $0x4] sm:$0xf]
    %v327 = vld [vmem:[#allocation3 + $0x8] sm:$0xf]
    %v328 = vld [vmem:[#allocation3 + $0xc] sm:$0xf]
    %v329 = vld [vmem:[#allocation3 + $0x10] sm:$0xf]
    %v330 = vld [vmem:[#allocation3 + $0x14] sm:$0xf]
    %v331 = vld [vmem:[#allocation3 + $0x18] sm:$0xf]
    %v332 = vld [vmem:[#allocation3 + $0x1c] sm:$0xf]
    %v333 = vld [vmem:[#allocation3 + $0x20] sm:$0xf]
    %v334 = vld [vmem:[#allocation3 + $0x24] sm:$0xf]
    %v335 = vld [vmem:[#allocation3 + $0x28] sm:$0xf]
    %v336 = vld [vmem:[#allocation3 + $0x2c] sm:$0xf]
    %v337 = vld [vmem:[#allocation3 + $0x30] sm:$0xf]
    %v338 = vld [vmem:[#allocation3 + $0x34] sm:$0xf]
    %v339 = vld [vmem:[#allocation3 + $0x38] sm:$0xf]
    %v340 = vld [vmem:[#allocation3 + $0x3c] sm:$0xf]
    %v357 = vunpack.c.l.b16 %v325
    %v358 = vunpack.c.l.b16 %v326
    %v359 = vunpack.c.l.b16 %v327
    %v360 = vunpack.c.l.b16 %v328
    %v361 = vunpack.c.l.b16 %v329
    %v362 = vunpack.c.l.b16 %v330
    %v363 = vunpack.c.l.b16 %v331
    %v364 = vunpack.c.l.b16 %v332
    %v365 = vunpack.c.l.b16 %v333
    %v366 = vunpack.c.l.b16 %v334
    %v367 = vunpack.c.l.b16 %v335
    %v368 = vunpack.c.l.b16 %v336
    %v369 = vunpack.c.l.b16 %v337
    %v370 = vunpack.c.l.b16 %v338
    %v371 = vunpack.c.l.b16 %v339
    %v372 = vunpack.c.l.b16 %v340
    %v373 = vpack.c.b16 %v358, %v357
    %v374 = vpack.c.b16 %v360, %v359
    %v375 = vpack.c.b16 %v362, %v361
    %v376 = vpack.c.b16 %v364, %v363
    %v377 = vpack.c.b16 %v366, %v365
    %v378 = vpack.c.b16 %v368, %v367
    %v379 = vpack.c.b16 %v370, %v369
    %v380 = vpack.c.b16 %v372, %v371
    %389 = vmatpush.bf16.msra.mxu0 %v380
    %390 = vmatpush.bf16.msra.mxu0 %v379
    %391 = vmatpush.bf16.msra.mxu0 %v378
    %392 = vmatpush.bf16.msra.mxu0 %v377
    %393 = vmatpush.bf16.msra.mxu0 %v376
    %394 = vmatpush.bf16.msra.mxu0 %v375
    %395 = vmatpush.bf16.msra.mxu0 %v374
    %396 = vmatpush.bf16.msra.mxu0 %v373
    %397 = vmatmul.bf16.gmra.mxu0 %v324
    %v398 = vpop.f32.mrf.mxu0
    %v399 = vadd.f32 %v214, %v398
    %v400 = vpop.f32.mrf.mxu0
    %401 = vdwg.mxu0
    %v402 = vmax.f32 %v399, 0.0
    %v403 = vpack.c.bf16 %v323, %v323
    %v404 = vpack.c.bf16 %v402, %v402
    %v405 = vld [vmem:[#allocation6] sm:$0xff]
    %v406 = vld [vmem:[#allocation6 + $0x8] sm:$0xff]
    %v407 = vld [vmem:[#allocation6 + $0x10] sm:$0xff]
    %v408 = vld [vmem:[#allocation6 + $0x18] sm:$0xff]
    %v409 = vld [vmem:[#allocation6 + $0x20] sm:$0xff]
    %v410 = vld [vmem:[#allocation6 + $0x28] sm:$0xff]
    %v411 = vld [vmem:[#allocation6 + $0x30] sm:$0xff]
    %v412 = vld [vmem:[#allocation6 + $0x38] sm:$0xff]
    %v413 = vld [vmem:[#allocation6 + $0x40] sm:$0xff]
    %v414 = vld [vmem:[#allocation6 + $0x48] sm:$0xff]
    %v415 = vld [vmem:[#allocation6 + $0x50] sm:$0xff]
    %v416 = vld [vmem:[#allocation6 + $0x58] sm:$0xff]
    %v417 = vld [vmem:[#allocation6 + $0x60] sm:$0xff]
    %v418 = vld [vmem:[#allocation6 + $0x68] sm:$0xff]
    %v419 = vld [vmem:[#allocation6 + $0x70] sm:$0xff]
    %v420 = vld [vmem:[#allocation6 + $0x78] sm:$0xff]
    %v421 = vld [vmem:[#allocation6 + $0x80] sm:$0xff]
    %v422 = vld [vmem:[#allocation6 + $0x88] sm:$0xff]
    %v423 = vld [vmem:[#allocation6 + $0x90] sm:$0xff]
    %v424 = vld [vmem:[#allocation6 + $0x98] sm:$0xff]
    %v425 = vld [vmem:[#allocation6 + $0xa0] sm:$0xff]
    %v426 = vld [vmem:[#allocation6 + $0xa8] sm:$0xff]
    %v427 = vld [vmem:[#allocation6 + $0xb0] sm:$0xff]
    %v428 = vld [vmem:[#allocation6 + $0xb8] sm:$0xff]
    %v429 = vld [vmem:[#allocation6 + $0xc0] sm:$0xff]
    %v430 = vld [vmem:[#allocation6 + $0xc8] sm:$0xff]
    %v431 = vld [vmem:[#allocation6 + $0xd0] sm:$0xff]
    %v432 = vld [vmem:[#allocation6 + $0xd8] sm:$0xff]
    %v433 = vld [vmem:[#allocation6 + $0xe0] sm:$0xff]
    %v434 = vld [vmem:[#allocation6 + $0xe8] sm:$0xff]
    %v435 = vld [vmem:[#allocation6 + $0xf0] sm:$0xff]
    %v436 = vld [vmem:[#allocation6 + $0xf8] sm:$0xff]
    %v469 = vunpack.c.l.b16 %v405
    %v470 = vunpack.c.h.b16 %v405
    %v471 = vunpack.c.l.b16 %v406
    %v472 = vunpack.c.h.b16 %v406
    %v473 = vunpack.c.l.b16 %v407
    %v474 = vunpack.c.h.b16 %v407
    %v475 = vunpack.c.l.b16 %v408
    %v476 = vunpack.c.h.b16 %v408
    %v477 = vunpack.c.l.b16 %v409
    %v478 = vunpack.c.h.b16 %v409
    %v479 = vunpack.c.l.b16 %v410
    %v480 = vunpack.c.h.b16 %v410
    %v481 = vunpack.c.l.b16 %v411
    %v482 = vunpack.c.h.b16 %v411
    %v483 = vunpack.c.l.b16 %v412
    %v484 = vunpack.c.h.b16 %v412
    %v485 = vunpack.c.l.b16 %v413
    %v486 = vunpack.c.h.b16 %v413
    %v487 = vunpack.c.l.b16 %v414
    %v488 = vunpack.c.h.b16 %v414
    %v489 = vunpack.c.l.b16 %v415
    %v490 = vunpack.c.h.b16 %v415
    %v491 = vunpack.c.l.b16 %v416
    %v492 = vunpack.c.h.b16 %v416
    %v493 = vunpack.c.l.b16 %v417
    %v494 = vunpack.c.h.b16 %v417
    %v495 = vunpack.c.l.b16 %v418
    %v496 = vunpack.c.h.b16 %v418
    %v497 = vunpack.c.l.b16 %v419
    %v498 = vunpack.c.h.b16 %v419
    %v499 = vunpack.c.l.b16 %v420
    %v500 = vunpack.c.h.b16 %v420
    %v501 = vunpack.c.l.b16 %v421
    %v502 = vunpack.c.h.b16 %v421
    %v503 = vunpack.c.l.b16 %v422
    %v504 = vunpack.c.h.b16 %v422
    %v505 = vunpack.c.l.b16 %v423
    %v506 = vunpack.c.h.b16 %v423
    %v507 = vunpack.c.l.b16 %v424
    %v508 = vunpack.c.h.b16 %v424
    %v509 = vunpack.c.l.b16 %v425
    %v510 = vunpack.c.h.b16 %v425
    %v511 = vunpack.c.l.b16 %v426
    %v512 = vunpack.c.h.b16 %v426
    %v513 = vunpack.c.l.b16 %v427
    %v514 = vunpack.c.h.b16 %v427
    %v515 = vunpack.c.l.b16 %v428
    %v516 = vunpack.c.h.b16 %v428
    %v517 = vunpack.c.l.b16 %v429
    %v518 = vunpack.c.h.b16 %v429
    %v519 = vunpack.c.l.b16 %v430
    %v520 = vunpack.c.h.b16 %v430
    %v521 = vunpack.c.l.b16 %v431
    %v522 = vunpack.c.h.b16 %v431
    %v523 = vunpack.c.l.b16 %v432
    %v524 = vunpack.c.h.b16 %v432
    %v525 = vunpack.c.l.b16 %v433
    %v526 = vunpack.c.h.b16 %v433
    %v527 = vunpack.c.l.b16 %v434
    %v528 = vunpack.c.h.b16 %v434
    %v529 = vunpack.c.l.b16 %v435
    %v530 = vunpack.c.h.b16 %v435
    %v531 = vunpack.c.l.b16 %v436
    %v532 = vunpack.c.h.b16 %v436
    %v533 = vpack.c.b16 %v471, %v469
    %v534 = vpack.c.b16 %v472, %v470
    %v535 = vpack.c.b16 %v475, %v473
    %v536 = vpack.c.b16 %v476, %v474
    %v537 = vpack.c.b16 %v479, %v477
    %v538 = vpack.c.b16 %v480, %v478
    %v539 = vpack.c.b16 %v483, %v481
    %v540 = vpack.c.b16 %v484, %v482
    %v541 = vpack.c.b16 %v487, %v485
    %v542 = vpack.c.b16 %v488, %v486
    %v543 = vpack.c.b16 %v491, %v489
    %v544 = vpack.c.b16 %v492, %v490
    %v545 = vpack.c.b16 %v495, %v493
    %v546 = vpack.c.b16 %v496, %v494
    %v547 = vpack.c.b16 %v499, %v497
    %v548 = vpack.c.b16 %v500, %v498
    %v549 = vpack.c.b16 %v503, %v501
    %v550 = vpack.c.b16 %v504, %v502
    %v551 = vpack.c.b16 %v507, %v505
    %v552 = vpack.c.b16 %v508, %v506
    %v553 = vpack.c.b16 %v511, %v509
    %v554 = vpack.c.b16 %v512, %v510
    %v555 = vpack.c.b16 %v515, %v513
    %v556 = vpack.c.b16 %v516, %v514
    %v557 = vpack.c.b16 %v519, %v517
    %v558 = vpack.c.b16 %v520, %v518
    %v559 = vpack.c.b16 %v523, %v521
    %v560 = vpack.c.b16 %v524, %v522
    %v561 = vpack.c.b16 %v527, %v525
    %v562 = vpack.c.b16 %v528, %v526
    %v563 = vpack.c.b16 %v531, %v529
    %v564 = vpack.c.b16 %v532, %v530
    %v598 = vperm.slane %v215, 0
    %v599 = vperm.slane %v215, 1
    %602 = vmatpush.bf16.msra.mxu0 %v547
    %603 = vmatpush.bf16.msra.mxu0 %v545
    %604 = vmatpush.bf16.msra.mxu0 %v543
    %605 = vmatpush.bf16.msra.mxu0 %v541
    %606 = vmatpush.bf16.msra.mxu0 %v539
    %607 = vmatpush.bf16.msra.mxu0 %v537
    %608 = vmatpush.bf16.msra.mxu0 %v535
    %609 = vmatpush.bf16.msra.mxu0 %v533
    %610 = vmatmul.bf16.gmra.mxu0 %v403
    %v611 = vpop.f32.mrf.mxu0
    %v612 = vadd.f32 %v598, %v611
    %v613 = vpop.f32.mrf.mxu0
    %614 = vdwg.mxu0
    %615 = vmatpush.bf16.msra.mxu0 %v563
    %616 = vmatpush.bf16.msra.mxu0 %v561
    %617 = vmatpush.bf16.msra.mxu0 %v559
    %618 = vmatpush.bf16.msra.mxu0 %v557
    %619 = vmatpush.bf16.msra.mxu0 %v555
    %620 = vmatpush.bf16.msra.mxu0 %v553
    %621 = vmatpush.bf16.msra.mxu0 %v551
    %622 = vmatpush.bf16.msra.mxu0 %v549
    %623 = vmatmul.bf16.gmra.mxu0 %v404
    %v624 = vpop.f32.mrf.mxu0
    %v625 = vadd.f32 %v612, %v624
    %v626 = vpop.f32.mrf.mxu0
    %627 = vdwg.mxu0
    %628 = vmatpush.bf16.msra.mxu0 %v548
    %629 = vmatpush.bf16.msra.mxu0 %v546
    %630 = vmatpush.bf16.msra.mxu0 %v544
    %631 = vmatpush.bf16.msra.mxu0 %v542
    %632 = vmatpush.bf16.msra.mxu0 %v540
    %633 = vmatpush.bf16.msra.mxu0 %v538
    %634 = vmatpush.bf16.msra.mxu0 %v536
    %635 = vmatpush.bf16.msra.mxu0 %v534
    %636 = vmatmul.bf16.gmra.mxu0 %v403
    %v637 = vpop.f32.mrf.mxu0
    %v638 = vadd.f32 %v599, %v637
    %v639 = vpop.f32.mrf.mxu0
    %640 = vdwg.mxu0
    %641 = vmatpush.bf16.msra.mxu0 %v564
    %642 = vmatpush.bf16.msra.mxu0 %v562
    %643 = vmatpush.bf16.msra.mxu0 %v560
    %644 = vmatpush.bf16.msra.mxu0 %v558
    %645 = vmatpush.bf16.msra.mxu0 %v556
    %646 = vmatpush.bf16.msra.mxu0 %v554
    %647 = vmatpush.bf16.msra.mxu0 %v552
    %648 = vmatpush.bf16.msra.mxu0 %v550
    %649 = vmatmul.bf16.gmra.mxu0 %v404
    %v650 = vpop.f32.mrf.mxu0
    %v651 = vadd.f32 %v638, %v650
    %v652 = vpop.f32.mrf.mxu0
    %653 = vdwg.mxu0
    %v654 = vmax.f32 %v625, 0.0
    %v655 = vmax.f32 %v651, 0.0
    %v656 = vld [vmem:[%s1] sm:$0x3]
    %v658 = vperm.slane %v656, 0
    %v659 = vperm.slane %v656, 1
    %v662 = vpack.c.bf16 %v658, %v658
    %v663 = vpack.c.bf16 %v659, %v659
    %v664 = vld [vmem:[#allocation8] sm:$0xff]
    %v665 = vld [vmem:[#allocation8 + $0x8] sm:$0xff]
    %v666 = vld [vmem:[#allocation8 + $0x10] sm:$0xff]
    %v667 = vld [vmem:[#allocation8 + $0x18] sm:$0xff]
    %v668 = vld [vmem:[#allocation8 + $0x20] sm:$0xff]
    %v669 = vld [vmem:[#allocation8 + $0x28] sm:$0xff]
    %v670 = vld [vmem:[#allocation8 + $0x30] sm:$0xff]
    %v671 = vld [vmem:[#allocation8 + $0x38] sm:$0xff]
    %v672 = vld [vmem:[#allocation8 + $0x40] sm:$0xff]
    %v673 = vld [vmem:[#allocation8 + $0x48] sm:$0xff]
    %v674 = vld [vmem:[#allocation8 + $0x50] sm:$0xff]
    %v675 = vld [vmem:[#allocation8 + $0x58] sm:$0xff]
    %v676 = vld [vmem:[#allocation8 + $0x60] sm:$0xff]
    %v677 = vld [vmem:[#allocation8 + $0x68] sm:$0xff]
    %v678 = vld [vmem:[#allocation8 + $0x70] sm:$0xff]
    %v679 = vld [vmem:[#allocation8 + $0x78] sm:$0xff]
    %v680 = vld [vmem:[#allocation8 + $0x80] sm:$0xff]
    %v681 = vld [vmem:[#allocation8 + $0x88] sm:$0xff]
    %v682 = vld [vmem:[#allocation8 + $0x90] sm:$0xff]
    %v683 = vld [vmem:[#allocation8 + $0x98] sm:$0xff]
    %v684 = vld [vmem:[#allocation8 + $0xa0] sm:$0xff]
    %v685 = vld [vmem:[#allocation8 + $0xa8] sm:$0xff]
    %v686 = vld [vmem:[#allocation8 + $0xb0] sm:$0xff]
    %v687 = vld [vmem:[#allocation8 + $0xb8] sm:$0xff]
    %v688 = vld [vmem:[#allocation8 + $0xc0] sm:$0xff]
    %v689 = vld [vmem:[#allocation8 + $0xc8] sm:$0xff]
    %v690 = vld [vmem:[#allocation8 + $0xd0] sm:$0xff]
    %v691 = vld [vmem:[#allocation8 + $0xd8] sm:$0xff]
    %v692 = vld [vmem:[#allocation8 + $0xe0] sm:$0xff]
    %v693 = vld [vmem:[#allocation8 + $0xe8] sm:$0xff]
    %v694 = vld [vmem:[#allocation8 + $0xf0] sm:$0xff]
    %v695 = vld [vmem:[#allocation8 + $0xf8] sm:$0xff]
    %v728 = vunpack.c.l.b16 %v664
    %v729 = vunpack.c.h.b16 %v664
    %v730 = vunpack.c.l.b16 %v665
    %v731 = vunpack.c.h.b16 %v665
    %v732 = vunpack.c.l.b16 %v666
    %v733 = vunpack.c.h.b16 %v666
    %v734 = vunpack.c.l.b16 %v667
    %v735 = vunpack.c.h.b16 %v667
    %v736 = vunpack.c.l.b16 %v668
    %v737 = vunpack.c.h.b16 %v668
    %v738 = vunpack.c.l.b16 %v669
    %v739 = vunpack.c.h.b16 %v669
    %v740 = vunpack.c.l.b16 %v670
    %v741 = vunpack.c.h.b16 %v670
    %v742 = vunpack.c.l.b16 %v671
    %v743 = vunpack.c.h.b16 %v671
    %v744 = vunpack.c.l.b16 %v672
    %v745 = vunpack.c.h.b16 %v672
    %v746 = vunpack.c.l.b16 %v673
    %v747 = vunpack.c.h.b16 %v673
    %v748 = vunpack.c.l.b16 %v674
    %v749 = vunpack.c.h.b16 %v674
    %v750 = vunpack.c.l.b16 %v675
    %v751 = vunpack.c.h.b16 %v675
    %v752 = vunpack.c.l.b16 %v676
    %v753 = vunpack.c.h.b16 %v676
    %v754 = vunpack.c.l.b16 %v677
    %v755 = vunpack.c.h.b16 %v677
    %v756 = vunpack.c.l.b16 %v678
    %v757 = vunpack.c.h.b16 %v678
    %v758 = vunpack.c.l.b16 %v679
    %v759 = vunpack.c.h.b16 %v679
    %v760 = vunpack.c.l.b16 %v680
    %v761 = vunpack.c.h.b16 %v680
    %v762 = vunpack.c.l.b16 %v681
    %v763 = vunpack.c.h.b16 %v681
    %v764 = vunpack.c.l.b16 %v682
    %v765 = vunpack.c.h.b16 %v682
    %v766 = vunpack.c.l.b16 %v683
    %v767 = vunpack.c.h.b16 %v683
    %v768 = vunpack.c.l.b16 %v684
    %v769 = vunpack.c.h.b16 %v684
    %v770 = vunpack.c.l.b16 %v685
    %v771 = vunpack.c.h.b16 %v685
    %v772 = vunpack.c.l.b16 %v686
    %v773 = vunpack.c.h.b16 %v686
    %v774 = vunpack.c.l.b16 %v687
    %v775 = vunpack.c.h.b16 %v687
    %v776 = vunpack.c.l.b16 %v688
    %v777 = vunpack.c.h.b16 %v688
    %v778 = vunpack.c.l.b16 %v689
    %v779 = vunpack.c.h.b16 %v689
    %v780 = vunpack.c.l.b16 %v690
    %v781 = vunpack.c.h.b16 %v690
    %v782 = vunpack.c.l.b16 %v691
    %v783 = vunpack.c.h.b16 %v691
    %v784 = vunpack.c.l.b16 %v692
    %v785 = vunpack.c.h.b16 %v692
    %v786 = vunpack.c.l.b16 %v693
    %v787 = vunpack.c.h.b16 %v693
    %v788 = vunpack.c.l.b16 %v694
    %v789 = vunpack.c.h.b16 %v694
    %v790 = vunpack.c.l.b16 %v695
    %v791 = vunpack.c.h.b16 %v695
    %v792 = vpack.c.b16 %v730, %v728
    %v793 = vpack.c.b16 %v731, %v729
    %v794 = vpack.c.b16 %v734, %v732
    %v795 = vpack.c.b16 %v735, %v733
    %v796 = vpack.c.b16 %v738, %v736
    %v797 = vpack.c.b16 %v739, %v737
    %v798 = vpack.c.b16 %v742, %v740
    %v799 = vpack.c.b16 %v743, %v741
    %v800 = vpack.c.b16 %v746, %v744
    %v801 = vpack.c.b16 %v747, %v745
    %v802 = vpack.c.b16 %v750, %v748
    %v803 = vpack.c.b16 %v751, %v749
    %v804 = vpack.c.b16 %v754, %v752
    %v805 = vpack.c.b16 %v755, %v753
    %v806 = vpack.c.b16 %v758, %v756
    %v807 = vpack.c.b16 %v759, %v757
    %v808 = vpack.c.b16 %v762, %v760
    %v809 = vpack.c.b16 %v763, %v761
    %v810 = vpack.c.b16 %v766, %v764
    %v811 = vpack.c.b16 %v767, %v765
    %v812 = vpack.c.b16 %v770, %v768
    %v813 = vpack.c.b16 %v771, %v769
    %v814 = vpack.c.b16 %v774, %v772
    %v815 = vpack.c.b16 %v775, %v773
    %v816 = vpack.c.b16 %v778, %v776
    %v817 = vpack.c.b16 %v779, %v777
    %v818 = vpack.c.b16 %v782, %v780
    %v819 = vpack.c.b16 %v783, %v781
    %v820 = vpack.c.b16 %v786, %v784
    %v821 = vpack.c.b16 %v787, %v785
    %v822 = vpack.c.b16 %v790, %v788
    %v823 = vpack.c.b16 %v791, %v789
    %v857 = vperm.slane %v216, 0
    %v858 = vperm.slane %v216, 1
    %861 = vmatpush.bf16.msra.mxu0 %v806
    %862 = vmatpush.bf16.msra.mxu0 %v804
    %863 = vmatpush.bf16.msra.mxu0 %v802
    %864 = vmatpush.bf16.msra.mxu0 %v800
    %865 = vmatpush.bf16.msra.mxu0 %v798
    %866 = vmatpush.bf16.msra.mxu0 %v796
    %867 = vmatpush.bf16.msra.mxu0 %v794
    %868 = vmatpush.bf16.msra.mxu0 %v792
    %869 = vmatmul.bf16.gmra.mxu0 %v662
    %v870 = vpop.f32.mrf.mxu0
    %v871 = vadd.f32 %v857, %v870
    %v872 = vpop.f32.mrf.mxu0
    %873 = vdwg.mxu0
    %874 = vmatpush.bf16.msra.mxu0 %v822
    %875 = vmatpush.bf16.msra.mxu0 %v820
    %876 = vmatpush.bf16.msra.mxu0 %v818
    %877 = vmatpush.bf16.msra.mxu0 %v816
    %878 = vmatpush.bf16.msra.mxu0 %v814
    %879 = vmatpush.bf16.msra.mxu0 %v812
    %880 = vmatpush.bf16.msra.mxu0 %v810
    %881 = vmatpush.bf16.msra.mxu0 %v808
    %882 = vmatmul.bf16.gmra.mxu0 %v663
    %v883 = vpop.f32.mrf.mxu0
    %v884 = vadd.f32 %v871, %v883
    %v885 = vpop.f32.mrf.mxu0
    %886 = vdwg.mxu0
    %887 = vmatpush.bf16.msra.mxu0 %v807
    %888 = vmatpush.bf16.msra.mxu0 %v805
    %889 = vmatpush.bf16.msra.mxu0 %v803
    %890 = vmatpush.bf16.msra.mxu0 %v801
    %891 = vmatpush.bf16.msra.mxu0 %v799
    %892 = vmatpush.bf16.msra.mxu0 %v797
    %893 = vmatpush.bf16.msra.mxu0 %v795
    %894 = vmatpush.bf16.msra.mxu0 %v793
    %895 = vmatmul.bf16.gmra.mxu0 %v662
    %v896 = vpop.f32.mrf.mxu0
    %v897 = vadd.f32 %v858, %v896
    %v898 = vpop.f32.mrf.mxu0
    %899 = vdwg.mxu0
    %900 = vmatpush.bf16.msra.mxu0 %v823
    %901 = vmatpush.bf16.msra.mxu0 %v821
    %902 = vmatpush.bf16.msra.mxu0 %v819
    %903 = vmatpush.bf16.msra.mxu0 %v817
    %904 = vmatpush.bf16.msra.mxu0 %v815
    %905 = vmatpush.bf16.msra.mxu0 %v813
    %906 = vmatpush.bf16.msra.mxu0 %v811
    %907 = vmatpush.bf16.msra.mxu0 %v809
    %908 = vmatmul.bf16.gmra.mxu0 %v663
    %v909 = vpop.f32.mrf.mxu0
    %v910 = vadd.f32 %v897, %v909
    %v911 = vpop.f32.mrf.mxu0
    %912 = vdwg.mxu0
    %v913 = vmax.f32 %v884, 0.0
    %v914 = vmax.f32 %v910, 0.0
    %v915 = vpack.c.bf16 %v654, %v654
    %v916 = vpack.c.bf16 %v655, %v655
    %v917 = vpack.c.bf16 %v913, %v913
    %v918 = vpack.c.bf16 %v914, %v914
    %v919 = vld [vmem:[#allocation9] sm:$0xff]
    %v920 = vld [vmem:[#allocation9 + $0x8] sm:$0xff]
    %v921 = vld [vmem:[#allocation9 + $0x10] sm:$0xff]
    %v922 = vld [vmem:[#allocation9 + $0x18] sm:$0xff]
    %v923 = vld [vmem:[#allocation9 + $0x20] sm:$0xff]
    %v924 = vld [vmem:[#allocation9 + $0x28] sm:$0xff]
    %v925 = vld [vmem:[#allocation9 + $0x30] sm:$0xff]
    %v926 = vld [vmem:[#allocation9 + $0x38] sm:$0xff]
    %v927 = vld [vmem:[#allocation9 + $0x40] sm:$0xff]
    %v928 = vld [vmem:[#allocation9 + $0x48] sm:$0xff]
    %v929 = vld [vmem:[#allocation9 + $0x50] sm:$0xff]
    %v930 = vld [vmem:[#allocation9 + $0x58] sm:$0xff]
    %v931 = vld [vmem:[#allocation9 + $0x60] sm:$0xff]
    %v932 = vld [vmem:[#allocation9 + $0x68] sm:$0xff]
    %v933 = vld [vmem:[#allocation9 + $0x70] sm:$0xff]
    %v934 = vld [vmem:[#allocation9 + $0x78] sm:$0xff]
    %v935 = vld [vmem:[#allocation9 + $0x80] sm:$0xff]
    %v936 = vld [vmem:[#allocation9 + $0x88] sm:$0xff]
    %v937 = vld [vmem:[#allocation9 + $0x90] sm:$0xff]
    %v938 = vld [vmem:[#allocation9 + $0x98] sm:$0xff]
    %v939 = vld [vmem:[#allocation9 + $0xa0] sm:$0xff]
    %v940 = vld [vmem:[#allocation9 + $0xa8] sm:$0xff]
    %v941 = vld [vmem:[#allocation9 + $0xb0] sm:$0xff]
    %v942 = vld [vmem:[#allocation9 + $0xb8] sm:$0xff]
    %v943 = vld [vmem:[#allocation9 + $0xc0] sm:$0xff]
    %v944 = vld [vmem:[#allocation9 + $0xc8] sm:$0xff]
    %v945 = vld [vmem:[#allocation9 + $0xd0] sm:$0xff]
    %v946 = vld [vmem:[#allocation9 + $0xd8] sm:$0xff]
    %v947 = vld [vmem:[#allocation9 + $0xe0] sm:$0xff]
    %v948 = vld [vmem:[#allocation9 + $0xe8] sm:$0xff]
    %v949 = vld [vmem:[#allocation9 + $0xf0] sm:$0xff]
    %v950 = vld [vmem:[#allocation9 + $0xf8] sm:$0xff]
    %v951 = vld [vmem:[#allocation9 + $0x100] sm:$0xff]
    %v952 = vld [vmem:[#allocation9 + $0x108] sm:$0xff]
    %v953 = vld [vmem:[#allocation9 + $0x110] sm:$0xff]
    %v954 = vld [vmem:[#allocation9 + $0x118] sm:$0xff]
    %v955 = vld [vmem:[#allocation9 + $0x120] sm:$0xff]
    %v956 = vld [vmem:[#allocation9 + $0x128] sm:$0xff]
    %v957 = vld [vmem:[#allocation9 + $0x130] sm:$0xff]
    %v958 = vld [vmem:[#allocation9 + $0x138] sm:$0xff]
    %v959 = vld [vmem:[#allocation9 + $0x140] sm:$0xff]
    %v960 = vld [vmem:[#allocation9 + $0x148] sm:$0xff]
    %v961 = vld [vmem:[#allocation9 + $0x150] sm:$0xff]
    %v962 = vld [vmem:[#allocation9 + $0x158] sm:$0xff]
    %v963 = vld [vmem:[#allocation9 + $0x160] sm:$0xff]
    %v964 = vld [vmem:[#allocation9 + $0x168] sm:$0xff]
    %v965 = vld [vmem:[#allocation9 + $0x170] sm:$0xff]
    %v966 = vld [vmem:[#allocation9 + $0x178] sm:$0xff]
    %v967 = vld [vmem:[#allocation9 + $0x180] sm:$0xff]
    %v968 = vld [vmem:[#allocation9 + $0x188] sm:$0xff]
    %v969 = vld [vmem:[#allocation9 + $0x190] sm:$0xff]
    %v970 = vld [vmem:[#allocation9 + $0x198] sm:$0xff]
    %v971 = vld [vmem:[#allocation9 + $0x1a0] sm:$0xff]
    %v972 = vld [vmem:[#allocation9 + $0x1a8] sm:$0xff]
    %v973 = vld [vmem:[#allocation9 + $0x1b0] sm:$0xff]
    %v974 = vld [vmem:[#allocation9 + $0x1b8] sm:$0xff]
    %v975 = vld [vmem:[#allocation9 + $0x1c0] sm:$0xff]
    %v976 = vld [vmem:[#allocation9 + $0x1c8] sm:$0xff]
    %v977 = vld [vmem:[#allocation9 + $0x1d0] sm:$0xff]
    %v978 = vld [vmem:[#allocation9 + $0x1d8] sm:$0xff]
    %v979 = vld [vmem:[#allocation9 + $0x1e0] sm:$0xff]
    %v980 = vld [vmem:[#allocation9 + $0x1e8] sm:$0xff]
    %v981 = vld [vmem:[#allocation9 + $0x1f0] sm:$0xff]
    %v982 = vld [vmem:[#allocation9 + $0x1f8] sm:$0xff]
    %v1047 = vunpack.c.l.b16 %v919
    %v1048 = vunpack.c.h.b16 %v919
    %v1049 = vunpack.c.l.b16 %v920
    %v1050 = vunpack.c.h.b16 %v920
    %v1051 = vunpack.c.l.b16 %v921
    %v1052 = vunpack.c.h.b16 %v921
    %v1053 = vunpack.c.l.b16 %v922
    %v1054 = vunpack.c.h.b16 %v922
    %v1055 = vunpack.c.l.b16 %v923
    %v1056 = vunpack.c.h.b16 %v923
    %v1057 = vunpack.c.l.b16 %v924
    %v1058 = vunpack.c.h.b16 %v924
    %v1059 = vunpack.c.l.b16 %v925
    %v1060 = vunpack.c.h.b16 %v925
    %v1061 = vunpack.c.l.b16 %v926
    %v1062 = vunpack.c.h.b16 %v926
    %v1063 = vunpack.c.l.b16 %v927
    %v1064 = vunpack.c.h.b16 %v927
    %v1065 = vunpack.c.l.b16 %v928
    %v1066 = vunpack.c.h.b16 %v928
    %v1067 = vunpack.c.l.b16 %v929
    %v1068 = vunpack.c.h.b16 %v929
    %v1069 = vunpack.c.l.b16 %v930
    %v1070 = vunpack.c.h.b16 %v930
    %v1071 = vunpack.c.l.b16 %v931
    %v1072 = vunpack.c.h.b16 %v931
    %v1073 = vunpack.c.l.b16 %v932
    %v1074 = vunpack.c.h.b16 %v932
    %v1075 = vunpack.c.l.b16 %v933
    %v1076 = vunpack.c.h.b16 %v933
    %v1077 = vunpack.c.l.b16 %v934
    %v1078 = vunpack.c.h.b16 %v934
    %v1079 = vunpack.c.l.b16 %v935
    %v1080 = vunpack.c.h.b16 %v935
    %v1081 = vunpack.c.l.b16 %v936
    %v1082 = vunpack.c.h.b16 %v936
    %v1083 = vunpack.c.l.b16 %v937
    %v1084 = vunpack.c.h.b16 %v937
    %v1085 = vunpack.c.l.b16 %v938
    %v1086 = vunpack.c.h.b16 %v938
    %v1087 = vunpack.c.l.b16 %v939
    %v1088 = vunpack.c.h.b16 %v939
    %v1089 = vunpack.c.l.b16 %v940
    %v1090 = vunpack.c.h.b16 %v940
    %v1091 = vunpack.c.l.b16 %v941
    %v1092 = vunpack.c.h.b16 %v941
    %v1093 = vunpack.c.l.b16 %v942
    %v1094 = vunpack.c.h.b16 %v942
    %v1095 = vunpack.c.l.b16 %v943
    %v1096 = vunpack.c.h.b16 %v943
    %v1097 = vunpack.c.l.b16 %v944
    %v1098 = vunpack.c.h.b16 %v944
    %v1099 = vunpack.c.l.b16 %v945
    %v1100 = vunpack.c.h.b16 %v945
    %v1101 = vunpack.c.l.b16 %v946
    %v1102 = vunpack.c.h.b16 %v946
    %v1103 = vunpack.c.l.b16 %v947
    %v1104 = vunpack.c.h.b16 %v947
    %v1105 = vunpack.c.l.b16 %v948
    %v1106 = vunpack.c.h.b16 %v948
    %v1107 = vunpack.c.l.b16 %v949
    %v1108 = vunpack.c.h.b16 %v949
    %v1109 = vunpack.c.l.b16 %v950
    %v1110 = vunpack.c.h.b16 %v950
    %v1111 = vunpack.c.l.b16 %v951
    %v1112 = vunpack.c.h.b16 %v951
    %v1113 = vunpack.c.l.b16 %v952
    %v1114 = vunpack.c.h.b16 %v952
    %v1115 = vunpack.c.l.b16 %v953
    %v1116 = vunpack.c.h.b16 %v953
    %v1117 = vunpack.c.l.b16 %v954
    %v1118 = vunpack.c.h.b16 %v954
    %v1119 = vunpack.c.l.b16 %v955
    %v1120 = vunpack.c.h.b16 %v955
    %v1121 = vunpack.c.l.b16 %v956
    %v1122 = vunpack.c.h.b16 %v956
    %v1123 = vunpack.c.l.b16 %v957
    %v1124 = vunpack.c.h.b16 %v957
    %v1125 = vunpack.c.l.b16 %v958
    %v1126 = vunpack.c.h.b16 %v958
    %v1127 = vunpack.c.l.b16 %v959
    %v1128 = vunpack.c.h.b16 %v959
    %v1129 = vunpack.c.l.b16 %v960
    %v1130 = vunpack.c.h.b16 %v960
    %v1131 = vunpack.c.l.b16 %v961
    %v1132 = vunpack.c.h.b16 %v961
    %v1133 = vunpack.c.l.b16 %v962
    %v1134 = vunpack.c.h.b16 %v962
    %v1135 = vunpack.c.l.b16 %v963
    %v1136 = vunpack.c.h.b16 %v963
    %v1137 = vunpack.c.l.b16 %v964
    %v1138 = vunpack.c.h.b16 %v964
    %v1139 = vunpack.c.l.b16 %v965
    %v1140 = vunpack.c.h.b16 %v965
    %v1141 = vunpack.c.l.b16 %v966
    %v1142 = vunpack.c.h.b16 %v966
    %v1143 = vunpack.c.l.b16 %v967
    %v1144 = vunpack.c.h.b16 %v967
    %v1145 = vunpack.c.l.b16 %v968
    %v1146 = vunpack.c.h.b16 %v968
    %v1147 = vunpack.c.l.b16 %v969
    %v1148 = vunpack.c.h.b16 %v969
    %v1149 = vunpack.c.l.b16 %v970
    %v1150 = vunpack.c.h.b16 %v970
    %v1151 = vunpack.c.l.b16 %v971
    %v1152 = vunpack.c.h.b16 %v971
    %v1153 = vunpack.c.l.b16 %v972
    %v1154 = vunpack.c.h.b16 %v972
    %v1155 = vunpack.c.l.b16 %v973
    %v1156 = vunpack.c.h.b16 %v973
    %v1157 = vunpack.c.l.b16 %v974
    %v1158 = vunpack.c.h.b16 %v974
    %v1159 = vunpack.c.l.b16 %v975
    %v1160 = vunpack.c.h.b16 %v975
    %v1161 = vunpack.c.l.b16 %v976
    %v1162 = vunpack.c.h.b16 %v976
    %v1163 = vunpack.c.l.b16 %v977
    %v1164 = vunpack.c.h.b16 %v977
    %v1165 = vunpack.c.l.b16 %v978
    %v1166 = vunpack.c.h.b16 %v978
    %v1167 = vunpack.c.l.b16 %v979
    %v1168 = vunpack.c.h.b16 %v979
    %v1169 = vunpack.c.l.b16 %v980
    %v1170 = vunpack.c.h.b16 %v980
    %v1171 = vunpack.c.l.b16 %v981
    %v1172 = vunpack.c.h.b16 %v981
    %v1173 = vunpack.c.l.b16 %v982
    %v1174 = vunpack.c.h.b16 %v982
    %v1175 = vpack.c.b16 %v1049, %v1047
    %v1176 = vpack.c.b16 %v1050, %v1048
    %v1177 = vpack.c.b16 %v1053, %v1051
    %v1178 = vpack.c.b16 %v1054, %v1052
    %v1179 = vpack.c.b16 %v1057, %v1055
    %v1180 = vpack.c.b16 %v1058, %v1056
    %v1181 = vpack.c.b16 %v1061, %v1059
    %v1182 = vpack.c.b16 %v1062, %v1060
    %v1183 = vpack.c.b16 %v1065, %v1063
    %v1184 = vpack.c.b16 %v1066, %v1064
    %v1185 = vpack.c.b16 %v1069, %v1067
    %v1186 = vpack.c.b16 %v1070, %v1068
    %v1187 = vpack.c.b16 %v1073, %v1071
    %v1188 = vpack.c.b16 %v1074, %v1072
    %v1189 = vpack.c.b16 %v1077, %v1075
    %v1190 = vpack.c.b16 %v1078, %v1076
    %v1191 = vpack.c.b16 %v1081, %v1079
    %v1192 = vpack.c.b16 %v1082, %v1080
    %v1193 = vpack.c.b16 %v1085, %v1083
    %v1194 = vpack.c.b16 %v1086, %v1084
    %v1195 = vpack.c.b16 %v1089, %v1087
    %v1196 = vpack.c.b16 %v1090, %v1088
    %v1197 = vpack.c.b16 %v1093, %v1091
    %v1198 = vpack.c.b16 %v1094, %v1092
    %v1199 = vpack.c.b16 %v1097, %v1095
    %v1200 = vpack.c.b16 %v1098, %v1096
    %v1201 = vpack.c.b16 %v1101, %v1099
    %v1202 = vpack.c.b16 %v1102, %v1100
    %v1203 = vpack.c.b16 %v1105, %v1103
    %v1204 = vpack.c.b16 %v1106, %v1104
    %v1205 = vpack.c.b16 %v1109, %v1107
    %v1206 = vpack.c.b16 %v1110, %v1108
    %v1207 = vpack.c.b16 %v1113, %v1111
    %v1208 = vpack.c.b16 %v1114, %v1112
    %v1209 = vpack.c.b16 %v1117, %v1115
    %v1210 = vpack.c.b16 %v1118, %v1116
    %v1211 = vpack.c.b16 %v1121, %v1119
    %v1212 = vpack.c.b16 %v1122, %v1120
    %v1213 = vpack.c.b16 %v1125, %v1123
    %v1214 = vpack.c.b16 %v1126, %v1124
    %v1215 = vpack.c.b16 %v1129, %v1127
    %v1216 = vpack.c.b16 %v1130, %v1128
    %v1217 = vpack.c.b16 %v1133, %v1131
    %v1218 = vpack.c.b16 %v1134, %v1132
    %v1219 = vpack.c.b16 %v1137, %v1135
    %v1220 = vpack.c.b16 %v1138, %v1136
    %v1221 = vpack.c.b16 %v1141, %v1139
    %v1222 = vpack.c.b16 %v1142, %v1140
    %v1223 = vpack.c.b16 %v1145, %v1143
    %v1224 = vpack.c.b16 %v1146, %v1144
    %v1225 = vpack.c.b16 %v1149, %v1147
    %v1226 = vpack.c.b16 %v1150, %v1148
    %v1227 = vpack.c.b16 %v1153, %v1151
    %v1228 = vpack.c.b16 %v1154, %v1152
    %v1229 = vpack.c.b16 %v1157, %v1155
    %v1230 = vpack.c.b16 %v1158, %v1156
    %v1231 = vpack.c.b16 %v1161, %v1159
    %v1232 = vpack.c.b16 %v1162, %v1160
    %v1233 = vpack.c.b16 %v1165, %v1163
    %v1234 = vpack.c.b16 %v1166, %v1164
    %v1235 = vpack.c.b16 %v1169, %v1167
    %v1236 = vpack.c.b16 %v1170, %v1168
    %v1237 = vpack.c.b16 %v1173, %v1171
    %v1238 = vpack.c.b16 %v1174, %v1172
    %v1304 = vperm.slane %v217, 0
    %v1305 = vperm.slane %v217, 1
    %1308 = vmatpush.bf16.msra.mxu0 %v1189
    %1309 = vmatpush.bf16.msra.mxu0 %v1187
    %1310 = vmatpush.bf16.msra.mxu0 %v1185
    %1311 = vmatpush.bf16.msra.mxu0 %v1183
    %1312 = vmatpush.bf16.msra.mxu0 %v1181
    %1313 = vmatpush.bf16.msra.mxu0 %v1179
    %1314 = vmatpush.bf16.msra.mxu0 %v1177
    %1315 = vmatpush.bf16.msra.mxu0 %v1175
    %1316 = vmatmul.bf16.gmra.mxu0 %v915
    %v1317 = vpop.f32.mrf.mxu0
    %v1318 = vadd.f32 %v1304, %v1317
    %v1319 = vpop.f32.mrf.mxu0
    %1320 = vdwg.mxu0
    %1321 = vmatpush.bf16.msra.mxu0 %v1205
    %1322 = vmatpush.bf16.msra.mxu0 %v1203
    %1323 = vmatpush.bf16.msra.mxu0 %v1201
    %1324 = vmatpush.bf16.msra.mxu0 %v1199
    %1325 = vmatpush.bf16.msra.mxu0 %v1197
    %1326 = vmatpush.bf16.msra.mxu0 %v1195
    %1327 = vmatpush.bf16.msra.mxu0 %v1193
    %1328 = vmatpush.bf16.msra.mxu0 %v1191
    %1329 = vmatmul.bf16.gmra.mxu0 %v916
    %v1330 = vpop.f32.mrf.mxu0
    %v1331 = vadd.f32 %v1318, %v1330
    %v1332 = vpop.f32.mrf.mxu0
    %1333 = vdwg.mxu0
    %1334 = vmatpush.bf16.msra.mxu0 %v1221
    %1335 = vmatpush.bf16.msra.mxu0 %v1219
    %1336 = vmatpush.bf16.msra.mxu0 %v1217
    %1337 = vmatpush.bf16.msra.mxu0 %v1215
    %1338 = vmatpush.bf16.msra.mxu0 %v1213
    %1339 = vmatpush.bf16.msra.mxu0 %v1211
    %1340 = vmatpush.bf16.msra.mxu0 %v1209
    %1341 = vmatpush.bf16.msra.mxu0 %v1207
    %1342 = vmatmul.bf16.gmra.mxu0 %v917
    %v1343 = vpop.f32.mrf.mxu0
    %v1344 = vadd.f32 %v1331, %v1343
    %v1345 = vpop.f32.mrf.mxu0
    %1346 = vdwg.mxu0
    %1347 = vmatpush.bf16.msra.mxu0 %v1237
    %1348 = vmatpush.bf16.msra.mxu0 %v1235
    %1349 = vmatpush.bf16.msra.mxu0 %v1233
    %1350 = vmatpush.bf16.msra.mxu0 %v1231
    %1351 = vmatpush.bf16.msra.mxu0 %v1229
    %1352 = vmatpush.bf16.msra.mxu0 %v1227
    %1353 = vmatpush.bf16.msra.mxu0 %v1225
    %1354 = vmatpush.bf16.msra.mxu0 %v1223
    %1355 = vmatmul.bf16.gmra.mxu0 %v918
    %v1356 = vpop.f32.mrf.mxu0
    %v1357 = vadd.f32 %v1344, %v1356
    %v1358 = vpop.f32.mrf.mxu0
    %1359 = vdwg.mxu0
    %1360 = vmatpush.bf16.msra.mxu0 %v1190
    %1361 = vmatpush.bf16.msra.mxu0 %v1188
    %1362 = vmatpush.bf16.msra.mxu0 %v1186
    %1363 = vmatpush.bf16.msra.mxu0 %v1184
    %1364 = vmatpush.bf16.msra.mxu0 %v1182
    %1365 = vmatpush.bf16.msra.mxu0 %v1180
    %1366 = vmatpush.bf16.msra.mxu0 %v1178
    %1367 = vmatpush.bf16.msra.mxu0 %v1176
    %1368 = vmatmul.bf16.gmra.mxu0 %v915
    %v1369 = vpop.f32.mrf.mxu0
    %v1370 = vadd.f32 %v1305, %v1369
    %v1371 = vpop.f32.mrf.mxu0
    %1372 = vdwg.mxu0
    %1373 = vmatpush.bf16.msra.mxu0 %v1206
    %1374 = vmatpush.bf16.msra.mxu0 %v1204
    %1375 = vmatpush.bf16.msra.mxu0 %v1202
    %1376 = vmatpush.bf16.msra.mxu0 %v1200
    %1377 = vmatpush.bf16.msra.mxu0 %v1198
    %1378 = vmatpush.bf16.msra.mxu0 %v1196
    %1379 = vmatpush.bf16.msra.mxu0 %v1194
    %1380 = vmatpush.bf16.msra.mxu0 %v1192
    %1381 = vmatmul.bf16.gmra.mxu0 %v916
    %v1382 = vpop.f32.mrf.mxu0
    %v1383 = vadd.f32 %v1370, %v1382
    %v1384 = vpop.f32.mrf.mxu0
    %1385 = vdwg.mxu0
    %1386 = vmatpush.bf16.msra.mxu0 %v1222
    %1387 = vmatpush.bf16.msra.mxu0 %v1220
    %1388 = vmatpush.bf16.msra.mxu0 %v1218
    %1389 = vmatpush.bf16.msra.mxu0 %v1216
    %1390 = vmatpush.bf16.msra.mxu0 %v1214
    %1391 = vmatpush.bf16.msra.mxu0 %v1212
    %1392 = vmatpush.bf16.msra.mxu0 %v1210
    %1393 = vmatpush.bf16.msra.mxu0 %v1208
    %1394 = vmatmul.bf16.gmra.mxu0 %v917
    %v1395 = vpop.f32.mrf.mxu0
    %v1396 = vadd.f32 %v1383, %v1395
    %v1397 = vpop.f32.mrf.mxu0
    %1398 = vdwg.mxu0
    %1399 = vmatpush.bf16.msra.mxu0 %v1238
    %1400 = vmatpush.bf16.msra.mxu0 %v1236
    %1401 = vmatpush.bf16.msra.mxu0 %v1234
    %1402 = vmatpush.bf16.msra.mxu0 %v1232
    %1403 = vmatpush.bf16.msra.mxu0 %v1230
    %1404 = vmatpush.bf16.msra.mxu0 %v1228
    %1405 = vmatpush.bf16.msra.mxu0 %v1226
    %1406 = vmatpush.bf16.msra.mxu0 %v1224
    %1407 = vmatmul.bf16.gmra.mxu0 %v918
    %v1408 = vpop.f32.mrf.mxu0
    %v1409 = vadd.f32 %v1396, %v1408
    %v1410 = vpop.f32.mrf.mxu0
    %1411 = vdwg.mxu0
    %v1412 = vmax.f32 %v1357, 0.0
    %v1413 = vmax.f32 %v1409, 0.0
    %v1414 = vpack.c.bf16 %v1412, %v1412
    %v1415 = vpack.c.bf16 %v1413, %v1413
    %v1416 = vld [vmem:[#allocation11] sm:$0xff]
    %v1417 = vld [vmem:[#allocation11 + $0x8] sm:$0xff]
    %v1418 = vld [vmem:[#allocation11 + $0x10] sm:$0xff]
    %v1419 = vld [vmem:[#allocation11 + $0x18] sm:$0xff]
    %v1420 = vld [vmem:[#allocation11 + $0x20] sm:$0xff]
    %v1421 = vld [vmem:[#allocation11 + $0x28] sm:$0xff]
    %v1422 = vld [vmem:[#allocation11 + $0x30] sm:$0xff]
    %v1423 = vld [vmem:[#allocation11 + $0x38] sm:$0xff]
    %v1424 = vld [vmem:[#allocation11 + $0x40] sm:$0xff]
    %v1425 = vld [vmem:[#allocation11 + $0x48] sm:$0xff]
    %v1426 = vld [vmem:[#allocation11 + $0x50] sm:$0xff]
    %v1427 = vld [vmem:[#allocation11 + $0x58] sm:$0xff]
    %v1428 = vld [vmem:[#allocation11 + $0x60] sm:$0xff]
    %v1429 = vld [vmem:[#allocation11 + $0x68] sm:$0xff]
    %v1430 = vld [vmem:[#allocation11 + $0x70] sm:$0xff]
    %v1431 = vld [vmem:[#allocation11 + $0x78] sm:$0xff]
    %v1432 = vld [vmem:[#allocation11 + $0x80] sm:$0xff]
    %v1433 = vld [vmem:[#allocation11 + $0x88] sm:$0xff]
    %v1434 = vld [vmem:[#allocation11 + $0x90] sm:$0xff]
    %v1435 = vld [vmem:[#allocation11 + $0x98] sm:$0xff]
    %v1436 = vld [vmem:[#allocation11 + $0xa0] sm:$0xff]
    %v1437 = vld [vmem:[#allocation11 + $0xa8] sm:$0xff]
    %v1438 = vld [vmem:[#allocation11 + $0xb0] sm:$0xff]
    %v1439 = vld [vmem:[#allocation11 + $0xb8] sm:$0xff]
    %v1440 = vld [vmem:[#allocation11 + $0xc0] sm:$0xff]
    %v1441 = vld [vmem:[#allocation11 + $0xc8] sm:$0xff]
    %v1442 = vld [vmem:[#allocation11 + $0xd0] sm:$0xff]
    %v1443 = vld [vmem:[#allocation11 + $0xd8] sm:$0xff]
    %v1444 = vld [vmem:[#allocation11 + $0xe0] sm:$0xff]
    %v1445 = vld [vmem:[#allocation11 + $0xe8] sm:$0xff]
    %v1446 = vld [vmem:[#allocation11 + $0xf0] sm:$0xff]
    %v1447 = vld [vmem:[#allocation11 + $0xf8] sm:$0xff]
    %v1480 = vunpack.c.l.b16 %v1416
    %v1481 = vunpack.c.h.b16 %v1416
    %v1482 = vunpack.c.l.b16 %v1417
    %v1483 = vunpack.c.h.b16 %v1417
    %v1484 = vunpack.c.l.b16 %v1418
    %v1485 = vunpack.c.h.b16 %v1418
    %v1486 = vunpack.c.l.b16 %v1419
    %v1487 = vunpack.c.h.b16 %v1419
    %v1488 = vunpack.c.l.b16 %v1420
    %v1489 = vunpack.c.h.b16 %v1420
    %v1490 = vunpack.c.l.b16 %v1421
    %v1491 = vunpack.c.h.b16 %v1421
    %v1492 = vunpack.c.l.b16 %v1422
    %v1493 = vunpack.c.h.b16 %v1422
    %v1494 = vunpack.c.l.b16 %v1423
    %v1495 = vunpack.c.h.b16 %v1423
    %v1496 = vunpack.c.l.b16 %v1424
    %v1497 = vunpack.c.h.b16 %v1424
    %v1498 = vunpack.c.l.b16 %v1425
    %v1499 = vunpack.c.h.b16 %v1425
    %v1500 = vunpack.c.l.b16 %v1426
    %v1501 = vunpack.c.h.b16 %v1426
    %v1502 = vunpack.c.l.b16 %v1427
    %v1503 = vunpack.c.h.b16 %v1427
    %v1504 = vunpack.c.l.b16 %v1428
    %v1505 = vunpack.c.h.b16 %v1428
    %v1506 = vunpack.c.l.b16 %v1429
    %v1507 = vunpack.c.h.b16 %v1429
    %v1508 = vunpack.c.l.b16 %v1430
    %v1509 = vunpack.c.h.b16 %v1430
    %v1510 = vunpack.c.l.b16 %v1431
    %v1511 = vunpack.c.h.b16 %v1431
    %v1512 = vunpack.c.l.b16 %v1432
    %v1513 = vunpack.c.h.b16 %v1432
    %v1514 = vunpack.c.l.b16 %v1433
    %v1515 = vunpack.c.h.b16 %v1433
    %v1516 = vunpack.c.l.b16 %v1434
    %v1517 = vunpack.c.h.b16 %v1434
    %v1518 = vunpack.c.l.b16 %v1435
    %v1519 = vunpack.c.h.b16 %v1435
    %v1520 = vunpack.c.l.b16 %v1436
    %v1521 = vunpack.c.h.b16 %v1436
    %v1522 = vunpack.c.l.b16 %v1437
    %v1523 = vunpack.c.h.b16 %v1437
    %v1524 = vunpack.c.l.b16 %v1438
    %v1525 = vunpack.c.h.b16 %v1438
    %v1526 = vunpack.c.l.b16 %v1439
    %v1527 = vunpack.c.h.b16 %v1439
    %v1528 = vunpack.c.l.b16 %v1440
    %v1529 = vunpack.c.h.b16 %v1440
    %v1530 = vunpack.c.l.b16 %v1441
    %v1531 = vunpack.c.h.b16 %v1441
    %v1532 = vunpack.c.l.b16 %v1442
    %v1533 = vunpack.c.h.b16 %v1442
    %v1534 = vunpack.c.l.b16 %v1443
    %v1535 = vunpack.c.h.b16 %v1443
    %v1536 = vunpack.c.l.b16 %v1444
    %v1537 = vunpack.c.h.b16 %v1444
    %v1538 = vunpack.c.l.b16 %v1445
    %v1539 = vunpack.c.h.b16 %v1445
    %v1540 = vunpack.c.l.b16 %v1446
    %v1541 = vunpack.c.h.b16 %v1446
    %v1542 = vunpack.c.l.b16 %v1447
    %v1543 = vunpack.c.h.b16 %v1447
    %v1544 = vpack.c.b16 %v1482, %v1480
    %v1545 = vpack.c.b16 %v1483, %v1481
    %v1546 = vpack.c.b16 %v1486, %v1484
    %v1547 = vpack.c.b16 %v1487, %v1485
    %v1548 = vpack.c.b16 %v1490, %v1488
    %v1549 = vpack.c.b16 %v1491, %v1489
    %v1550 = vpack.c.b16 %v1494, %v1492
    %v1551 = vpack.c.b16 %v1495, %v1493
    %v1552 = vpack.c.b16 %v1498, %v1496
    %v1553 = vpack.c.b16 %v1499, %v1497
    %v1554 = vpack.c.b16 %v1502, %v1500
    %v1555 = vpack.c.b16 %v1503, %v1501
    %v1556 = vpack.c.b16 %v1506, %v1504
    %v1557 = vpack.c.b16 %v1507, %v1505
    %v1558 = vpack.c.b16 %v1510, %v1508
    %v1559 = vpack.c.b16 %v1511, %v1509
    %v1560 = vpack.c.b16 %v1514, %v1512
    %v1561 = vpack.c.b16 %v1515, %v1513
    %v1562 = vpack.c.b16 %v1518, %v1516
    %v1563 = vpack.c.b16 %v1519, %v1517
    %v1564 = vpack.c.b16 %v1522, %v1520
    %v1565 = vpack.c.b16 %v1523, %v1521
    %v1566 = vpack.c.b16 %v1526, %v1524
    %v1567 = vpack.c.b16 %v1527, %v1525
    %v1568 = vpack.c.b16 %v1530, %v1528
    %v1569 = vpack.c.b16 %v1531, %v1529
    %v1570 = vpack.c.b16 %v1534, %v1532
    %v1571 = vpack.c.b16 %v1535, %v1533
    %v1572 = vpack.c.b16 %v1538, %v1536
    %v1573 = vpack.c.b16 %v1539, %v1537
    %v1574 = vpack.c.b16 %v1542, %v1540
    %v1575 = vpack.c.b16 %v1543, %v1541
    %v1609 = vperm.slane %v218, 0
    %v1610 = vperm.slane %v218, 1
    %1613 = vmatpush.bf16.msra.mxu0 %v1558
    %1614 = vmatpush.bf16.msra.mxu0 %v1556
    %1615 = vmatpush.bf16.msra.mxu0 %v1554
    %1616 = vmatpush.bf16.msra.mxu0 %v1552
    %1617 = vmatpush.bf16.msra.mxu0 %v1550
    %1618 = vmatpush.bf16.msra.mxu0 %v1548
    %1619 = vmatpush.bf16.msra.mxu0 %v1546
    %1620 = vmatpush.bf16.msra.mxu0 %v1544
    %1621 = vmatmul.bf16.gmra.mxu0 %v1414
    %v1622 = vpop.f32.mrf.mxu0
    %v1623 = vadd.f32 %v1609, %v1622
    %v1624 = vpop.f32.mrf.mxu0
    %1625 = vdwg.mxu0
    %1626 = vmatpush.bf16.msra.mxu0 %v1574
    %1627 = vmatpush.bf16.msra.mxu0 %v1572
    %1628 = vmatpush.bf16.msra.mxu0 %v1570
    %1629 = vmatpush.bf16.msra.mxu0 %v1568
    %1630 = vmatpush.bf16.msra.mxu0 %v1566
    %1631 = vmatpush.bf16.msra.mxu0 %v1564
    %1632 = vmatpush.bf16.msra.mxu0 %v1562
    %1633 = vmatpush.bf16.msra.mxu0 %v1560
    %1634 = vmatmul.bf16.gmra.mxu0 %v1415
    %v1635 = vpop.f32.mrf.mxu0
    %v1636 = vadd.f32 %v1623, %v1635
    %v1637 = vpop.f32.mrf.mxu0
    %1638 = vdwg.mxu0
    %1639 = vmatpush.bf16.msra.mxu0 %v1559
    %1640 = vmatpush.bf16.msra.mxu0 %v1557
    %1641 = vmatpush.bf16.msra.mxu0 %v1555
    %1642 = vmatpush.bf16.msra.mxu0 %v1553
    %1643 = vmatpush.bf16.msra.mxu0 %v1551
    %1644 = vmatpush.bf16.msra.mxu0 %v1549
    %1645 = vmatpush.bf16.msra.mxu0 %v1547
    %1646 = vmatpush.bf16.msra.mxu0 %v1545
    %1647 = vmatmul.bf16.gmra.mxu0 %v1414
    %v1648 = vpop.f32.mrf.mxu0
    %v1649 = vadd.f32 %v1610, %v1648
    %v1650 = vpop.f32.mrf.mxu0
    %1651 = vdwg.mxu0
    %1652 = vmatpush.bf16.msra.mxu0 %v1575
    %1653 = vmatpush.bf16.msra.mxu0 %v1573
    %1654 = vmatpush.bf16.msra.mxu0 %v1571
    %1655 = vmatpush.bf16.msra.mxu0 %v1569
    %1656 = vmatpush.bf16.msra.mxu0 %v1567
    %1657 = vmatpush.bf16.msra.mxu0 %v1565
    %1658 = vmatpush.bf16.msra.mxu0 %v1563
    %1659 = vmatpush.bf16.msra.mxu0 %v1561
    %1660 = vmatmul.bf16.gmra.mxu0 %v1415
    %v1661 = vpop.f32.mrf.mxu0
    %v1662 = vadd.f32 %v1649, %v1661
    %v1663 = vpop.f32.mrf.mxu0
    %1664 = vdwg.mxu0
    %v1665 = vmax.f32 %v1636, 0.0
    %v1666 = vmax.f32 %v1662, 0.0
    %v1667 = vld [vmem:[#allocation12] sm:$0xf]
    %v1668 = vld [vmem:[#allocation12 + $0x4] sm:$0xf]
    %v1669 = vld [vmem:[#allocation12 + $0x8] sm:$0xf]
    %v1670 = vld [vmem:[#allocation12 + $0xc] sm:$0xf]
    %v1671 = vld [vmem:[#allocation12 + $0x10] sm:$0xf]
    %v1672 = vld [vmem:[#allocation12 + $0x14] sm:$0xf]
    %v1673 = vld [vmem:[#allocation12 + $0x18] sm:$0xf]
    %v1674 = vld [vmem:[#allocation12 + $0x1c] sm:$0xf]
    %v1675 = vld [vmem:[#allocation12 + $0x20] sm:$0xf]
    %v1676 = vld [vmem:[#allocation12 + $0x24] sm:$0xf]
    %v1677 = vld [vmem:[#allocation12 + $0x28] sm:$0xf]
    %v1678 = vld [vmem:[#allocation12 + $0x2c] sm:$0xf]
    %v1679 = vld [vmem:[#allocation12 + $0x30] sm:$0xf]
    %v1680 = vld [vmem:[#allocation12 + $0x34] sm:$0xf]
    %v1681 = vld [vmem:[#allocation12 + $0x38] sm:$0xf]
    %v1682 = vld [vmem:[#allocation12 + $0x3c] sm:$0xf]
    %v1683 = vld [vmem:[#allocation12 + $0x40] sm:$0xf]
    %v1684 = vld [vmem:[#allocation12 + $0x44] sm:$0xf]
    %v1685 = vld [vmem:[#allocation12 + $0x48] sm:$0xf]
    %v1686 = vld [vmem:[#allocation12 + $0x4c] sm:$0xf]
    %v1687 = vld [vmem:[#allocation12 + $0x50] sm:$0xf]
    %v1688 = vld [vmem:[#allocation12 + $0x54] sm:$0xf]
    %v1689 = vld [vmem:[#allocation12 + $0x58] sm:$0xf]
    %v1690 = vld [vmem:[#allocation12 + $0x5c] sm:$0xf]
    %v1691 = vld [vmem:[#allocation12 + $0x60] sm:$0xf]
    %v1692 = vld [vmem:[#allocation12 + $0x64] sm:$0xf]
    %v1693 = vld [vmem:[#allocation12 + $0x68] sm:$0xf]
    %v1694 = vld [vmem:[#allocation12 + $0x6c] sm:$0xf]
    %v1695 = vld [vmem:[#allocation12 + $0x70] sm:$0xf]
    %v1696 = vld [vmem:[#allocation12 + $0x74] sm:$0xf]
    %v1697 = vld [vmem:[#allocation12 + $0x78] sm:$0xf]
    %v1698 = vld [vmem:[#allocation12 + $0x7c] sm:$0xf]
    %v1731 = vunpack.c.l.b16 %v1667
    %v1732 = vunpack.c.l.b16 %v1668
    %v1733 = vunpack.c.l.b16 %v1669
    %v1734 = vunpack.c.l.b16 %v1670
    %v1735 = vunpack.c.l.b16 %v1671
    %v1736 = vunpack.c.l.b16 %v1672
    %v1737 = vunpack.c.l.b16 %v1673
    %v1738 = vunpack.c.l.b16 %v1674
    %v1739 = vunpack.c.l.b16 %v1675
    %v1740 = vunpack.c.l.b16 %v1676
    %v1741 = vunpack.c.l.b16 %v1677
    %v1742 = vunpack.c.l.b16 %v1678
    %v1743 = vunpack.c.l.b16 %v1679
    %v1744 = vunpack.c.l.b16 %v1680
    %v1745 = vunpack.c.l.b16 %v1681
    %v1746 = vunpack.c.l.b16 %v1682
    %v1747 = vunpack.c.l.b16 %v1683
    %v1748 = vunpack.c.l.b16 %v1684
    %v1749 = vunpack.c.l.b16 %v1685
    %v1750 = vunpack.c.l.b16 %v1686
    %v1751 = vunpack.c.l.b16 %v1687
    %v1752 = vunpack.c.l.b16 %v1688
    %v1753 = vunpack.c.l.b16 %v1689
    %v1754 = vunpack.c.l.b16 %v1690
    %v1755 = vunpack.c.l.b16 %v1691
    %v1756 = vunpack.c.l.b16 %v1692
    %v1757 = vunpack.c.l.b16 %v1693
    %v1758 = vunpack.c.l.b16 %v1694
    %v1759 = vunpack.c.l.b16 %v1695
    %v1760 = vunpack.c.l.b16 %v1696
    %v1761 = vunpack.c.l.b16 %v1697
    %v1762 = vunpack.c.l.b16 %v1698
    %v1763 = vpack.c.b16 %v1732, %v1731
    %v1764 = vpack.c.b16 %v1734, %v1733
    %v1765 = vpack.c.b16 %v1736, %v1735
    %v1766 = vpack.c.b16 %v1738, %v1737
    %v1767 = vpack.c.b16 %v1740, %v1739
    %v1768 = vpack.c.b16 %v1742, %v1741
    %v1769 = vpack.c.b16 %v1744, %v1743
    %v1770 = vpack.c.b16 %v1746, %v1745
    %v1771 = vpack.c.b16 %v1748, %v1747
    %v1772 = vpack.c.b16 %v1750, %v1749
    %v1773 = vpack.c.b16 %v1752, %v1751
    %v1774 = vpack.c.b16 %v1754, %v1753
    %v1775 = vpack.c.b16 %v1756, %v1755
    %v1776 = vpack.c.b16 %v1758, %v1757
    %v1777 = vpack.c.b16 %v1760, %v1759
    %v1778 = vpack.c.b16 %v1762, %v1761
    %1795 = vmatpush.bf16.msra.mxu0 %v1770
    %1796 = vmatpush.bf16.msra.mxu0 %v1769
    %1797 = vmatpush.bf16.msra.mxu0 %v1768
    %1798 = vmatpush.bf16.msra.mxu0 %v1767
    %1799 = vmatpush.bf16.msra.mxu0 %v1766
    %1800 = vmatpush.bf16.msra.mxu0 %v1765
    %1801 = vmatpush.bf16.msra.mxu0 %v1764
    %1802 = vmatpush.bf16.msra.mxu0 %v1763
    %1803 = vmatmul.bf16.gmra.mxu0 %v1414
    %v1804 = vpop.f32.mrf.mxu0
    %v1805 = vadd.f32 %v219, %v1804
    %v1806 = vpop.f32.mrf.mxu0
    %1807 = vdwg.mxu0
    %1808 = vmatpush.bf16.msra.mxu0 %v1778
    %1809 = vmatpush.bf16.msra.mxu0 %v1777
    %1810 = vmatpush.bf16.msra.mxu0 %v1776
    %1811 = vmatpush.bf16.msra.mxu0 %v1775
    %1812 = vmatpush.bf16.msra.mxu0 %v1774
    %1813 = vmatpush.bf16.msra.mxu0 %v1773
    %1814 = vmatpush.bf16.msra.mxu0 %v1772
    %1815 = vmatpush.bf16.msra.mxu0 %v1771
    %1816 = vmatmul.bf16.gmra.mxu0 %v1415
    %v1817 = vpop.f32.mrf.mxu0
    %v1818 = vadd.f32 %v1805, %v1817
    %v1819 = vpop.f32.mrf.mxu0
    %1820 = vdwg.mxu0
    %v1821 = vmax.f32 %v1818, 0.0
    %v1822 = vpack.c.bf16 %v1665, %v1665
    %v1823 = vpack.c.bf16 %v1666, %v1666
    %v1824 = vpack.c.bf16 %v1821, %v1821
    %v1825 = vld [vmem:[#allocation14] sm:$0xf]
    %v1826 = vld [vmem:[#allocation14 + $0x4] sm:$0xf]
    %v1827 = vld [vmem:[#allocation14 + $0x8] sm:$0xf]
    %v1828 = vld [vmem:[#allocation14 + $0xc] sm:$0xf]
    %v1829 = vld [vmem:[#allocation14 + $0x10] sm:$0xf]
    %v1830 = vld [vmem:[#allocation14 + $0x14] sm:$0xf]
    %v1831 = vld [vmem:[#allocation14 + $0x18] sm:$0xf]
    %v1832 = vld [vmem:[#allocation14 + $0x1c] sm:$0xf]
    %v1833 = vld [vmem:[#allocation14 + $0x20] sm:$0xf]
    %v1834 = vld [vmem:[#allocation14 + $0x24] sm:$0xf]
    %v1835 = vld [vmem:[#allocation14 + $0x28] sm:$0xf]
    %v1836 = vld [vmem:[#allocation14 + $0x2c] sm:$0xf]
    %v1837 = vld [vmem:[#allocation14 + $0x30] sm:$0xf]
    %v1838 = vld [vmem:[#allocation14 + $0x34] sm:$0xf]
    %v1839 = vld [vmem:[#allocation14 + $0x38] sm:$0xf]
    %v1840 = vld [vmem:[#allocation14 + $0x3c] sm:$0xf]
    %v1841 = vld [vmem:[#allocation14 + $0x40] sm:$0xf]
    %v1842 = vld [vmem:[#allocation14 + $0x44] sm:$0xf]
    %v1843 = vld [vmem:[#allocation14 + $0x48] sm:$0xf]
    %v1844 = vld [vmem:[#allocation14 + $0x4c] sm:$0xf]
    %v1845 = vld [vmem:[#allocation14 + $0x50] sm:$0xf]
    %v1846 = vld [vmem:[#allocation14 + $0x54] sm:$0xf]
    %v1847 = vld [vmem:[#allocation14 + $0x58] sm:$0xf]
    %v1848 = vld [vmem:[#allocation14 + $0x5c] sm:$0xf]
    %v1849 = vld [vmem:[#allocation14 + $0x60] sm:$0xf]
    %v1850 = vld [vmem:[#allocation14 + $0x64] sm:$0xf]
    %v1851 = vld [vmem:[#allocation14 + $0x68] sm:$0xf]
    %v1852 = vld [vmem:[#allocation14 + $0x6c] sm:$0xf]
    %v1853 = vld [vmem:[#allocation14 + $0x70] sm:$0xf]
    %v1854 = vld [vmem:[#allocation14 + $0x74] sm:$0xf]
    %v1855 = vld [vmem:[#allocation14 + $0x78] sm:$0xf]
    %v1856 = vld [vmem:[#allocation14 + $0x7c] sm:$0xf]
    %v1857 = vld [vmem:[#allocation14 + $0x80] sm:$0xf]
    %v1858 = vld [vmem:[#allocation14 + $0x84] sm:$0xf]
    %v1859 = vld [vmem:[#allocation14 + $0x88] sm:$0xf]
    %v1860 = vld [vmem:[#allocation14 + $0x8c] sm:$0xf]
    %v1861 = vld [vmem:[#allocation14 + $0x90] sm:$0xf]
    %v1862 = vld [vmem:[#allocation14 + $0x94] sm:$0xf]
    %v1863 = vld [vmem:[#allocation14 + $0x98] sm:$0xf]
    %v1864 = vld [vmem:[#allocation14 + $0x9c] sm:$0xf]
    %v1865 = vld [vmem:[#allocation14 + $0xa0] sm:$0xf]
    %v1866 = vld [vmem:[#allocation14 + $0xa4] sm:$0xf]
    %v1867 = vld [vmem:[#allocation14 + $0xa8] sm:$0xf]
    %v1868 = vld [vmem:[#allocation14 + $0xac] sm:$0xf]
    %v1869 = vld [vmem:[#allocation14 + $0xb0] sm:$0xf]
    %v1870 = vld [vmem:[#allocation14 + $0xb4] sm:$0xf]
    %v1871 = vld [vmem:[#allocation14 + $0xb8] sm:$0xf]
    %v1872 = vld [vmem:[#allocation14 + $0xbc] sm:$0xf]
    %v1921 = vunpack.c.l.b16 %v1825
    %v1922 = vunpack.c.l.b16 %v1826
    %v1923 = vunpack.c.l.b16 %v1827
    %v1924 = vunpack.c.l.b16 %v1828
    %v1925 = vunpack.c.l.b16 %v1829
    %v1926 = vunpack.c.l.b16 %v1830
    %v1927 = vunpack.c.l.b16 %v1831
    %v1928 = vunpack.c.l.b16 %v1832
    %v1929 = vunpack.c.l.b16 %v1833
    %v1930 = vunpack.c.l.b16 %v1834
    %v1931 = vunpack.c.l.b16 %v1835
    %v1932 = vunpack.c.l.b16 %v1836
    %v1933 = vunpack.c.l.b16 %v1837
    %v1934 = vunpack.c.l.b16 %v1838
    %v1935 = vunpack.c.l.b16 %v1839
    %v1936 = vunpack.c.l.b16 %v1840
    %v1937 = vunpack.c.l.b16 %v1841
    %v1938 = vunpack.c.l.b16 %v1842
    %v1939 = vunpack.c.l.b16 %v1843
    %v1940 = vunpack.c.l.b16 %v1844
    %v1941 = vunpack.c.l.b16 %v1845
    %v1942 = vunpack.c.l.b16 %v1846
    %v1943 = vunpack.c.l.b16 %v1847
    %v1944 = vunpack.c.l.b16 %v1848
    %v1945 = vunpack.c.l.b16 %v1849
    %v1946 = vunpack.c.l.b16 %v1850
    %v1947 = vunpack.c.l.b16 %v1851
    %v1948 = vunpack.c.l.b16 %v1852
    %v1949 = vunpack.c.l.b16 %v1853
    %v1950 = vunpack.c.l.b16 %v1854
    %v1951 = vunpack.c.l.b16 %v1855
    %v1952 = vunpack.c.l.b16 %v1856
    %v1953 = vunpack.c.l.b16 %v1857
    %v1954 = vunpack.c.l.b16 %v1858
    %v1955 = vunpack.c.l.b16 %v1859
    %v1956 = vunpack.c.l.b16 %v1860
    %v1957 = vunpack.c.l.b16 %v1861
    %v1958 = vunpack.c.l.b16 %v1862
    %v1959 = vunpack.c.l.b16 %v1863
    %v1960 = vunpack.c.l.b16 %v1864
    %v1961 = vunpack.c.l.b16 %v1865
    %v1962 = vunpack.c.l.b16 %v1866
    %v1963 = vunpack.c.l.b16 %v1867
    %v1964 = vunpack.c.l.b16 %v1868
    %v1965 = vunpack.c.l.b16 %v1869
    %v1966 = vunpack.c.l.b16 %v1870
    %v1967 = vunpack.c.l.b16 %v1871
    %v1968 = vunpack.c.l.b16 %v1872
    %v1969 = vpack.c.b16 %v1922, %v1921
    %v1970 = vpack.c.b16 %v1924, %v1923
    %v1971 = vpack.c.b16 %v1926, %v1925
    %v1972 = vpack.c.b16 %v1928, %v1927
    %v1973 = vpack.c.b16 %v1930, %v1929
    %v1974 = vpack.c.b16 %v1932, %v1931
    %v1975 = vpack.c.b16 %v1934, %v1933
    %v1976 = vpack.c.b16 %v1936, %v1935
    %v1977 = vpack.c.b16 %v1938, %v1937
    %v1978 = vpack.c.b16 %v1940, %v1939
    %v1979 = vpack.c.b16 %v1942, %v1941
    %v1980 = vpack.c.b16 %v1944, %v1943
    %v1981 = vpack.c.b16 %v1946, %v1945
    %v1982 = vpack.c.b16 %v1948, %v1947
    %v1983 = vpack.c.b16 %v1950, %v1949
    %v1984 = vpack.c.b16 %v1952, %v1951
    %v1985 = vpack.c.b16 %v1954, %v1953
    %v1986 = vpack.c.b16 %v1956, %v1955
    %v1987 = vpack.c.b16 %v1958, %v1957
    %v1988 = vpack.c.b16 %v1960, %v1959
    %v1989 = vpack.c.b16 %v1962, %v1961
    %v1990 = vpack.c.b16 %v1964, %v1963
    %v1991 = vpack.c.b16 %v1966, %v1965
    %v1992 = vpack.c.b16 %v1968, %v1967
    %2017 = vmatpush.bf16.msra.mxu0 %v1976
    %2018 = vmatpush.bf16.msra.mxu0 %v1975
    %2019 = vmatpush.bf16.msra.mxu0 %v1974
    %2020 = vmatpush.bf16.msra.mxu0 %v1973
    %2021 = vmatpush.bf16.msra.mxu0 %v1972
    %2022 = vmatpush.bf16.msra.mxu0 %v1971
    %2023 = vmatpush.bf16.msra.mxu0 %v1970
    %2024 = vmatpush.bf16.msra.mxu0 %v1969
    %2025 = vmatmul.bf16.gmra.mxu0 %v1822
    %v2026 = vpop.f32.mrf.mxu0
    %v2027 = vadd.f32 %v220, %v2026
    %v2028 = vpop.f32.mrf.mxu0
    %2029 = vdwg.mxu0
    %2030 = vmatpush.bf16.msra.mxu0 %v1984
    %2031 = vmatpush.bf16.msra.mxu0 %v1983
    %2032 = vmatpush.bf16.msra.mxu0 %v1982
    %2033 = vmatpush.bf16.msra.mxu0 %v1981
    %2034 = vmatpush.bf16.msra.mxu0 %v1980
    %2035 = vmatpush.bf16.msra.mxu0 %v1979
    %2036 = vmatpush.bf16.msra.mxu0 %v1978
    %2037 = vmatpush.bf16.msra.mxu0 %v1977
    %2038 = vmatmul.bf16.gmra.mxu0 %v1823
    %v2039 = vpop.f32.mrf.mxu0
    %v2040 = vadd.f32 %v2027, %v2039
    %v2041 = vpop.f32.mrf.mxu0
    %2042 = vdwg.mxu0
    %2043 = vmatpush.bf16.msra.mxu0 %v1992
    %2044 = vmatpush.bf16.msra.mxu0 %v1991
    %2045 = vmatpush.bf16.msra.mxu0 %v1990
    %2046 = vmatpush.bf16.msra.mxu0 %v1989
    %2047 = vmatpush.bf16.msra.mxu0 %v1988
    %2048 = vmatpush.bf16.msra.mxu0 %v1987
    %2049 = vmatpush.bf16.msra.mxu0 %v1986
    %2050 = vmatpush.bf16.msra.mxu0 %v1985
    %2051 = vmatmul.bf16.gmra.mxu0 %v1824
    %v2052 = vpop.f32.mrf.mxu0
    %v2053 = vadd.f32 %v2040, %v2052
    %v2054 = vpop.f32.mrf.mxu0
    %2055 = vdwg.mxu0
    %v2056 = vlaneseq
    %v2057 = vand.u32 %v2056, 127
    %v2058 = vcvt.s32.f32 %v2057
    %vm2059 = vcmp.lt.s32.totalorder %v2057, 6
    %v2060 = vsel %vm2059, %v2053, -1e+30
    %vm2061 = vcmask 1040384
    %v2062 = vsel %vm2061, %v2060, -inf
    %2063 = vmax.xlane.f32.xlu0 %v2062
    %v2064 = vpop.xlane.xlu0 %2063
    %vm2065 = vcmp.eq.f32.partialorder %v2060, %v2064
    %v2066 = vsel %vm2065, %v2058, 128.0
    %v2067 = vsel %vm2061, %v2066, inf
    %2068 = vmin.xlane.f32.xlu0 %v2067
    %v2069 = vpop.xlane.xlu0 %2068
    %vm2070 = vcmp.eq.f32.partialorder %v2058, %v2069
    %v2071 = vsel %vm2070, 1, 0
    %v2072 = vcvt.s32.f32 %v2071
    %2073 = vst [vmem:[%s16] sm:$0x1] %v2072
    %v2074 = vxor.u32 %v2053, 2147483648
    %v2075 = vmul.f32 %v2074, 1.442695
    %v2076 = vpow.pop %v2075
    %v2077 = vadd.f32 %v2076, 1.0
    %v2078 = vrcp.pop %v2077
    %v2079 = vmul.f32 %v2077, %v2078
    %v2080 = vsub.f32 1.0, %v2079
    %v2081 = vmul.f32 %v2078, %v2080
    %v2082 = vadd.f32 %v2078, %v2081
    %vm2083 = vweird.f32 %v2077
    %vm2084 = vweird.f32 %v2078
    %vm2085 = vmor %vm2083, %vm2084
    %v2086 = vsel %vm2085, %v2078, %v2082
    %v2087 = vand.u32 2147483647, %v2077
    %vm2088 = vcmp.eq.f32.partialorder %v2087, 8.507059e+37
    %v2089 = vand.u32 %v2077, 2147483648
    %v2090 = vor.u32 1.1754944e-38, %v2089
    %v2091 = vsel %vm2088, %v2090, %v2086
    %v2092 = vmul.f32 1.0, %v2091
    %2094 = vset.pattern.permute.xlu0 6
    %2095 = vperm.xlu0 %2094, %v2092
    %v2096 = vpop.permute.xlu0 %2095
    %2098 = vst [vmem:[%s16 + $0x1] sm:$0x1] %v2096
    %v2099 = vld [vmem:[#allocation15] sm:$0xff]
    %v2100 = vld [vmem:[#allocation15 + $0x8] sm:$0xff]
    %v2101 = vld [vmem:[#allocation15 + $0x10] sm:$0xff]
    %v2102 = vld [vmem:[#allocation15 + $0x18] sm:$0xff]
    %v2103 = vld [vmem:[#allocation15 + $0x20] sm:$0xff]
    %v2104 = vld [vmem:[#allocation15 + $0x28] sm:$0xff]
    %v2105 = vld [vmem:[#allocation15 + $0x30] sm:$0xff]
    %v2106 = vld [vmem:[#allocation15 + $0x38] sm:$0xff]
    %v2107 = vld [vmem:[#allocation15 + $0x40] sm:$0xff]
    %v2108 = vld [vmem:[#allocation15 + $0x48] sm:$0xff]
    %v2109 = vld [vmem:[#allocation15 + $0x50] sm:$0xff]
    %v2110 = vld [vmem:[#allocation15 + $0x58] sm:$0xff]
    %v2111 = vld [vmem:[#allocation15 + $0x60] sm:$0xff]
    %v2112 = vld [vmem:[#allocation15 + $0x68] sm:$0xff]
    %v2113 = vld [vmem:[#allocation15 + $0x70] sm:$0xff]
    %v2114 = vld [vmem:[#allocation15 + $0x78] sm:$0xff]
    %v2115 = vld [vmem:[#allocation15 + $0x80] sm:$0xff]
    %v2116 = vld [vmem:[#allocation15 + $0x88] sm:$0xff]
    %v2117 = vld [vmem:[#allocation15 + $0x90] sm:$0xff]
    %v2118 = vld [vmem:[#allocation15 + $0x98] sm:$0xff]
    %v2119 = vld [vmem:[#allocation15 + $0xa0] sm:$0xff]
    %v2120 = vld [vmem:[#allocation15 + $0xa8] sm:$0xff]
    %v2121 = vld [vmem:[#allocation15 + $0xb0] sm:$0xff]
    %v2122 = vld [vmem:[#allocation15 + $0xb8] sm:$0xff]
    %v2123 = vld [vmem:[#allocation15 + $0xc0] sm:$0xff]
    %v2124 = vld [vmem:[#allocation15 + $0xc8] sm:$0xff]
    %v2125 = vld [vmem:[#allocation15 + $0xd0] sm:$0xff]
    %v2126 = vld [vmem:[#allocation15 + $0xd8] sm:$0xff]
    %v2127 = vld [vmem:[#allocation15 + $0xe0] sm:$0xff]
    %v2128 = vld [vmem:[#allocation15 + $0xe8] sm:$0xff]
    %v2129 = vld [vmem:[#allocation15 + $0xf0] sm:$0xff]
    %v2130 = vld [vmem:[#allocation15 + $0xf8] sm:$0xff]
    %v2163 = vunpack.c.l.b16 %v2099
    %v2164 = vunpack.c.h.b16 %v2099
    %v2165 = vunpack.c.l.b16 %v2100
    %v2166 = vunpack.c.h.b16 %v2100
    %v2167 = vunpack.c.l.b16 %v2101
    %v2168 = vunpack.c.h.b16 %v2101
    %v2169 = vunpack.c.l.b16 %v2102
    %v2170 = vunpack.c.h.b16 %v2102
    %v2171 = vunpack.c.l.b16 %v2103
    %v2172 = vunpack.c.h.b16 %v2103
    %v2173 = vunpack.c.l.b16 %v2104
    %v2174 = vunpack.c.h.b16 %v2104
    %v2175 = vunpack.c.l.b16 %v2105
    %v2176 = vunpack.c.h.b16 %v2105
    %v2177 = vunpack.c.l.b16 %v2106
    %v2178 = vunpack.c.h.b16 %v2106
    %v2179 = vunpack.c.l.b16 %v2107
    %v2180 = vunpack.c.h.b16 %v2107
    %v2181 = vunpack.c.l.b16 %v2108
    %v2182 = vunpack.c.h.b16 %v2108
    %v2183 = vunpack.c.l.b16 %v2109
    %v2184 = vunpack.c.h.b16 %v2109
    %v2185 = vunpack.c.l.b16 %v2110
    %v2186 = vunpack.c.h.b16 %v2110
    %v2187 = vunpack.c.l.b16 %v2111
    %v2188 = vunpack.c.h.b16 %v2111
    %v2189 = vunpack.c.l.b16 %v2112
    %v2190 = vunpack.c.h.b16 %v2112
    %v2191 = vunpack.c.l.b16 %v2113
    %v2192 = vunpack.c.h.b16 %v2113
    %v2193 = vunpack.c.l.b16 %v2114
    %v2194 = vunpack.c.h.b16 %v2114
    %v2195 = vunpack.c.l.b16 %v2115
    %v2196 = vunpack.c.h.b16 %v2115
    %v2197 = vunpack.c.l.b16 %v2116
    %v2198 = vunpack.c.h.b16 %v2116
    %v2199 = vunpack.c.l.b16 %v2117
    %v2200 = vunpack.c.h.b16 %v2117
    %v2201 = vunpack.c.l.b16 %v2118
    %v2202 = vunpack.c.h.b16 %v2118
    %v2203 = vunpack.c.l.b16 %v2119
    %v2204 = vunpack.c.h.b16 %v2119
    %v2205 = vunpack.c.l.b16 %v2120
    %v2206 = vunpack.c.h.b16 %v2120
    %v2207 = vunpack.c.l.b16 %v2121
    %v2208 = vunpack.c.h.b16 %v2121
    %v2209 = vunpack.c.l.b16 %v2122
    %v2210 = vunpack.c.h.b16 %v2122
    %v2211 = vunpack.c.l.b16 %v2123
    %v2212 = vunpack.c.h.b16 %v2123
    %v2213 = vunpack.c.l.b16 %v2124
    %v2214 = vunpack.c.h.b16 %v2124
    %v2215 = vunpack.c.l.b16 %v2125
    %v2216 = vunpack.c.h.b16 %v2125
    %v2217 = vunpack.c.l.b16 %v2126
    %v2218 = vunpack.c.h.b16 %v2126
    %v2219 = vunpack.c.l.b16 %v2127
    %v2220 = vunpack.c.h.b16 %v2127
    %v2221 = vunpack.c.l.b16 %v2128
    %v2222 = vunpack.c.h.b16 %v2128
    %v2223 = vunpack.c.l.b16 %v2129
    %v2224 = vunpack.c.h.b16 %v2129
    %v2225 = vunpack.c.l.b16 %v2130
    %v2226 = vunpack.c.h.b16 %v2130
    %v2227 = vpack.c.b16 %v2165, %v2163
    %v2228 = vpack.c.b16 %v2166, %v2164
    %v2229 = vpack.c.b16 %v2169, %v2167
    %v2230 = vpack.c.b16 %v2170, %v2168
    %v2231 = vpack.c.b16 %v2173, %v2171
    %v2232 = vpack.c.b16 %v2174, %v2172
    %v2233 = vpack.c.b16 %v2177, %v2175
    %v2234 = vpack.c.b16 %v2178, %v2176
    %v2235 = vpack.c.b16 %v2181, %v2179
    %v2236 = vpack.c.b16 %v2182, %v2180
    %v2237 = vpack.c.b16 %v2185, %v2183
    %v2238 = vpack.c.b16 %v2186, %v2184
    %v2239 = vpack.c.b16 %v2189, %v2187
    %v2240 = vpack.c.b16 %v2190, %v2188
    %v2241 = vpack.c.b16 %v2193, %v2191
    %v2242 = vpack.c.b16 %v2194, %v2192
    %v2243 = vpack.c.b16 %v2197, %v2195
    %v2244 = vpack.c.b16 %v2198, %v2196
    %v2245 = vpack.c.b16 %v2201, %v2199
    %v2246 = vpack.c.b16 %v2202, %v2200
    %v2247 = vpack.c.b16 %v2205, %v2203
    %v2248 = vpack.c.b16 %v2206, %v2204
    %v2249 = vpack.c.b16 %v2209, %v2207
    %v2250 = vpack.c.b16 %v2210, %v2208
    %v2251 = vpack.c.b16 %v2213, %v2211
    %v2252 = vpack.c.b16 %v2214, %v2212
    %v2253 = vpack.c.b16 %v2217, %v2215
    %v2254 = vpack.c.b16 %v2218, %v2216
    %v2255 = vpack.c.b16 %v2221, %v2219
    %v2256 = vpack.c.b16 %v2222, %v2220
    %v2257 = vpack.c.b16 %v2225, %v2223
    %v2258 = vpack.c.b16 %v2226, %v2224
    %v2292 = vperm.slane %v221, 0
    %v2293 = vperm.slane %v221, 1
    %2296 = vmatpush.bf16.msra.mxu0 %v2241
    %2297 = vmatpush.bf16.msra.mxu0 %v2239
    %2298 = vmatpush.bf16.msra.mxu0 %v2237
    %2299 = vmatpush.bf16.msra.mxu0 %v2235
    %2300 = vmatpush.bf16.msra.mxu0 %v2233
    %2301 = vmatpush.bf16.msra.mxu0 %v2231
    %2302 = vmatpush.bf16.msra.mxu0 %v2229
    %2303 = vmatpush.bf16.msra.mxu0 %v2227
    %2304 = vmatmul.bf16.gmra.mxu0 %v1414
    %v2305 = vpop.f32.mrf.mxu0
    %v2306 = vadd.f32 %v2292, %v2305
    %v2307 = vpop.f32.mrf.mxu0
    %2308 = vdwg.mxu0
    %2309 = vmatpush.bf16.msra.mxu0 %v2257
    %2310 = vmatpush.bf16.msra.mxu0 %v2255
    %2311 = vmatpush.bf16.msra.mxu0 %v2253
    %2312 = vmatpush.bf16.msra.mxu0 %v2251
    %2313 = vmatpush.bf16.msra.mxu0 %v2249
    %2314 = vmatpush.bf16.msra.mxu0 %v2247
    %2315 = vmatpush.bf16.msra.mxu0 %v2245
    %2316 = vmatpush.bf16.msra.mxu0 %v2243
    %2317 = vmatmul.bf16.gmra.mxu0 %v1415
    %v2318 = vpop.f32.mrf.mxu0
    %v2319 = vadd.f32 %v2306, %v2318
    %v2320 = vpop.f32.mrf.mxu0
    %2321 = vdwg.mxu0
    %2322 = vmatpush.bf16.msra.mxu0 %v2242
    %2323 = vmatpush.bf16.msra.mxu0 %v2240
    %2324 = vmatpush.bf16.msra.mxu0 %v2238
    %2325 = vmatpush.bf16.msra.mxu0 %v2236
    %2326 = vmatpush.bf16.msra.mxu0 %v2234
    %2327 = vmatpush.bf16.msra.mxu0 %v2232
    %2328 = vmatpush.bf16.msra.mxu0 %v2230
    %2329 = vmatpush.bf16.msra.mxu0 %v2228
    %2330 = vmatmul.bf16.gmra.mxu0 %v1414
    %v2331 = vpop.f32.mrf.mxu0
    %v2332 = vadd.f32 %v2293, %v2331
    %v2333 = vpop.f32.mrf.mxu0
    %2334 = vdwg.mxu0
    %2335 = vmatpush.bf16.msra.mxu0 %v2258
    %2336 = vmatpush.bf16.msra.mxu0 %v2256
    %2337 = vmatpush.bf16.msra.mxu0 %v2254
    %2338 = vmatpush.bf16.msra.mxu0 %v2252
    %2339 = vmatpush.bf16.msra.mxu0 %v2250
    %2340 = vmatpush.bf16.msra.mxu0 %v2248
    %2341 = vmatpush.bf16.msra.mxu0 %v2246
    %2342 = vmatpush.bf16.msra.mxu0 %v2244
    %2343 = vmatmul.bf16.gmra.mxu0 %v1415
    %v2344 = vpop.f32.mrf.mxu0
    %v2345 = vadd.f32 %v2332, %v2344
    %v2346 = vpop.f32.mrf.mxu0
    %2347 = vdwg.mxu0
    %v2348 = vld [vmem:[%s2] sm:$0xff]
    %v2349 = vpack.c.bf16 %v2348, %v2348
    %v2350 = vld [vmem:[#allocation17] sm:$0xff]
    %v2351 = vld [vmem:[#allocation17 + $0x8] sm:$0xff]
    %v2352 = vld [vmem:[#allocation17 + $0x10] sm:$0xff]
    %v2353 = vld [vmem:[#allocation17 + $0x18] sm:$0xff]
    %v2354 = vld [vmem:[#allocation17 + $0x20] sm:$0xff]
    %v2355 = vld [vmem:[#allocation17 + $0x28] sm:$0xff]
    %v2356 = vld [vmem:[#allocation17 + $0x30] sm:$0xff]
    %v2357 = vld [vmem:[#allocation17 + $0x38] sm:$0xff]
    %v2358 = vld [vmem:[#allocation17 + $0x40] sm:$0xff]
    %v2359 = vld [vmem:[#allocation17 + $0x48] sm:$0xff]
    %v2360 = vld [vmem:[#allocation17 + $0x50] sm:$0xff]
    %v2361 = vld [vmem:[#allocation17 + $0x58] sm:$0xff]
    %v2362 = vld [vmem:[#allocation17 + $0x60] sm:$0xff]
    %v2363 = vld [vmem:[#allocation17 + $0x68] sm:$0xff]
    %v2364 = vld [vmem:[#allocation17 + $0x70] sm:$0xff]
    %v2365 = vld [vmem:[#allocation17 + $0x78] sm:$0xff]
    %v2366 = vld [vmem:[#allocation17 + $0x80] sm:$0xff]
    %v2367 = vld [vmem:[#allocation17 + $0x88] sm:$0xff]
    %v2368 = vld [vmem:[#allocation17 + $0x90] sm:$0xff]
    %v2369 = vld [vmem:[#allocation17 + $0x98] sm:$0xff]
    %v2370 = vld [vmem:[#allocation17 + $0xa0] sm:$0xff]
    %v2371 = vld [vmem:[#allocation17 + $0xa8] sm:$0xff]
    %v2372 = vld [vmem:[#allocation17 + $0xb0] sm:$0xff]
    %v2373 = vld [vmem:[#allocation17 + $0xb8] sm:$0xff]
    %v2375 = vperm.slane %v222, 0
    %v2376 = vperm.slane %v222, 1
    %v2377 = vperm.slane %v222, 2
    %v2378 = vperm.slane %v222, 3
    %v2379 = vperm.slane %v222, 4
    %v2380 = vperm.slane %v222, 5
    %v2411 = vunpack.c.l.b16 %v2350
    %v2412 = vunpack.c.h.b16 %v2350
    %v2413 = vunpack.c.l.b16 %v2351
    %v2414 = vunpack.c.h.b16 %v2351
    %v2415 = vunpack.c.l.b16 %v2352
    %v2416 = vunpack.c.h.b16 %v2352
    %v2417 = vunpack.c.l.b16 %v2353
    %v2418 = vunpack.c.h.b16 %v2353
    %v2419 = vunpack.c.l.b16 %v2354
    %v2420 = vunpack.c.h.b16 %v2354
    %v2421 = vunpack.c.l.b16 %v2355
    %v2422 = vunpack.c.h.b16 %v2355
    %v2423 = vunpack.c.l.b16 %v2356
    %v2424 = vunpack.c.h.b16 %v2356
    %v2425 = vunpack.c.l.b16 %v2357
    %v2426 = vunpack.c.h.b16 %v2357
    %v2427 = vunpack.c.l.b16 %v2358
    %v2428 = vunpack.c.h.b16 %v2358
    %v2429 = vunpack.c.l.b16 %v2359
    %v2430 = vunpack.c.h.b16 %v2359
    %v2431 = vunpack.c.l.b16 %v2360
    %v2432 = vunpack.c.h.b16 %v2360
    %v2433 = vunpack.c.l.b16 %v2361
    %v2434 = vunpack.c.h.b16 %v2361
    %v2435 = vunpack.c.l.b16 %v2362
    %v2436 = vunpack.c.h.b16 %v2362
    %v2437 = vunpack.c.l.b16 %v2363
    %v2438 = vunpack.c.h.b16 %v2363
    %v2439 = vunpack.c.l.b16 %v2364
    %v2440 = vunpack.c.h.b16 %v2364
    %v2441 = vunpack.c.l.b16 %v2365
    %v2442 = vunpack.c.h.b16 %v2365
    %v2443 = vunpack.c.l.b16 %v2366
    %v2444 = vunpack.c.h.b16 %v2366
    %v2445 = vunpack.c.l.b16 %v2367
    %v2446 = vunpack.c.h.b16 %v2367
    %v2447 = vunpack.c.l.b16 %v2368
    %v2448 = vunpack.c.h.b16 %v2368
    %v2449 = vunpack.c.l.b16 %v2369
    %v2450 = vunpack.c.h.b16 %v2369
    %v2451 = vunpack.c.l.b16 %v2370
    %v2452 = vunpack.c.h.b16 %v2370
    %v2453 = vunpack.c.l.b16 %v2371
    %v2454 = vunpack.c.h.b16 %v2371
    %v2455 = vunpack.c.l.b16 %v2372
    %v2456 = vunpack.c.h.b16 %v2372
    %v2457 = vunpack.c.l.b16 %v2373
    %v2458 = vunpack.c.h.b16 %v2373
    %v2459 = vpack.c.b16 %v2417, %v2411
    %v2460 = vpack.c.b16 %v2418, %v2412
    %v2461 = vpack.c.b16 %v2419, %v2413
    %v2462 = vpack.c.b16 %v2420, %v2414
    %v2463 = vpack.c.b16 %v2421, %v2415
    %v2464 = vpack.c.b16 %v2422, %v2416
    %v2465 = vpack.c.b16 %v2429, %v2423
    %v2466 = vpack.c.b16 %v2430, %v2424
    %v2467 = vpack.c.b16 %v2431, %v2425
    %v2468 = vpack.c.b16 %v2432, %v2426
    %v2469 = vpack.c.b16 %v2433, %v2427
    %v2470 = vpack.c.b16 %v2434, %v2428
    %v2471 = vpack.c.b16 %v2441, %v2435
    %v2472 = vpack.c.b16 %v2442, %v2436
    %v2473 = vpack.c.b16 %v2443, %v2437
    %v2474 = vpack.c.b16 %v2444, %v2438
    %v2475 = vpack.c.b16 %v2445, %v2439
    %v2476 = vpack.c.b16 %v2446, %v2440
    %v2477 = vpack.c.b16 %v2453, %v2447
    %v2478 = vpack.c.b16 %v2454, %v2448
    %v2479 = vpack.c.b16 %v2455, %v2449
    %v2480 = vpack.c.b16 %v2456, %v2450
    %v2481 = vpack.c.b16 %v2457, %v2451
    %v2482 = vpack.c.b16 %v2458, %v2452
    %vm2507 = vcmask 523264
    %v2509 = vsel %vm2507, %v2349, 0
    %2511 = vmatpush.bf16.msra.mxu0 0
    %2512 = vmatpush.bf16.msra.mxu0 0
    %2513 = vmatpush.bf16.msra.mxu0 0
    %2514 = vmatpush.bf16.msra.mxu0 0
    %2515 = vmatpush.bf16.msra.mxu0 %v2477
    %2516 = vmatpush.bf16.msra.mxu0 %v2471
    %2517 = vmatpush.bf16.msra.mxu0 %v2465
    %2518 = vmatpush.bf16.msra.mxu0 %v2459
    %2519 = vmatmul.bf16.gmra.mxu0 %v2509
    %v2520 = vpop.f32.mrf.mxu0
    %v2521 = vadd.f32 %v2375, %v2520
    %v2522 = vpop.f32.mrf.mxu0
    %2523 = vdwg.mxu0
    %2524 = vmatpush.bf16.msra.mxu0 0
    %2525 = vmatpush.bf16.msra.mxu0 0
    %2526 = vmatpush.bf16.msra.mxu0 0
    %2527 = vmatpush.bf16.msra.mxu0 0
    %2528 = vmatpush.bf16.msra.mxu0 %v2478
    %2529 = vmatpush.bf16.msra.mxu0 %v2472
    %2530 = vmatpush.bf16.msra.mxu0 %v2466
    %2531 = vmatpush.bf16.msra.mxu0 %v2460
    %2532 = vmatmul.bf16.gmra.mxu0 %v2509
    %v2533 = vpop.f32.mrf.mxu0
    %v2534 = vadd.f32 %v2376, %v2533
    %v2535 = vpop.f32.mrf.mxu0
    %2536 = vdwg.mxu0
    %2537 = vmatpush.bf16.msra.mxu0 0
    %2538 = vmatpush.bf16.msra.mxu0 0
    %2539 = vmatpush.bf16.msra.mxu0 0
    %2540 = vmatpush.bf16.msra.mxu0 0
    %2541 = vmatpush.bf16.msra.mxu0 %v2479
    %2542 = vmatpush.bf16.msra.mxu0 %v2473
    %2543 = vmatpush.bf16.msra.mxu0 %v2467
    %2544 = vmatpush.bf16.msra.mxu0 %v2461
    %2545 = vmatmul.bf16.gmra.mxu0 %v2509
    %v2546 = vpop.f32.mrf.mxu0
    %v2547 = vadd.f32 %v2377, %v2546
    %v2548 = vpop.f32.mrf.mxu0
    %2549 = vdwg.mxu0
    %2550 = vmatpush.bf16.msra.mxu0 0
    %2551 = vmatpush.bf16.msra.mxu0 0
    %2552 = vmatpush.bf16.msra.mxu0 0
    %2553 = vmatpush.bf16.msra.mxu0 0
    %2554 = vmatpush.bf16.msra.mxu0 %v2480
    %2555 = vmatpush.bf16.msra.mxu0 %v2474
    %2556 = vmatpush.bf16.msra.mxu0 %v2468
    %2557 = vmatpush.bf16.msra.mxu0 %v2462
    %2558 = vmatmul.bf16.gmra.mxu0 %v2509
    %v2559 = vpop.f32.mrf.mxu0
    %v2560 = vadd.f32 %v2378, %v2559
    %v2561 = vpop.f32.mrf.mxu0
    %2562 = vdwg.mxu0
    %2563 = vmatpush.bf16.msra.mxu0 0
    %2564 = vmatpush.bf16.msra.mxu0 0
    %2565 = vmatpush.bf16.msra.mxu0 0
    %2566 = vmatpush.bf16.msra.mxu0 0
    %2567 = vmatpush.bf16.msra.mxu0 %v2481
    %2568 = vmatpush.bf16.msra.mxu0 %v2475
    %2569 = vmatpush.bf16.msra.mxu0 %v2469
    %2570 = vmatpush.bf16.msra.mxu0 %v2463
    %2571 = vmatmul.bf16.gmra.mxu0 %v2509
    %v2572 = vpop.f32.mrf.mxu0
    %v2573 = vadd.f32 %v2379, %v2572
    %v2574 = vpop.f32.mrf.mxu0
    %2575 = vdwg.mxu0
    %2576 = vmatpush.bf16.msra.mxu0 0
    %2577 = vmatpush.bf16.msra.mxu0 0
    %2578 = vmatpush.bf16.msra.mxu0 0
    %2579 = vmatpush.bf16.msra.mxu0 0
    %2580 = vmatpush.bf16.msra.mxu0 %v2482
    %2581 = vmatpush.bf16.msra.mxu0 %v2476
    %2582 = vmatpush.bf16.msra.mxu0 %v2470
    %2583 = vmatpush.bf16.msra.mxu0 %v2464
    %2584 = vmatmul.bf16.gmra.mxu0 %v2509
    %v2585 = vpop.f32.mrf.mxu0
    %v2586 = vadd.f32 %v2380, %v2585
    %v2587 = vpop.f32.mrf.mxu0
    %2588 = vdwg.mxu0
    %2589 = vst [vmem:[#allocation2] sm:$0xff] %v2521
    %2590 = vst [vmem:[#allocation2 + $0x8] sm:$0xff] %v2534
    %2591 = vst [vmem:[#allocation2 + $0x10] sm:$0xff] %v2547
    %2592 = vst [vmem:[#allocation2 + $0x18] sm:$0xff] %v2560
    %2593 = vst [vmem:[#allocation2 + $0x20] sm:$0xff] %v2573
    %2594 = vst [vmem:[#allocation2 + $0x28] sm:$0xff] %v2586
    %v2595 = vld [vmem:[%s13] sm:$0xff]
    %v2596 = vld [vmem:[%s13 + $0x8] sm:$0xff]
    %v2597 = vld [vmem:[%s13 + $0x10] sm:$0xff]
    %v2598 = vld [vmem:[%s13 + $0x18] sm:$0xff]
    %v2599 = vld [vmem:[%s13 + $0x20] sm:$0xff]
    %v2600 = vld [vmem:[%s13 + $0x28] sm:$0xff]
    %v2601 = vld [vmem:[%s13 + $0x30] sm:$0xff]
    %v2602 = vld [vmem:[%s13 + $0x38] sm:$0xff]
    %v2603 = vld [vmem:[%s13 + $0x40] sm:$0xff]
    %v2604 = vld [vmem:[%s13 + $0x48] sm:$0xff]
    %v2605 = vld [vmem:[%s13 + $0x50] sm:$0xff]
    %v2606 = vld [vmem:[%s13 + $0x58] sm:$0xff]
    %v2607 = vld [vmem:[%s13 + $0x60] sm:$0xff]
    %v2608 = vld [vmem:[%s13 + $0x68] sm:$0xff]
    %v2609 = vld [vmem:[%s13 + $0x70] sm:$0xff]
    %v2610 = vld [vmem:[%s13 + $0x78] sm:$0xff]
    %v2611 = vld [vmem:[%s13 + $0x80] sm:$0xff]
    %v2612 = vld [vmem:[%s13 + $0x88] sm:$0xff]
    %v2613 = vld [vmem:[%s13 + $0x90] sm:$0xff]
    %v2614 = vld [vmem:[%s13 + $0x98] sm:$0xff]
    %v2615 = vld [vmem:[%s13 + $0xa0] sm:$0xff]
    %v2616 = vld [vmem:[%s13 + $0xa8] sm:$0xff]
    %v2617 = vld [vmem:[%s13 + $0xb0] sm:$0xff]
    %v2618 = vld [vmem:[%s13 + $0xb8] sm:$0xff]
    %v2619 = vld [vmem:[%s13 + $0xc0] sm:$0xff]
    %v2620 = vld [vmem:[%s13 + $0xc8] sm:$0xff]
    %v2621 = vld [vmem:[%s13 + $0xd0] sm:$0xff]
    %v2622 = vld [vmem:[%s13 + $0xd8] sm:$0xff]
    %v2623 = vld [vmem:[%s13 + $0xe0] sm:$0xff]
    %v2624 = vld [vmem:[%s13 + $0xe8] sm:$0xff]
    %v2625 = vld [vmem:[%s13 + $0xf0] sm:$0xff]
    %v2626 = vld [vmem:[%s13 + $0xf8] sm:$0xff]
    %v2627 = vld [vmem:[%s13 + $0x100] sm:$0xff]
    %v2628 = vld [vmem:[%s13 + $0x108] sm:$0xff]
    %v2629 = vld [vmem:[%s13 + $0x110] sm:$0xff]
    %v2630 = vld [vmem:[%s13 + $0x118] sm:$0xff]
    %v2631 = vld [vmem:[%s13 + $0x120] sm:$0xff]
    %v2632 = vld [vmem:[%s13 + $0x128] sm:$0xff]
    %v2633 = vld [vmem:[%s13 + $0x130] sm:$0xff]
    %v2634 = vld [vmem:[%s13 + $0x138] sm:$0xff]
    %v2635 = vld [vmem:[%s13 + $0x140] sm:$0xff]
    %v2636 = vld [vmem:[%s13 + $0x148] sm:$0xff]
    %v2637 = vld [vmem:[%s13 + $0x150] sm:$0xff]
    %v2638 = vld [vmem:[%s13 + $0x158] sm:$0xff]
    %v2639 = vld [vmem:[%s13 + $0x160] sm:$0xff]
    %v2640 = vld [vmem:[%s13 + $0x168] sm:$0xff]
    %v2641 = vld [vmem:[%s13 + $0x170] sm:$0xff]
    %v2642 = vld [vmem:[%s13 + $0x178] sm:$0xff]
    %v2643 = vld [vmem:[%s13 + $0x180] sm:$0xff]
    %v2644 = vld [vmem:[%s13 + $0x188] sm:$0xff]
    %v2645 = vld [vmem:[%s13 + $0x190] sm:$0xff]
    %v2646 = vld [vmem:[%s13 + $0x198] sm:$0xff]
    %v2647 = vld [vmem:[%s13 + $0x1a0] sm:$0xff]
    %v2648 = vld [vmem:[%s13 + $0x1a8] sm:$0xff]
    %v2649 = vld [vmem:[%s13 + $0x1b0] sm:$0xff]
    %v2650 = vld [vmem:[%s13 + $0x1b8] sm:$0xff]
    %v2651 = vld [vmem:[%s13 + $0x1c0] sm:$0xff]
    %v2652 = vld [vmem:[%s13 + $0x1c8] sm:$0xff]
    %v2653 = vld [vmem:[%s13 + $0x1d0] sm:$0xff]
    %v2654 = vld [vmem:[%s13 + $0x1d8] sm:$0xff]
    %v2655 = vld [vmem:[%s13 + $0x1e0] sm:$0xff]
    %v2656 = vld [vmem:[%s13 + $0x1e8] sm:$0xff]
    %v2657 = vld [vmem:[%s13 + $0x1f0] sm:$0xff]
    %v2658 = vld [vmem:[%s13 + $0x1f8] sm:$0xff]
    %v2659 = vld [vmem:[%s13 + $0x200] sm:$0xff]
    %v2660 = vld [vmem:[%s13 + $0x208] sm:$0xff]
    %v2661 = vld [vmem:[%s13 + $0x210] sm:$0xff]
    %v2662 = vld [vmem:[%s13 + $0x218] sm:$0xff]
    %v2663 = vld [vmem:[%s13 + $0x220] sm:$0xff]
    %v2664 = vld [vmem:[%s13 + $0x228] sm:$0xff]
    %v2665 = vld [vmem:[%s13 + $0x230] sm:$0xff]
    %v2666 = vld [vmem:[%s13 + $0x238] sm:$0xff]
    %v2667 = vld [vmem:[%s13 + $0x240] sm:$0xff]
    %v2668 = vld [vmem:[%s13 + $0x248] sm:$0xff]
    %v2669 = vld [vmem:[%s13 + $0x250] sm:$0xff]
    %v2670 = vld [vmem:[%s13 + $0x258] sm:$0xff]
    %v2671 = vld [vmem:[%s13 + $0x260] sm:$0xff]
    %v2672 = vld [vmem:[%s13 + $0x268] sm:$0xff]
    %v2673 = vld [vmem:[%s13 + $0x270] sm:$0xff]
    %v2674 = vld [vmem:[%s13 + $0x278] sm:$0xff]
    %v2675 = vld [vmem:[%s13 + $0x280] sm:$0xff]
    %v2676 = vld [vmem:[%s13 + $0x288] sm:$0xff]
    %v2677 = vld [vmem:[%s13 + $0x290] sm:$0xff]
    %v2678 = vld [vmem:[%s13 + $0x298] sm:$0xff]
    %v2679 = vld [vmem:[%s13 + $0x2a0] sm:$0xff]
    %v2680 = vld [vmem:[%s13 + $0x2a8] sm:$0xff]
    %v2681 = vld [vmem:[%s13 + $0x2b0] sm:$0xff]
    %v2682 = vld [vmem:[%s13 + $0x2b8] sm:$0xff]
    %v2683 = vld [vmem:[%s13 + $0x2c0] sm:$0xff]
    %v2684 = vld [vmem:[%s13 + $0x2c8] sm:$0xff]
    %v2685 = vld [vmem:[%s13 + $0x2d0] sm:$0xff]
    %v2686 = vld [vmem:[%s13 + $0x2d8] sm:$0xff]
    %v2687 = vld [vmem:[%s13 + $0x2e0] sm:$0xff]
    %v2688 = vld [vmem:[%s13 + $0x2e8] sm:$0xff]
    %v2689 = vld [vmem:[%s13 + $0x2f0] sm:$0xff]
    %v2690 = vld [vmem:[%s13 + $0x2f8] sm:$0xff]
    %v2691 = vld [vmem:[#allocation2] ss:$8 sm:$0xf]
    %v2692 = vld [vmem:[#allocation2] ss:$8 sm:$0x30]
    %v2693 = vor.u32 %v2691, %v2692
    %v2694 = vpack.c.bf16 %v2319, %v2319
    %v2695 = vpack.c.bf16 %v2345, %v2345
    %v2792 = vunpack.c.l.b16 %v2595
    %v2793 = vunpack.c.h.b16 %v2595
    %v2794 = vunpack.c.l.b16 %v2596
    %v2795 = vunpack.c.h.b16 %v2596
    %v2796 = vunpack.c.l.b16 %v2597
    %v2797 = vunpack.c.h.b16 %v2597
    %v2798 = vunpack.c.l.b16 %v2598
    %v2799 = vunpack.c.h.b16 %v2598
    %v2800 = vunpack.c.l.b16 %v2599
    %v2801 = vunpack.c.h.b16 %v2599
    %v2802 = vunpack.c.l.b16 %v2600
    %v2803 = vunpack.c.h.b16 %v2600
    %v2804 = vunpack.c.l.b16 %v2601
    %v2805 = vunpack.c.h.b16 %v2601
    %v2806 = vunpack.c.l.b16 %v2602
    %v2807 = vunpack.c.h.b16 %v2602
    %v2808 = vunpack.c.l.b16 %v2603
    %v2809 = vunpack.c.h.b16 %v2603
    %v2810 = vunpack.c.l.b16 %v2604
    %v2811 = vunpack.c.h.b16 %v2604
    %v2812 = vunpack.c.l.b16 %v2605
    %v2813 = vunpack.c.h.b16 %v2605
    %v2814 = vunpack.c.l.b16 %v2606
    %v2815 = vunpack.c.h.b16 %v2606
    %v2816 = vunpack.c.l.b16 %v2607
    %v2817 = vunpack.c.h.b16 %v2607
    %v2818 = vunpack.c.l.b16 %v2608
    %v2819 = vunpack.c.h.b16 %v2608
    %v2820 = vunpack.c.l.b16 %v2609
    %v2821 = vunpack.c.h.b16 %v2609
    %v2822 = vunpack.c.l.b16 %v2610
    %v2823 = vunpack.c.h.b16 %v2610
    %v2824 = vunpack.c.l.b16 %v2611
    %v2825 = vunpack.c.h.b16 %v2611
    %v2826 = vunpack.c.l.b16 %v2612
    %v2827 = vunpack.c.h.b16 %v2612
    %v2828 = vunpack.c.l.b16 %v2613
    %v2829 = vunpack.c.h.b16 %v2613
    %v2830 = vunpack.c.l.b16 %v2614
    %v2831 = vunpack.c.h.b16 %v2614
    %v2832 = vunpack.c.l.b16 %v2615
    %v2833 = vunpack.c.h.b16 %v2615
    %v2834 = vunpack.c.l.b16 %v2616
    %v2835 = vunpack.c.h.b16 %v2616
    %v2836 = vunpack.c.l.b16 %v2617
    %v2837 = vunpack.c.h.b16 %v2617
    %v2838 = vunpack.c.l.b16 %v2618
    %v2839 = vunpack.c.h.b16 %v2618
    %v2840 = vunpack.c.l.b16 %v2619
    %v2841 = vunpack.c.h.b16 %v2619
    %v2842 = vunpack.c.l.b16 %v2620
    %v2843 = vunpack.c.h.b16 %v2620
    %v2844 = vunpack.c.l.b16 %v2621
    %v2845 = vunpack.c.h.b16 %v2621
    %v2846 = vunpack.c.l.b16 %v2622
    %v2847 = vunpack.c.h.b16 %v2622
    %v2848 = vunpack.c.l.b16 %v2623
    %v2849 = vunpack.c.h.b16 %v2623
    %v2850 = vunpack.c.l.b16 %v2624
    %v2851 = vunpack.c.h.b16 %v2624
    %v2852 = vunpack.c.l.b16 %v2625
    %v2853 = vunpack.c.h.b16 %v2625
    %v2854 = vunpack.c.l.b16 %v2626
    %v2855 = vunpack.c.h.b16 %v2626
    %v2856 = vunpack.c.l.b16 %v2627
    %v2857 = vunpack.c.h.b16 %v2627
    %v2858 = vunpack.c.l.b16 %v2628
    %v2859 = vunpack.c.h.b16 %v2628
    %v2860 = vunpack.c.l.b16 %v2629
    %v2861 = vunpack.c.h.b16 %v2629
    %v2862 = vunpack.c.l.b16 %v2630
    %v2863 = vunpack.c.h.b16 %v2630
    %v2864 = vunpack.c.l.b16 %v2631
    %v2865 = vunpack.c.h.b16 %v2631
    %v2866 = vunpack.c.l.b16 %v2632
    %v2867 = vunpack.c.h.b16 %v2632
    %v2868 = vunpack.c.l.b16 %v2633
    %v2869 = vunpack.c.h.b16 %v2633
    %v2870 = vunpack.c.l.b16 %v2634
    %v2871 = vunpack.c.h.b16 %v2634
    %v2872 = vunpack.c.l.b16 %v2635
    %v2873 = vunpack.c.h.b16 %v2635
    %v2874 = vunpack.c.l.b16 %v2636
    %v2875 = vunpack.c.h.b16 %v2636
    %v2876 = vunpack.c.l.b16 %v2637
    %v2877 = vunpack.c.h.b16 %v2637
    %v2878 = vunpack.c.l.b16 %v2638
    %v2879 = vunpack.c.h.b16 %v2638
    %v2880 = vunpack.c.l.b16 %v2639
    %v2881 = vunpack.c.h.b16 %v2639
    %v2882 = vunpack.c.l.b16 %v2640
    %v2883 = vunpack.c.h.b16 %v2640
    %v2884 = vunpack.c.l.b16 %v2641
    %v2885 = vunpack.c.h.b16 %v2641
    %v2886 = vunpack.c.l.b16 %v2642
    %v2887 = vunpack.c.h.b16 %v2642
    %v2888 = vunpack.c.l.b16 %v2643
    %v2889 = vunpack.c.h.b16 %v2643
    %v2890 = vunpack.c.l.b16 %v2644
    %v2891 = vunpack.c.h.b16 %v2644
    %v2892 = vunpack.c.l.b16 %v2645
    %v2893 = vunpack.c.h.b16 %v2645
    %v2894 = vunpack.c.l.b16 %v2646
    %v2895 = vunpack.c.h.b16 %v2646
    %v2896 = vunpack.c.l.b16 %v2647
    %v2897 = vunpack.c.h.b16 %v2647
    %v2898 = vunpack.c.l.b16 %v2648
    %v2899 = vunpack.c.h.b16 %v2648
    %v2900 = vunpack.c.l.b16 %v2649
    %v2901 = vunpack.c.h.b16 %v2649
    %v2902 = vunpack.c.l.b16 %v2650
    %v2903 = vunpack.c.h.b16 %v2650
    %v2904 = vunpack.c.l.b16 %v2651
    %v2905 = vunpack.c.h.b16 %v2651
    %v2906 = vunpack.c.l.b16 %v2652
    %v2907 = vunpack.c.h.b16 %v2652
    %v2908 = vunpack.c.l.b16 %v2653
    %v2909 = vunpack.c.h.b16 %v2653
    %v2910 = vunpack.c.l.b16 %v2654
    %v2911 = vunpack.c.h.b16 %v2654
    %v2912 = vunpack.c.l.b16 %v2655
    %v2913 = vunpack.c.h.b16 %v2655
    %v2914 = vunpack.c.l.b16 %v2656
    %v2915 = vunpack.c.h.b16 %v2656
    %v2916 = vunpack.c.l.b16 %v2657
    %v2917 = vunpack.c.h.b16 %v2657
    %v2918 = vunpack.c.l.b16 %v2658
    %v2919 = vunpack.c.h.b16 %v2658
    %v2920 = vunpack.c.l.b16 %v2659
    %v2921 = vunpack.c.h.b16 %v2659
    %v2922 = vunpack.c.l.b16 %v2660
    %v2923 = vunpack.c.h.b16 %v2660
    %v2924 = vunpack.c.l.b16 %v2661
    %v2925 = vunpack.c.h.b16 %v2661
    %v2926 = vunpack.c.l.b16 %v2662
    %v2927 = vunpack.c.h.b16 %v2662
    %v2928 = vunpack.c.l.b16 %v2663
    %v2929 = vunpack.c.h.b16 %v2663
    %v2930 = vunpack.c.l.b16 %v2664
    %v2931 = vunpack.c.h.b16 %v2664
    %v2932 = vunpack.c.l.b16 %v2665
    %v2933 = vunpack.c.h.b16 %v2665
    %v2934 = vunpack.c.l.b16 %v2666
    %v2935 = vunpack.c.h.b16 %v2666
    %v2936 = vunpack.c.l.b16 %v2667
    %v2937 = vunpack.c.h.b16 %v2667
    %v2938 = vunpack.c.l.b16 %v2668
    %v2939 = vunpack.c.h.b16 %v2668
    %v2940 = vunpack.c.l.b16 %v2669
    %v2941 = vunpack.c.h.b16 %v2669
    %v2942 = vunpack.c.l.b16 %v2670
    %v2943 = vunpack.c.h.b16 %v2670
    %v2944 = vunpack.c.l.b16 %v2671
    %v2945 = vunpack.c.h.b16 %v2671
    %v2946 = vunpack.c.l.b16 %v2672
    %v2947 = vunpack.c.h.b16 %v2672
    %v2948 = vunpack.c.l.b16 %v2673
    %v2949 = vunpack.c.h.b16 %v2673
    %v2950 = vunpack.c.l.b16 %v2674
    %v2951 = vunpack.c.h.b16 %v2674
    %v2952 = vunpack.c.l.b16 %v2675
    %v2953 = vunpack.c.h.b16 %v2675
    %v2954 = vunpack.c.l.b16 %v2676
    %v2955 = vunpack.c.h.b16 %v2676
    %v2956 = vunpack.c.l.b16 %v2677
    %v2957 = vunpack.c.h.b16 %v2677
    %v2958 = vunpack.c.l.b16 %v2678
    %v2959 = vunpack.c.h.b16 %v2678
    %v2960 = vunpack.c.l.b16 %v2679
    %v2961 = vunpack.c.h.b16 %v2679
    %v2962 = vunpack.c.l.b16 %v2680
    %v2963 = vunpack.c.h.b16 %v2680
    %v2964 = vunpack.c.l.b16 %v2681
    %v2965 = vunpack.c.h.b16 %v2681
    %v2966 = vunpack.c.l.b16 %v2682
    %v2967 = vunpack.c.h.b16 %v2682
    %v2968 = vunpack.c.l.b16 %v2683
    %v2969 = vunpack.c.h.b16 %v2683
    %v2970 = vunpack.c.l.b16 %v2684
    %v2971 = vunpack.c.h.b16 %v2684
    %v2972 = vunpack.c.l.b16 %v2685
    %v2973 = vunpack.c.h.b16 %v2685
    %v2974 = vunpack.c.l.b16 %v2686
    %v2975 = vunpack.c.h.b16 %v2686
    %v2976 = vunpack.c.l.b16 %v2687
    %v2977 = vunpack.c.h.b16 %v2687
    %v2978 = vunpack.c.l.b16 %v2688
    %v2979 = vunpack.c.h.b16 %v2688
    %v2980 = vunpack.c.l.b16 %v2689
    %v2981 = vunpack.c.h.b16 %v2689
    %v2982 = vunpack.c.l.b16 %v2690
    %v2983 = vunpack.c.h.b16 %v2690
    %v2984 = vpack.c.b16 %v2798, %v2792
    %v2985 = vpack.c.b16 %v2799, %v2793
    %v2986 = vpack.c.b16 %v2800, %v2794
    %v2987 = vpack.c.b16 %v2801, %v2795
    %v2988 = vpack.c.b16 %v2802, %v2796
    %v2989 = vpack.c.b16 %v2803, %v2797
    %v2990 = vpack.c.b16 %v2810, %v2804
    %v2991 = vpack.c.b16 %v2811, %v2805
    %v2992 = vpack.c.b16 %v2812, %v2806
    %v2993 = vpack.c.b16 %v2813, %v2807
    %v2994 = vpack.c.b16 %v2814, %v2808
    %v2995 = vpack.c.b16 %v2815, %v2809
    %v2996 = vpack.c.b16 %v2822, %v2816
    %v2997 = vpack.c.b16 %v2823, %v2817
    %v2998 = vpack.c.b16 %v2824, %v2818
    %v2999 = vpack.c.b16 %v2825, %v2819
    %v3000 = vpack.c.b16 %v2826, %v2820
    %v3001 = vpack.c.b16 %v2827, %v2821
    %v3002 = vpack.c.b16 %v2834, %v2828
    %v3003 = vpack.c.b16 %v2835, %v2829
    %v3004 = vpack.c.b16 %v2836, %v2830
    %v3005 = vpack.c.b16 %v2837, %v2831
    %v3006 = vpack.c.b16 %v2838, %v2832
    %v3007 = vpack.c.b16 %v2839, %v2833
    %v3008 = vpack.c.b16 %v2846, %v2840
    %v3009 = vpack.c.b16 %v2847, %v2841
    %v3010 = vpack.c.b16 %v2848, %v2842
    %v3011 = vpack.c.b16 %v2849, %v2843
    %v3012 = vpack.c.b16 %v2850, %v2844
    %v3013 = vpack.c.b16 %v2851, %v2845
    %v3014 = vpack.c.b16 %v2858, %v2852
    %v3015 = vpack.c.b16 %v2859, %v2853
    %v3016 = vpack.c.b16 %v2860, %v2854
    %v3017 = vpack.c.b16 %v2861, %v2855
    %v3018 = vpack.c.b16 %v2862, %v2856
    %v3019 = vpack.c.b16 %v2863, %v2857
    %v3020 = vpack.c.b16 %v2870, %v2864
    %v3021 = vpack.c.b16 %v2871, %v2865
    %v3022 = vpack.c.b16 %v2872, %v2866
    %v3023 = vpack.c.b16 %v2873, %v2867
    %v3024 = vpack.c.b16 %v2874, %v2868
    %v3025 = vpack.c.b16 %v2875, %v2869
    %v3026 = vpack.c.b16 %v2882, %v2876
    %v3027 = vpack.c.b16 %v2883, %v2877
    %v3028 = vpack.c.b16 %v2884, %v2878
    %v3029 = vpack.c.b16 %v2885, %v2879
    %v3030 = vpack.c.b16 %v2886, %v2880
    %v3031 = vpack.c.b16 %v2887, %v2881
    %v3032 = vpack.c.b16 %v2894, %v2888
    %v3033 = vpack.c.b16 %v2895, %v2889
    %v3034 = vpack.c.b16 %v2896, %v2890
    %v3035 = vpack.c.b16 %v2897, %v2891
    %v3036 = vpack.c.b16 %v2898, %v2892
    %v3037 = vpack.c.b16 %v2899, %v2893
    %v3038 = vpack.c.b16 %v2906, %v2900
    %v3039 = vpack.c.b16 %v2907, %v2901
    %v3040 = vpack.c.b16 %v2908, %v2902
    %v3041 = vpack.c.b16 %v2909, %v2903
    %v3042 = vpack.c.b16 %v2910, %v2904
    %v3043 = vpack.c.b16 %v2911, %v2905
    %v3044 = vpack.c.b16 %v2918, %v2912
    %v3045 = vpack.c.b16 %v2919, %v2913
    %v3046 = vpack.c.b16 %v2920, %v2914
    %v3047 = vpack.c.b16 %v2921, %v2915
    %v3048 = vpack.c.b16 %v2922, %v2916
    %v3049 = vpack.c.b16 %v2923, %v2917
    %v3050 = vpack.c.b16 %v2930, %v2924
    %v3051 = vpack.c.b16 %v2931, %v2925
    %v3052 = vpack.c.b16 %v2932, %v2926
    %v3053 = vpack.c.b16 %v2933, %v2927
    %v3054 = vpack.c.b16 %v2934, %v2928
    %v3055 = vpack.c.b16 %v2935, %v2929
    %v3056 = vpack.c.b16 %v2942, %v2936
    %v3057 = vpack.c.b16 %v2943, %v2937
    %v3058 = vpack.c.b16 %v2944, %v2938
    %v3059 = vpack.c.b16 %v2945, %v2939
    %v3060 = vpack.c.b16 %v2946, %v2940
    %v3061 = vpack.c.b16 %v2947, %v2941
    %v3062 = vpack.c.b16 %v2954, %v2948
    %v3063 = vpack.c.b16 %v2955, %v2949
    %v3064 = vpack.c.b16 %v2956, %v2950
    %v3065 = vpack.c.b16 %v2957, %v2951
    %v3066 = vpack.c.b16 %v2958, %v2952
    %v3067 = vpack.c.b16 %v2959, %v2953
    %v3068 = vpack.c.b16 %v2966, %v2960
    %v3069 = vpack.c.b16 %v2967, %v2961
    %v3070 = vpack.c.b16 %v2968, %v2962
    %v3071 = vpack.c.b16 %v2969, %v2963
    %v3072 = vpack.c.b16 %v2970, %v2964
    %v3073 = vpack.c.b16 %v2971, %v2965
    %v3074 = vpack.c.b16 %v2978, %v2972
    %v3075 = vpack.c.b16 %v2979, %v2973
    %v3076 = vpack.c.b16 %v2980, %v2974
    %v3077 = vpack.c.b16 %v2981, %v2975
    %v3078 = vpack.c.b16 %v2982, %v2976
    %v3079 = vpack.c.b16 %v2983, %v2977
    %v3177 = vperm.slane %v223, 0
    %v3178 = vperm.slane %v223, 1
    %v3179 = vperm.slane %v223, 2
    %v3180 = vperm.slane %v223, 3
    %v3181 = vperm.slane %v223, 4
    %v3182 = vperm.slane %v223, 5
    %3189 = vmatpush.bf16.msra.mxu0 %v3026
    %3190 = vmatpush.bf16.msra.mxu0 %v3020
    %3191 = vmatpush.bf16.msra.mxu0 %v3014
    %3192 = vmatpush.bf16.msra.mxu0 %v3008
    %3193 = vmatpush.bf16.msra.mxu0 %v3002
    %3194 = vmatpush.bf16.msra.mxu0 %v2996
    %3195 = vmatpush.bf16.msra.mxu0 %v2990
    %3196 = vmatpush.bf16.msra.mxu0 %v2984
    %3197 = vmatmul.bf16.gmra.mxu0 %v2694
    %v3198 = vpop.f32.mrf.mxu0
    %v3199 = vadd.f32 %v3177, %v3198
    %v3200 = vpop.f32.mrf.mxu0
    %3201 = vdwg.mxu0
    %3202 = vmatpush.bf16.msra.mxu0 %v3074
    %3203 = vmatpush.bf16.msra.mxu0 %v3068
    %3204 = vmatpush.bf16.msra.mxu0 %v3062
    %3205 = vmatpush.bf16.msra.mxu0 %v3056
    %3206 = vmatpush.bf16.msra.mxu0 %v3050
    %3207 = vmatpush.bf16.msra.mxu0 %v3044
    %3208 = vmatpush.bf16.msra.mxu0 %v3038
    %3209 = vmatpush.bf16.msra.mxu0 %v3032
    %3210 = vmatmul.bf16.gmra.mxu0 %v2695
    %v3211 = vpop.f32.mrf.mxu0
    %v3212 = vadd.f32 %v3199, %v3211
    %v3213 = vpop.f32.mrf.mxu0
    %3214 = vdwg.mxu0
    %3215 = vmatpush.bf16.msra.mxu0 %v3027
    %3216 = vmatpush.bf16.msra.mxu0 %v3021
    %3217 = vmatpush.bf16.msra.mxu0 %v3015
    %3218 = vmatpush.bf16.msra.mxu0 %v3009
    %3219 = vmatpush.bf16.msra.mxu0 %v3003
    %3220 = vmatpush.bf16.msra.mxu0 %v2997
    %3221 = vmatpush.bf16.msra.mxu0 %v2991
    %3222 = vmatpush.bf16.msra.mxu0 %v2985
    %3223 = vmatmul.bf16.gmra.mxu0 %v2694
    %v3224 = vpop.f32.mrf.mxu0
    %v3225 = vadd.f32 %v3178, %v3224
    %v3226 = vpop.f32.mrf.mxu0
    %3227 = vdwg.mxu0
    %3228 = vmatpush.bf16.msra.mxu0 %v3075
    %3229 = vmatpush.bf16.msra.mxu0 %v3069
    %3230 = vmatpush.bf16.msra.mxu0 %v3063
    %3231 = vmatpush.bf16.msra.mxu0 %v3057
    %3232 = vmatpush.bf16.msra.mxu0 %v3051
    %3233 = vmatpush.bf16.msra.mxu0 %v3045
    %3234 = vmatpush.bf16.msra.mxu0 %v3039
    %3235 = vmatpush.bf16.msra.mxu0 %v3033
    %3236 = vmatmul.bf16.gmra.mxu0 %v2695
    %v3237 = vpop.f32.mrf.mxu0
    %v3238 = vadd.f32 %v3225, %v3237
    %v3239 = vpop.f32.mrf.mxu0
    %3240 = vdwg.mxu0
    %3241 = vmatpush.bf16.msra.mxu0 %v3028
    %3242 = vmatpush.bf16.msra.mxu0 %v3022
    %3243 = vmatpush.bf16.msra.mxu0 %v3016
    %3244 = vmatpush.bf16.msra.mxu0 %v3010
    %3245 = vmatpush.bf16.msra.mxu0 %v3004
    %3246 = vmatpush.bf16.msra.mxu0 %v2998
    %3247 = vmatpush.bf16.msra.mxu0 %v2992
    %3248 = vmatpush.bf16.msra.mxu0 %v2986
    %3249 = vmatmul.bf16.gmra.mxu0 %v2694
    %v3250 = vpop.f32.mrf.mxu0
    %v3251 = vadd.f32 %v3179, %v3250
    %v3252 = vpop.f32.mrf.mxu0
    %3253 = vdwg.mxu0
    %3254 = vmatpush.bf16.msra.mxu0 %v3076
    %3255 = vmatpush.bf16.msra.mxu0 %v3070
    %3256 = vmatpush.bf16.msra.mxu0 %v3064
    %3257 = vmatpush.bf16.msra.mxu0 %v3058
    %3258 = vmatpush.bf16.msra.mxu0 %v3052
    %3259 = vmatpush.bf16.msra.mxu0 %v3046
    %3260 = vmatpush.bf16.msra.mxu0 %v3040
    %3261 = vmatpush.bf16.msra.mxu0 %v3034
    %3262 = vmatmul.bf16.gmra.mxu0 %v2695
    %v3263 = vpop.f32.mrf.mxu0
    %v3264 = vadd.f32 %v3251, %v3263
    %v3265 = vpop.f32.mrf.mxu0
    %3266 = vdwg.mxu0
    %3267 = vmatpush.bf16.msra.mxu0 %v3029
    %3268 = vmatpush.bf16.msra.mxu0 %v3023
    %3269 = vmatpush.bf16.msra.mxu0 %v3017
    %3270 = vmatpush.bf16.msra.mxu0 %v3011
    %3271 = vmatpush.bf16.msra.mxu0 %v3005
    %3272 = vmatpush.bf16.msra.mxu0 %v2999
    %3273 = vmatpush.bf16.msra.mxu0 %v2993
    %3274 = vmatpush.bf16.msra.mxu0 %v2987
    %3275 = vmatmul.bf16.gmra.mxu0 %v2694
    %v3276 = vpop.f32.mrf.mxu0
    %v3277 = vadd.f32 %v3180, %v3276
    %v3278 = vpop.f32.mrf.mxu0
    %3279 = vdwg.mxu0
    %3280 = vmatpush.bf16.msra.mxu0 %v3077
    %3281 = vmatpush.bf16.msra.mxu0 %v3071
    %3282 = vmatpush.bf16.msra.mxu0 %v3065
    %3283 = vmatpush.bf16.msra.mxu0 %v3059
    %3284 = vmatpush.bf16.msra.mxu0 %v3053
    %3285 = vmatpush.bf16.msra.mxu0 %v3047
    %3286 = vmatpush.bf16.msra.mxu0 %v3041
    %3287 = vmatpush.bf16.msra.mxu0 %v3035
    %3288 = vmatmul.bf16.gmra.mxu0 %v2695
    %v3289 = vpop.f32.mrf.mxu0
    %v3290 = vadd.f32 %v3277, %v3289
    %v3291 = vpop.f32.mrf.mxu0
    %3292 = vdwg.mxu0
    %3293 = vmatpush.bf16.msra.mxu0 %v3030
    %3294 = vmatpush.bf16.msra.mxu0 %v3024
    %3295 = vmatpush.bf16.msra.mxu0 %v3018
    %3296 = vmatpush.bf16.msra.mxu0 %v3012
    %3297 = vmatpush.bf16.msra.mxu0 %v3006
    %3298 = vmatpush.bf16.msra.mxu0 %v3000
    %3299 = vmatpush.bf16.msra.mxu0 %v2994
    %3300 = vmatpush.bf16.msra.mxu0 %v2988
    %3301 = vmatmul.bf16.gmra.mxu0 %v2694
    %v3302 = vpop.f32.mrf.mxu0
    %v3303 = vadd.f32 %v3181, %v3302
    %v3304 = vpop.f32.mrf.mxu0
    %3305 = vdwg.mxu0
    %3306 = vmatpush.bf16.msra.mxu0 %v3078
    %3307 = vmatpush.bf16.msra.mxu0 %v3072
    %3308 = vmatpush.bf16.msra.mxu0 %v3066
    %3309 = vmatpush.bf16.msra.mxu0 %v3060
    %3310 = vmatpush.bf16.msra.mxu0 %v3054
    %3311 = vmatpush.bf16.msra.mxu0 %v3048
    %3312 = vmatpush.bf16.msra.mxu0 %v3042
    %3313 = vmatpush.bf16.msra.mxu0 %v3036
    %3314 = vmatmul.bf16.gmra.mxu0 %v2695
    %v3315 = vpop.f32.mrf.mxu0
    %v3316 = vadd.f32 %v3303, %v3315
    %v3317 = vpop.f32.mrf.mxu0
    %3318 = vdwg.mxu0
    %3319 = vmatpush.bf16.msra.mxu0 %v3031
    %3320 = vmatpush.bf16.msra.mxu0 %v3025
    %3321 = vmatpush.bf16.msra.mxu0 %v3019
    %3322 = vmatpush.bf16.msra.mxu0 %v3013
    %3323 = vmatpush.bf16.msra.mxu0 %v3007
    %3324 = vmatpush.bf16.msra.mxu0 %v3001
    %3325 = vmatpush.bf16.msra.mxu0 %v2995
    %3326 = vmatpush.bf16.msra.mxu0 %v2989
    %3327 = vmatmul.bf16.gmra.mxu0 %v2694
    %v3328 = vpop.f32.mrf.mxu0
    %v3329 = vadd.f32 %v3182, %v3328
    %v3330 = vpop.f32.mrf.mxu0
    %3331 = vdwg.mxu0
    %3332 = vmatpush.bf16.msra.mxu0 %v3079
    %3333 = vmatpush.bf16.msra.mxu0 %v3073
    %3334 = vmatpush.bf16.msra.mxu0 %v3067
    %3335 = vmatpush.bf16.msra.mxu0 %v3061
    %3336 = vmatpush.bf16.msra.mxu0 %v3055
    %3337 = vmatpush.bf16.msra.mxu0 %v3049
    %3338 = vmatpush.bf16.msra.mxu0 %v3043
    %3339 = vmatpush.bf16.msra.mxu0 %v3037
    %3340 = vmatmul.bf16.gmra.mxu0 %v2695
    %v3341 = vpop.f32.mrf.mxu0
    %v3342 = vadd.f32 %v3329, %v3341
    %v3343 = vpop.f32.mrf.mxu0
    %3344 = vdwg.mxu0
    %v3347 = vrot.slane %v3238, 7
    %v3348 = vsel %vm2061, %v3212, %v3347
    %v3350 = vadd.f32 %v2693, %v3348
    %v3351 = vxor.u32 %v3350, 2147483648
    %v3352 = vmul.f32 %v3351, 1.442695
    %v3353 = vpow.pop %v3352
    %v3354 = vadd.f32 %v3353, 1.0
    %v3355 = vrcp.pop %v3354
    %v3356 = vmul.f32 %v3354, %v3355
    %v3357 = vsub.f32 1.0, %v3356
    %v3358 = vmul.f32 %v3355, %v3357
    %v3359 = vadd.f32 %v3355, %v3358
    %vm3360 = vweird.f32 %v3354
    %vm3361 = vweird.f32 %v3355
    %vm3362 = vmor %vm3360, %vm3361
    %v3363 = vsel %vm3362, %v3355, %v3359
    %v3364 = vand.u32 2147483647, %v3354
    %vm3365 = vcmp.eq.f32.partialorder %v3364, 8.507059e+37
    %v3366 = vand.u32 %v3354, 2147483648
    %v3367 = vor.u32 1.1754944e-38, %v3366
    %v3368 = vsel %vm3365, %v3367, %v3363
    %v3369 = vmul.f32 1.0, %v3368
    %v3371 = vrot.slane %v2693, 2
    %v3375 = vrot.slane %v3290, 7
    %v3376 = vsel %vm2061, %v3264, %v3375
    %v3378 = vadd.f32 %v3371, %v3376
    %v3379 = vxor.u32 %v3378, 2147483648
    %v3380 = vmul.f32 %v3379, 1.442695
    %v3381 = vpow.pop %v3380
    %v3382 = vadd.f32 %v3381, 1.0
    %v3383 = vrcp.pop %v3382
    %v3384 = vmul.f32 %v3382, %v3383
    %v3385 = vsub.f32 1.0, %v3384
    %v3386 = vmul.f32 %v3383, %v3385
    %v3387 = vadd.f32 %v3383, %v3386
    %vm3388 = vweird.f32 %v3382
    %vm3389 = vweird.f32 %v3383
    %vm3390 = vmor %vm3388, %vm3389
    %v3391 = vsel %vm3390, %v3383, %v3387
    %v3392 = vand.u32 2147483647, %v3382
    %vm3393 = vcmp.eq.f32.partialorder %v3392, 8.507059e+37
    %v3394 = vand.u32 %v3382, 2147483648
    %v3395 = vor.u32 1.1754944e-38, %v3394
    %v3396 = vsel %vm3393, %v3395, %v3391
    %v3397 = vmul.f32 1.0, %v3396
    %v3400 = vrot.slane %v3342, 7
    %v3401 = vsel %vm2061, %v3316, %v3400
    %v3403 = vmul.f32 %v3369, %v3401
    %v3404 = vrot.slane %v2693, 4
    %v3406 = vadd.f32 %v3404, %v3403
    %v3407 = vtanh.pop %v3406
    %v3408 = vsub.f32 1.0, %v3397
    %v3409 = vmul.f32 %v3408, %v3407
    %v3412 = vrot.slane %v2345, 7
    %v3413 = vsel %vm2061, %v2319, %v3412
    %v3415 = vmul.f32 %v3397, %v3413
    %v3416 = vadd.f32 %v3409, %v3415
    %s3417 = scalar_lea.vmem [#allocation2], 1
    %v3418 = vld [vmem:[%s3417] ss:$8 sm:$0xf]
    %v3419 = vld [vmem:[%s3417] ss:$8 sm:$0x30]
    %v3420 = vor.u32 %v3418, %v3419
    %v3422 = vperm.slane %v3416, 0
    %v3423 = vperm.slane %v3416, 1
    %v3426 = vpack.c.bf16 %v3422, %v3422
    %v3427 = vpack.c.bf16 %v3423, %v3423
    %3428 = vmatpush.bf16.msra.mxu0 %v3026
    %3429 = vmatpush.bf16.msra.mxu0 %v3020
    %3430 = vmatpush.bf16.msra.mxu0 %v3014
    %3431 = vmatpush.bf16.msra.mxu0 %v3008
    %3432 = vmatpush.bf16.msra.mxu0 %v3002
    %3433 = vmatpush.bf16.msra.mxu0 %v2996
    %3434 = vmatpush.bf16.msra.mxu0 %v2990
    %3435 = vmatpush.bf16.msra.mxu0 %v2984
    %3436 = vmatmul.bf16.gmra.mxu0 %v3426
    %v3437 = vpop.f32.mrf.mxu0
    %v3438 = vadd.f32 %v3177, %v3437
    %v3439 = vpop.f32.mrf.mxu0
    %3440 = vdwg.mxu0
    %3441 = vmatpush.bf16.msra.mxu0 %v3074
    %3442 = vmatpush.bf16.msra.mxu0 %v3068
    %3443 = vmatpush.bf16.msra.mxu0 %v3062
    %3444 = vmatpush.bf16.msra.mxu0 %v3056
    %3445 = vmatpush.bf16.msra.mxu0 %v3050
    %3446 = vmatpush.bf16.msra.mxu0 %v3044
    %3447 = vmatpush.bf16.msra.mxu0 %v3038
    %3448 = vmatpush.bf16.msra.mxu0 %v3032
    %3449 = vmatmul.bf16.gmra.mxu0 %v3427
    %v3450 = vpop.f32.mrf.mxu0
    %v3451 = vadd.f32 %v3438, %v3450
    %v3452 = vpop.f32.mrf.mxu0
    %3453 = vdwg.mxu0
    %3454 = vmatpush.bf16.msra.mxu0 %v3027
    %3455 = vmatpush.bf16.msra.mxu0 %v3021
    %3456 = vmatpush.bf16.msra.mxu0 %v3015
    %3457 = vmatpush.bf16.msra.mxu0 %v3009
    %3458 = vmatpush.bf16.msra.mxu0 %v3003
    %3459 = vmatpush.bf16.msra.mxu0 %v2997
    %3460 = vmatpush.bf16.msra.mxu0 %v2991
    %3461 = vmatpush.bf16.msra.mxu0 %v2985
    %3462 = vmatmul.bf16.gmra.mxu0 %v3426
    %v3463 = vpop.f32.mrf.mxu0
    %v3464 = vadd.f32 %v3178, %v3463
    %v3465 = vpop.f32.mrf.mxu0
    %3466 = vdwg.mxu0
    %3467 = vmatpush.bf16.msra.mxu0 %v3075
    %3468 = vmatpush.bf16.msra.mxu0 %v3069
    %3469 = vmatpush.bf16.msra.mxu0 %v3063
    %3470 = vmatpush.bf16.msra.mxu0 %v3057
    %3471 = vmatpush.bf16.msra.mxu0 %v3051
    %3472 = vmatpush.bf16.msra.mxu0 %v3045
    %3473 = vmatpush.bf16.msra.mxu0 %v3039
    %3474 = vmatpush.bf16.msra.mxu0 %v3033
    %3475 = vmatmul.bf16.gmra.mxu0 %v3427
    %v3476 = vpop.f32.mrf.mxu0
    %v3477 = vadd.f32 %v3464, %v3476
    %v3478 = vpop.f32.mrf.mxu0
    %3479 = vdwg.mxu0
    %3480 = vmatpush.bf16.msra.mxu0 %v3028
    %3481 = vmatpush.bf16.msra.mxu0 %v3022
    %3482 = vmatpush.bf16.msra.mxu0 %v3016
    %3483 = vmatpush.bf16.msra.mxu0 %v3010
    %3484 = vmatpush.bf16.msra.mxu0 %v3004
    %3485 = vmatpush.bf16.msra.mxu0 %v2998
    %3486 = vmatpush.bf16.msra.mxu0 %v2992
    %3487 = vmatpush.bf16.msra.mxu0 %v2986
    %3488 = vmatmul.bf16.gmra.mxu0 %v3426
    %v3489 = vpop.f32.mrf.mxu0
    %v3490 = vadd.f32 %v3179, %v3489
    %v3491 = vpop.f32.mrf.mxu0
    %3492 = vdwg.mxu0
    %3493 = vmatpush.bf16.msra.mxu0 %v3076
    %3494 = vmatpush.bf16.msra.mxu0 %v3070
    %3495 = vmatpush.bf16.msra.mxu0 %v3064
    %3496 = vmatpush.bf16.msra.mxu0 %v3058
    %3497 = vmatpush.bf16.msra.mxu0 %v3052
    %3498 = vmatpush.bf16.msra.mxu0 %v3046
    %3499 = vmatpush.bf16.msra.mxu0 %v3040
    %3500 = vmatpush.bf16.msra.mxu0 %v3034
    %3501 = vmatmul.bf16.gmra.mxu0 %v3427
    %v3502 = vpop.f32.mrf.mxu0
    %v3503 = vadd.f32 %v3490, %v3502
    %v3504 = vpop.f32.mrf.mxu0
    %3505 = vdwg.mxu0
    %3506 = vmatpush.bf16.msra.mxu0 %v3029
    %3507 = vmatpush.bf16.msra.mxu0 %v3023
    %3508 = vmatpush.bf16.msra.mxu0 %v3017
    %3509 = vmatpush.bf16.msra.mxu0 %v3011
    %3510 = vmatpush.bf16.msra.mxu0 %v3005
    %3511 = vmatpush.bf16.msra.mxu0 %v2999
    %3512 = vmatpush.bf16.msra.mxu0 %v2993
    %3513 = vmatpush.bf16.msra.mxu0 %v2987
    %3514 = vmatmul.bf16.gmra.mxu0 %v3426
    %v3515 = vpop.f32.mrf.mxu0
    %v3516 = vadd.f32 %v3180, %v3515
    %v3517 = vpop.f32.mrf.mxu0
    %3518 = vdwg.mxu0
    %3519 = vmatpush.bf16.msra.mxu0 %v3077
    %3520 = vmatpush.bf16.msra.mxu0 %v3071
    %3521 = vmatpush.bf16.msra.mxu0 %v3065
    %3522 = vmatpush.bf16.msra.mxu0 %v3059
    %3523 = vmatpush.bf16.msra.mxu0 %v3053
    %3524 = vmatpush.bf16.msra.mxu0 %v3047
    %3525 = vmatpush.bf16.msra.mxu0 %v3041
    %3526 = vmatpush.bf16.msra.mxu0 %v3035
    %3527 = vmatmul.bf16.gmra.mxu0 %v3427
    %v3528 = vpop.f32.mrf.mxu0
    %v3529 = vadd.f32 %v3516, %v3528
    %v3530 = vpop.f32.mrf.mxu0
    %3531 = vdwg.mxu0
    %3532 = vmatpush.bf16.msra.mxu0 %v3030
    %3533 = vmatpush.bf16.msra.mxu0 %v3024
    %3534 = vmatpush.bf16.msra.mxu0 %v3018
    %3535 = vmatpush.bf16.msra.mxu0 %v3012
    %3536 = vmatpush.bf16.msra.mxu0 %v3006
    %3537 = vmatpush.bf16.msra.mxu0 %v3000
    %3538 = vmatpush.bf16.msra.mxu0 %v2994
    %3539 = vmatpush.bf16.msra.mxu0 %v2988
    %3540 = vmatmul.bf16.gmra.mxu0 %v3426
    %v3541 = vpop.f32.mrf.mxu0
    %v3542 = vadd.f32 %v3181, %v3541
    %v3543 = vpop.f32.mrf.mxu0
    %3544 = vdwg.mxu0
    %3545 = vmatpush.bf16.msra.mxu0 %v3078
    %3546 = vmatpush.bf16.msra.mxu0 %v3072
    %3547 = vmatpush.bf16.msra.mxu0 %v3066
    %3548 = vmatpush.bf16.msra.mxu0 %v3060
    %3549 = vmatpush.bf16.msra.mxu0 %v3054
    %3550 = vmatpush.bf16.msra.mxu0 %v3048
    %3551 = vmatpush.bf16.msra.mxu0 %v3042
    %3552 = vmatpush.bf16.msra.mxu0 %v3036
    %3553 = vmatmul.bf16.gmra.mxu0 %v3427
    %v3554 = vpop.f32.mrf.mxu0
    %v3555 = vadd.f32 %v3542, %v3554
    %v3556 = vpop.f32.mrf.mxu0
    %3557 = vdwg.mxu0
    %3558 = vmatpush.bf16.msra.mxu0 %v3031
    %3559 = vmatpush.bf16.msra.mxu0 %v3025
    %3560 = vmatpush.bf16.msra.mxu0 %v3019
    %3561 = vmatpush.bf16.msra.mxu0 %v3013
    %3562 = vmatpush.bf16.msra.mxu0 %v3007
    %3563 = vmatpush.bf16.msra.mxu0 %v3001
    %3564 = vmatpush.bf16.msra.mxu0 %v2995
    %3565 = vmatpush.bf16.msra.mxu0 %v2989
    %3566 = vmatmul.bf16.gmra.mxu0 %v3426
    %v3567 = vpop.f32.mrf.mxu0
    %v3568 = vadd.f32 %v3182, %v3567
    %v3569 = vpop.f32.mrf.mxu0
    %3570 = vdwg.mxu0
    %3571 = vmatpush.bf16.msra.mxu0 %v3079
    %3572 = vmatpush.bf16.msra.mxu0 %v3073
    %3573 = vmatpush.bf16.msra.mxu0 %v3067
    %3574 = vmatpush.bf16.msra.mxu0 %v3061
    %3575 = vmatpush.bf16.msra.mxu0 %v3055
    %3576 = vmatpush.bf16.msra.mxu0 %v3049
    %3577 = vmatpush.bf16.msra.mxu0 %v3043
    %3578 = vmatpush.bf16.msra.mxu0 %v3037
    %3579 = vmatmul.bf16.gmra.mxu0 %v3427
    %v3580 = vpop.f32.mrf.mxu0
    %v3581 = vadd.f32 %v3568, %v3580
    %v3582 = vpop.f32.mrf.mxu0
    %3583 = vdwg.mxu0
    %v3586 = vrot.slane %v3477, 7
    %v3587 = vsel %vm2061, %v3451, %v3586
    %v3589 = vadd.f32 %v3420, %v3587
    %v3590 = vxor.u32 %v3589, 2147483648
    %v3591 = vmul.f32 %v3590, 1.442695
    %v3592 = vpow.pop %v3591
    %v3593 = vadd.f32 %v3592, 1.0
    %v3594 = vrcp.pop %v3593
    %v3595 = vmul.f32 %v3593, %v3594
    %v3596 = vsub.f32 1.0, %v3595
    %v3597 = vmul.f32 %v3594, %v3596
    %v3598 = vadd.f32 %v3594, %v3597
    %vm3599 = vweird.f32 %v3593
    %vm3600 = vweird.f32 %v3594
    %vm3601 = vmor %vm3599, %vm3600
    %v3602 = vsel %vm3601, %v3594, %v3598
    %v3603 = vand.u32 2147483647, %v3593
    %vm3604 = vcmp.eq.f32.partialorder %v3603, 8.507059e+37
    %v3605 = vand.u32 %v3593, 2147483648
    %v3606 = vor.u32 1.1754944e-38, %v3605
    %v3607 = vsel %vm3604, %v3606, %v3602
    %v3608 = vmul.f32 1.0, %v3607
    %v3610 = vrot.slane %v3420, 2
    %v3614 = vrot.slane %v3529, 7
    %v3615 = vsel %vm2061, %v3503, %v3614
    %v3617 = vadd.f32 %v3610, %v3615
    %v3618 = vxor.u32 %v3617, 2147483648
    %v3619 = vmul.f32 %v3618, 1.442695
    %v3620 = vpow.pop %v3619
    %v3621 = vadd.f32 %v3620, 1.0
    %v3622 = vrcp.pop %v3621
    %v3623 = vmul.f32 %v3621, %v3622
    %v3624 = vsub.f32 1.0, %v3623
    %v3625 = vmul.f32 %v3622, %v3624
    %v3626 = vadd.f32 %v3622, %v3625
    %vm3627 = vweird.f32 %v3621
    %vm3628 = vweird.f32 %v3622
    %vm3629 = vmor %vm3627, %vm3628
    %v3630 = vsel %vm3629, %v3622, %v3626
    %v3631 = vand.u32 2147483647, %v3621
    %vm3632 = vcmp.eq.f32.partialorder %v3631, 8.507059e+37
    %v3633 = vand.u32 %v3621, 2147483648
    %v3634 = vor.u32 1.1754944e-38, %v3633
    %v3635 = vsel %vm3632, %v3634, %v3630
    %v3636 = vmul.f32 1.0, %v3635
    %v3639 = vrot.slane %v3581, 7
    %v3640 = vsel %vm2061, %v3555, %v3639
    %v3642 = vmul.f32 %v3608, %v3640
    %v3643 = vrot.slane %v3420, 4
    %v3645 = vadd.f32 %v3643, %v3642
    %v3646 = vtanh.pop %v3645
    %v3647 = vsub.f32 1.0, %v3636
    %v3648 = vmul.f32 %v3647, %v3646
    %v3649 = vmul.f32 %v3636, %v3416
    %v3650 = vadd.f32 %v3648, %v3649
    %s3651 = scalar_lea.vmem [#allocation2], 2
    %v3652 = vld [vmem:[%s3651] ss:$8 sm:$0xf]
    %v3653 = vld [vmem:[%s3651] ss:$8 sm:$0x30]
    %v3654 = vor.u32 %v3652, %v3653
    %v3656 = vperm.slane %v3650, 0
    %v3657 = vperm.slane %v3650, 1
    %v3660 = vpack.c.bf16 %v3656, %v3656
    %v3661 = vpack.c.bf16 %v3657, %v3657
    %3662 = vmatpush.bf16.msra.mxu0 %v3026
    %3663 = vmatpush.bf16.msra.mxu0 %v3020
    %3664 = vmatpush.bf16.msra.mxu0 %v3014
    %3665 = vmatpush.bf16.msra.mxu0 %v3008
    %3666 = vmatpush.bf16.msra.mxu0 %v3002
    %3667 = vmatpush.bf16.msra.mxu0 %v2996
    %3668 = vmatpush.bf16.msra.mxu0 %v2990
    %3669 = vmatpush.bf16.msra.mxu0 %v2984
    %3670 = vmatmul.bf16.gmra.mxu0 %v3660
    %v3671 = vpop.f32.mrf.mxu0
    %v3672 = vadd.f32 %v3177, %v3671
    %v3673 = vpop.f32.mrf.mxu0
    %3674 = vdwg.mxu0
    %3675 = vmatpush.bf16.msra.mxu0 %v3074
    %3676 = vmatpush.bf16.msra.mxu0 %v3068
    %3677 = vmatpush.bf16.msra.mxu0 %v3062
    %3678 = vmatpush.bf16.msra.mxu0 %v3056
    %3679 = vmatpush.bf16.msra.mxu0 %v3050
    %3680 = vmatpush.bf16.msra.mxu0 %v3044
    %3681 = vmatpush.bf16.msra.mxu0 %v3038
    %3682 = vmatpush.bf16.msra.mxu0 %v3032
    %3683 = vmatmul.bf16.gmra.mxu0 %v3661
    %v3684 = vpop.f32.mrf.mxu0
    %v3685 = vadd.f32 %v3672, %v3684
    %v3686 = vpop.f32.mrf.mxu0
    %3687 = vdwg.mxu0
    %3688 = vmatpush.bf16.msra.mxu0 %v3027
    %3689 = vmatpush.bf16.msra.mxu0 %v3021
    %3690 = vmatpush.bf16.msra.mxu0 %v3015
    %3691 = vmatpush.bf16.msra.mxu0 %v3009
    %3692 = vmatpush.bf16.msra.mxu0 %v3003
    %3693 = vmatpush.bf16.msra.mxu0 %v2997
    %3694 = vmatpush.bf16.msra.mxu0 %v2991
    %3695 = vmatpush.bf16.msra.mxu0 %v2985
    %3696 = vmatmul.bf16.gmra.mxu0 %v3660
    %v3697 = vpop.f32.mrf.mxu0
    %v3698 = vadd.f32 %v3178, %v3697
    %v3699 = vpop.f32.mrf.mxu0
    %3700 = vdwg.mxu0
    %3701 = vmatpush.bf16.msra.mxu0 %v3075
    %3702 = vmatpush.bf16.msra.mxu0 %v3069
    %3703 = vmatpush.bf16.msra.mxu0 %v3063
    %3704 = vmatpush.bf16.msra.mxu0 %v3057
    %3705 = vmatpush.bf16.msra.mxu0 %v3051
    %3706 = vmatpush.bf16.msra.mxu0 %v3045
    %3707 = vmatpush.bf16.msra.mxu0 %v3039
    %3708 = vmatpush.bf16.msra.mxu0 %v3033
    %3709 = vmatmul.bf16.gmra.mxu0 %v3661
    %v3710 = vpop.f32.mrf.mxu0
    %v3711 = vadd.f32 %v3698, %v3710
    %v3712 = vpop.f32.mrf.mxu0
    %3713 = vdwg.mxu0
    %3714 = vmatpush.bf16.msra.mxu0 %v3028
    %3715 = vmatpush.bf16.msra.mxu0 %v3022
    %3716 = vmatpush.bf16.msra.mxu0 %v3016
    %3717 = vmatpush.bf16.msra.mxu0 %v3010
    %3718 = vmatpush.bf16.msra.mxu0 %v3004
    %3719 = vmatpush.bf16.msra.mxu0 %v2998
    %3720 = vmatpush.bf16.msra.mxu0 %v2992
    %3721 = vmatpush.bf16.msra.mxu0 %v2986
    %3722 = vmatmul.bf16.gmra.mxu0 %v3660
    %v3723 = vpop.f32.mrf.mxu0
    %v3724 = vadd.f32 %v3179, %v3723
    %v3725 = vpop.f32.mrf.mxu0
    %3726 = vdwg.mxu0
    %3727 = vmatpush.bf16.msra.mxu0 %v3076
    %3728 = vmatpush.bf16.msra.mxu0 %v3070
    %3729 = vmatpush.bf16.msra.mxu0 %v3064
    %3730 = vmatpush.bf16.msra.mxu0 %v3058
    %3731 = vmatpush.bf16.msra.mxu0 %v3052
    %3732 = vmatpush.bf16.msra.mxu0 %v3046
    %3733 = vmatpush.bf16.msra.mxu0 %v3040
    %3734 = vmatpush.bf16.msra.mxu0 %v3034
    %3735 = vmatmul.bf16.gmra.mxu0 %v3661
    %v3736 = vpop.f32.mrf.mxu0
    %v3737 = vadd.f32 %v3724, %v3736
    %v3738 = vpop.f32.mrf.mxu0
    %3739 = vdwg.mxu0
    %3740 = vmatpush.bf16.msra.mxu0 %v3029
    %3741 = vmatpush.bf16.msra.mxu0 %v3023
    %3742 = vmatpush.bf16.msra.mxu0 %v3017
    %3743 = vmatpush.bf16.msra.mxu0 %v3011
    %3744 = vmatpush.bf16.msra.mxu0 %v3005
    %3745 = vmatpush.bf16.msra.mxu0 %v2999
    %3746 = vmatpush.bf16.msra.mxu0 %v2993
    %3747 = vmatpush.bf16.msra.mxu0 %v2987
    %3748 = vmatmul.bf16.gmra.mxu0 %v3660
    %v3749 = vpop.f32.mrf.mxu0
    %v3750 = vadd.f32 %v3180, %v3749
    %v3751 = vpop.f32.mrf.mxu0
    %3752 = vdwg.mxu0
    %3753 = vmatpush.bf16.msra.mxu0 %v3077
    %3754 = vmatpush.bf16.msra.mxu0 %v3071
    %3755 = vmatpush.bf16.msra.mxu0 %v3065
    %3756 = vmatpush.bf16.msra.mxu0 %v3059
    %3757 = vmatpush.bf16.msra.mxu0 %v3053
    %3758 = vmatpush.bf16.msra.mxu0 %v3047
    %3759 = vmatpush.bf16.msra.mxu0 %v3041
    %3760 = vmatpush.bf16.msra.mxu0 %v3035
    %3761 = vmatmul.bf16.gmra.mxu0 %v3661
    %v3762 = vpop.f32.mrf.mxu0
    %v3763 = vadd.f32 %v3750, %v3762
    %v3764 = vpop.f32.mrf.mxu0
    %3765 = vdwg.mxu0
    %3766 = vmatpush.bf16.msra.mxu0 %v3030
    %3767 = vmatpush.bf16.msra.mxu0 %v3024
    %3768 = vmatpush.bf16.msra.mxu0 %v3018
    %3769 = vmatpush.bf16.msra.mxu0 %v3012
    %3770 = vmatpush.bf16.msra.mxu0 %v3006
    %3771 = vmatpush.bf16.msra.mxu0 %v3000
    %3772 = vmatpush.bf16.msra.mxu0 %v2994
    %3773 = vmatpush.bf16.msra.mxu0 %v2988
    %3774 = vmatmul.bf16.gmra.mxu0 %v3660
    %v3775 = vpop.f32.mrf.mxu0
    %v3776 = vadd.f32 %v3181, %v3775
    %v3777 = vpop.f32.mrf.mxu0
    %3778 = vdwg.mxu0
    %3779 = vmatpush.bf16.msra.mxu0 %v3078
    %3780 = vmatpush.bf16.msra.mxu0 %v3072
    %3781 = vmatpush.bf16.msra.mxu0 %v3066
    %3782 = vmatpush.bf16.msra.mxu0 %v3060
    %3783 = vmatpush.bf16.msra.mxu0 %v3054
    %3784 = vmatpush.bf16.msra.mxu0 %v3048
    %3785 = vmatpush.bf16.msra.mxu0 %v3042
    %3786 = vmatpush.bf16.msra.mxu0 %v3036
    %3787 = vmatmul.bf16.gmra.mxu0 %v3661
    %v3788 = vpop.f32.mrf.mxu0
    %v3789 = vadd.f32 %v3776, %v3788
    %v3790 = vpop.f32.mrf.mxu0
    %3791 = vdwg.mxu0
    %3792 = vmatpush.bf16.msra.mxu0 %v3031
    %3793 = vmatpush.bf16.msra.mxu0 %v3025
    %3794 = vmatpush.bf16.msra.mxu0 %v3019
    %3795 = vmatpush.bf16.msra.mxu0 %v3013
    %3796 = vmatpush.bf16.msra.mxu0 %v3007
    %3797 = vmatpush.bf16.msra.mxu0 %v3001
    %3798 = vmatpush.bf16.msra.mxu0 %v2995
    %3799 = vmatpush.bf16.msra.mxu0 %v2989
    %3800 = vmatmul.bf16.gmra.mxu0 %v3660
    %v3801 = vpop.f32.mrf.mxu0
    %v3802 = vadd.f32 %v3182, %v3801
    %v3803 = vpop.f32.mrf.mxu0
    %3804 = vdwg.mxu0
    %3805 = vmatpush.bf16.msra.mxu0 %v3079
    %3806 = vmatpush.bf16.msra.mxu0 %v3073
    %3807 = vmatpush.bf16.msra.mxu0 %v3067
    %3808 = vmatpush.bf16.msra.mxu0 %v3061
    %3809 = vmatpush.bf16.msra.mxu0 %v3055
    %3810 = vmatpush.bf16.msra.mxu0 %v3049
    %3811 = vmatpush.bf16.msra.mxu0 %v3043
    %3812 = vmatpush.bf16.msra.mxu0 %v3037
    %3813 = vmatmul.bf16.gmra.mxu0 %v3661
    %v3814 = vpop.f32.mrf.mxu0
    %v3815 = vadd.f32 %v3802, %v3814
    %v3816 = vpop.f32.mrf.mxu0
    %3817 = vdwg.mxu0
    %v3820 = vrot.slane %v3711, 7
    %v3821 = vsel %vm2061, %v3685, %v3820
    %v3823 = vadd.f32 %v3654, %v3821
    %v3824 = vxor.u32 %v3823, 2147483648
    %v3825 = vmul.f32 %v3824, 1.442695
    %v3826 = vpow.pop %v3825
    %v3827 = vadd.f32 %v3826, 1.0
    %v3828 = vrcp.pop %v3827
    %v3829 = vmul.f32 %v3827, %v3828
    %v3830 = vsub.f32 1.0, %v3829
    %v3831 = vmul.f32 %v3828, %v3830
    %v3832 = vadd.f32 %v3828, %v3831
    %vm3833 = vweird.f32 %v3827
    %vm3834 = vweird.f32 %v3828
    %vm3835 = vmor %vm3833, %vm3834
    %v3836 = vsel %vm3835, %v3828, %v3832
    %v3837 = vand.u32 2147483647, %v3827
    %vm3838 = vcmp.eq.f32.partialorder %v3837, 8.507059e+37
    %v3839 = vand.u32 %v3827, 2147483648
    %v3840 = vor.u32 1.1754944e-38, %v3839
    %v3841 = vsel %vm3838, %v3840, %v3836
    %v3842 = vmul.f32 1.0, %v3841
    %v3844 = vrot.slane %v3654, 2
    %v3848 = vrot.slane %v3763, 7
    %v3849 = vsel %vm2061, %v3737, %v3848
    %v3851 = vadd.f32 %v3844, %v3849
    %v3852 = vxor.u32 %v3851, 2147483648
    %v3853 = vmul.f32 %v3852, 1.442695
    %v3854 = vpow.pop %v3853
    %v3855 = vadd.f32 %v3854, 1.0
    %v3856 = vrcp.pop %v3855
    %v3857 = vmul.f32 %v3855, %v3856
    %v3858 = vsub.f32 1.0, %v3857
    %v3859 = vmul.f32 %v3856, %v3858
    %v3860 = vadd.f32 %v3856, %v3859
    %vm3861 = vweird.f32 %v3855
    %vm3862 = vweird.f32 %v3856
    %vm3863 = vmor %vm3861, %vm3862
    %v3864 = vsel %vm3863, %v3856, %v3860
    %v3865 = vand.u32 2147483647, %v3855
    %vm3866 = vcmp.eq.f32.partialorder %v3865, 8.507059e+37
    %v3867 = vand.u32 %v3855, 2147483648
    %v3868 = vor.u32 1.1754944e-38, %v3867
    %v3869 = vsel %vm3866, %v3868, %v3864
    %v3870 = vmul.f32 1.0, %v3869
    %v3873 = vrot.slane %v3815, 7
    %v3874 = vsel %vm2061, %v3789, %v3873
    %v3876 = vmul.f32 %v3842, %v3874
    %v3877 = vrot.slane %v3654, 4
    %v3879 = vadd.f32 %v3877, %v3876
    %v3880 = vtanh.pop %v3879
    %v3881 = vsub.f32 1.0, %v3870
    %v3882 = vmul.f32 %v3881, %v3880
    %v3883 = vmul.f32 %v3870, %v3650
    %v3884 = vadd.f32 %v3882, %v3883
    %s3885 = scalar_lea.vmem [#allocation2], 3
    %v3886 = vld [vmem:[%s3885] ss:$8 sm:$0xf]
    %v3887 = vld [vmem:[%s3885] ss:$8 sm:$0x30]
    %v3888 = vor.u32 %v3886, %v3887
    %v3890 = vperm.slane %v3884, 0
    %v3891 = vperm.slane %v3884, 1
    %v3894 = vpack.c.bf16 %v3890, %v3890
    %v3895 = vpack.c.bf16 %v3891, %v3891
    %3896 = vmatpush.bf16.msra.mxu0 %v3026
    %3897 = vmatpush.bf16.msra.mxu0 %v3020
    %3898 = vmatpush.bf16.msra.mxu0 %v3014
    %3899 = vmatpush.bf16.msra.mxu0 %v3008
    %3900 = vmatpush.bf16.msra.mxu0 %v3002
    %3901 = vmatpush.bf16.msra.mxu0 %v2996
    %3902 = vmatpush.bf16.msra.mxu0 %v2990
    %3903 = vmatpush.bf16.msra.mxu0 %v2984
    %3904 = vmatmul.bf16.gmra.mxu0 %v3894
    %v3905 = vpop.f32.mrf.mxu0
    %v3906 = vadd.f32 %v3177, %v3905
    %v3907 = vpop.f32.mrf.mxu0
    %3908 = vdwg.mxu0
    %3909 = vmatpush.bf16.msra.mxu0 %v3074
    %3910 = vmatpush.bf16.msra.mxu0 %v3068
    %3911 = vmatpush.bf16.msra.mxu0 %v3062
    %3912 = vmatpush.bf16.msra.mxu0 %v3056
    %3913 = vmatpush.bf16.msra.mxu0 %v3050
    %3914 = vmatpush.bf16.msra.mxu0 %v3044
    %3915 = vmatpush.bf16.msra.mxu0 %v3038
    %3916 = vmatpush.bf16.msra.mxu0 %v3032
    %3917 = vmatmul.bf16.gmra.mxu0 %v3895
    %v3918 = vpop.f32.mrf.mxu0
    %v3919 = vadd.f32 %v3906, %v3918
    %v3920 = vpop.f32.mrf.mxu0
    %3921 = vdwg.mxu0
    %3922 = vmatpush.bf16.msra.mxu0 %v3027
    %3923 = vmatpush.bf16.msra.mxu0 %v3021
    %3924 = vmatpush.bf16.msra.mxu0 %v3015
    %3925 = vmatpush.bf16.msra.mxu0 %v3009
    %3926 = vmatpush.bf16.msra.mxu0 %v3003
    %3927 = vmatpush.bf16.msra.mxu0 %v2997
    %3928 = vmatpush.bf16.msra.mxu0 %v2991
    %3929 = vmatpush.bf16.msra.mxu0 %v2985
    %3930 = vmatmul.bf16.gmra.mxu0 %v3894
    %v3931 = vpop.f32.mrf.mxu0
    %v3932 = vadd.f32 %v3178, %v3931
    %v3933 = vpop.f32.mrf.mxu0
    %3934 = vdwg.mxu0
    %3935 = vmatpush.bf16.msra.mxu0 %v3075
    %3936 = vmatpush.bf16.msra.mxu0 %v3069
    %3937 = vmatpush.bf16.msra.mxu0 %v3063
    %3938 = vmatpush.bf16.msra.mxu0 %v3057
    %3939 = vmatpush.bf16.msra.mxu0 %v3051
    %3940 = vmatpush.bf16.msra.mxu0 %v3045
    %3941 = vmatpush.bf16.msra.mxu0 %v3039
    %3942 = vmatpush.bf16.msra.mxu0 %v3033
    %3943 = vmatmul.bf16.gmra.mxu0 %v3895
    %v3944 = vpop.f32.mrf.mxu0
    %v3945 = vadd.f32 %v3932, %v3944
    %v3946 = vpop.f32.mrf.mxu0
    %3947 = vdwg.mxu0
    %3948 = vmatpush.bf16.msra.mxu0 %v3028
    %3949 = vmatpush.bf16.msra.mxu0 %v3022
    %3950 = vmatpush.bf16.msra.mxu0 %v3016
    %3951 = vmatpush.bf16.msra.mxu0 %v3010
    %3952 = vmatpush.bf16.msra.mxu0 %v3004
    %3953 = vmatpush.bf16.msra.mxu0 %v2998
    %3954 = vmatpush.bf16.msra.mxu0 %v2992
    %3955 = vmatpush.bf16.msra.mxu0 %v2986
    %3956 = vmatmul.bf16.gmra.mxu0 %v3894
    %v3957 = vpop.f32.mrf.mxu0
    %v3958 = vadd.f32 %v3179, %v3957
    %v3959 = vpop.f32.mrf.mxu0
    %3960 = vdwg.mxu0
    %3961 = vmatpush.bf16.msra.mxu0 %v3076
    %3962 = vmatpush.bf16.msra.mxu0 %v3070
    %3963 = vmatpush.bf16.msra.mxu0 %v3064
    %3964 = vmatpush.bf16.msra.mxu0 %v3058
    %3965 = vmatpush.bf16.msra.mxu0 %v3052
    %3966 = vmatpush.bf16.msra.mxu0 %v3046
    %3967 = vmatpush.bf16.msra.mxu0 %v3040
    %3968 = vmatpush.bf16.msra.mxu0 %v3034
    %3969 = vmatmul.bf16.gmra.mxu0 %v3895
    %v3970 = vpop.f32.mrf.mxu0
    %v3971 = vadd.f32 %v3958, %v3970
    %v3972 = vpop.f32.mrf.mxu0
    %3973 = vdwg.mxu0
    %3974 = vmatpush.bf16.msra.mxu0 %v3029
    %3975 = vmatpush.bf16.msra.mxu0 %v3023
    %3976 = vmatpush.bf16.msra.mxu0 %v3017
    %3977 = vmatpush.bf16.msra.mxu0 %v3011
    %3978 = vmatpush.bf16.msra.mxu0 %v3005
    %3979 = vmatpush.bf16.msra.mxu0 %v2999
    %3980 = vmatpush.bf16.msra.mxu0 %v2993
    %3981 = vmatpush.bf16.msra.mxu0 %v2987
    %3982 = vmatmul.bf16.gmra.mxu0 %v3894
    %v3983 = vpop.f32.mrf.mxu0
    %v3984 = vadd.f32 %v3180, %v3983
    %v3985 = vpop.f32.mrf.mxu0
    %3986 = vdwg.mxu0
    %3987 = vmatpush.bf16.msra.mxu0 %v3077
    %3988 = vmatpush.bf16.msra.mxu0 %v3071
    %3989 = vmatpush.bf16.msra.mxu0 %v3065
    %3990 = vmatpush.bf16.msra.mxu0 %v3059
    %3991 = vmatpush.bf16.msra.mxu0 %v3053
    %3992 = vmatpush.bf16.msra.mxu0 %v3047
    %3993 = vmatpush.bf16.msra.mxu0 %v3041
    %3994 = vmatpush.bf16.msra.mxu0 %v3035
    %3995 = vmatmul.bf16.gmra.mxu0 %v3895
    %v3996 = vpop.f32.mrf.mxu0
    %v3997 = vadd.f32 %v3984, %v3996
    %v3998 = vpop.f32.mrf.mxu0
    %3999 = vdwg.mxu0
    %4000 = vmatpush.bf16.msra.mxu0 %v3030
    %4001 = vmatpush.bf16.msra.mxu0 %v3024
    %4002 = vmatpush.bf16.msra.mxu0 %v3018
    %4003 = vmatpush.bf16.msra.mxu0 %v3012
    %4004 = vmatpush.bf16.msra.mxu0 %v3006
    %4005 = vmatpush.bf16.msra.mxu0 %v3000
    %4006 = vmatpush.bf16.msra.mxu0 %v2994
    %4007 = vmatpush.bf16.msra.mxu0 %v2988
    %4008 = vmatmul.bf16.gmra.mxu0 %v3894
    %v4009 = vpop.f32.mrf.mxu0
    %v4010 = vadd.f32 %v3181, %v4009
    %v4011 = vpop.f32.mrf.mxu0
    %4012 = vdwg.mxu0
    %4013 = vmatpush.bf16.msra.mxu0 %v3078
    %4014 = vmatpush.bf16.msra.mxu0 %v3072
    %4015 = vmatpush.bf16.msra.mxu0 %v3066
    %4016 = vmatpush.bf16.msra.mxu0 %v3060
    %4017 = vmatpush.bf16.msra.mxu0 %v3054
    %4018 = vmatpush.bf16.msra.mxu0 %v3048
    %4019 = vmatpush.bf16.msra.mxu0 %v3042
    %4020 = vmatpush.bf16.msra.mxu0 %v3036
    %4021 = vmatmul.bf16.gmra.mxu0 %v3895
    %v4022 = vpop.f32.mrf.mxu0
    %v4023 = vadd.f32 %v4010, %v4022
    %v4024 = vpop.f32.mrf.mxu0
    %4025 = vdwg.mxu0
    %4026 = vmatpush.bf16.msra.mxu0 %v3031
    %4027 = vmatpush.bf16.msra.mxu0 %v3025
    %4028 = vmatpush.bf16.msra.mxu0 %v3019
    %4029 = vmatpush.bf16.msra.mxu0 %v3013
    %4030 = vmatpush.bf16.msra.mxu0 %v3007
    %4031 = vmatpush.bf16.msra.mxu0 %v3001
    %4032 = vmatpush.bf16.msra.mxu0 %v2995
    %4033 = vmatpush.bf16.msra.mxu0 %v2989
    %4034 = vmatmul.bf16.gmra.mxu0 %v3894
    %v4035 = vpop.f32.mrf.mxu0
    %v4036 = vadd.f32 %v3182, %v4035
    %v4037 = vpop.f32.mrf.mxu0
    %4038 = vdwg.mxu0
    %4039 = vmatpush.bf16.msra.mxu0 %v3079
    %4040 = vmatpush.bf16.msra.mxu0 %v3073
    %4041 = vmatpush.bf16.msra.mxu0 %v3067
    %4042 = vmatpush.bf16.msra.mxu0 %v3061
    %4043 = vmatpush.bf16.msra.mxu0 %v3055
    %4044 = vmatpush.bf16.msra.mxu0 %v3049
    %4045 = vmatpush.bf16.msra.mxu0 %v3043
    %4046 = vmatpush.bf16.msra.mxu0 %v3037
    %4047 = vmatmul.bf16.gmra.mxu0 %v3895
    %v4048 = vpop.f32.mrf.mxu0
    %v4049 = vadd.f32 %v4036, %v4048
    %v4050 = vpop.f32.mrf.mxu0
    %4051 = vdwg.mxu0
    %v4054 = vrot.slane %v3945, 7
    %v4055 = vsel %vm2061, %v3919, %v4054
    %v4057 = vadd.f32 %v3888, %v4055
    %v4058 = vxor.u32 %v4057, 2147483648
    %v4059 = vmul.f32 %v4058, 1.442695
    %v4060 = vpow.pop %v4059
    %v4061 = vadd.f32 %v4060, 1.0
    %v4062 = vrcp.pop %v4061
    %v4063 = vmul.f32 %v4061, %v4062
    %v4064 = vsub.f32 1.0, %v4063
    %v4065 = vmul.f32 %v4062, %v4064
    %v4066 = vadd.f32 %v4062, %v4065
    %vm4067 = vweird.f32 %v4061
    %vm4068 = vweird.f32 %v4062
    %vm4069 = vmor %vm4067, %vm4068
    %v4070 = vsel %vm4069, %v4062, %v4066
    %v4071 = vand.u32 2147483647, %v4061
    %vm4072 = vcmp.eq.f32.partialorder %v4071, 8.507059e+37
    %v4073 = vand.u32 %v4061, 2147483648
    %v4074 = vor.u32 1.1754944e-38, %v4073
    %v4075 = vsel %vm4072, %v4074, %v4070
    %v4076 = vmul.f32 1.0, %v4075
    %v4078 = vrot.slane %v3888, 2
    %v4082 = vrot.slane %v3997, 7
    %v4083 = vsel %vm2061, %v3971, %v4082
    %v4085 = vadd.f32 %v4078, %v4083
    %v4086 = vxor.u32 %v4085, 2147483648
    %v4087 = vmul.f32 %v4086, 1.442695
    %v4088 = vpow.pop %v4087
    %v4089 = vadd.f32 %v4088, 1.0
    %v4090 = vrcp.pop %v4089
    %v4091 = vmul.f32 %v4089, %v4090
    %v4092 = vsub.f32 1.0, %v4091
    %v4093 = vmul.f32 %v4090, %v4092
    %v4094 = vadd.f32 %v4090, %v4093
    %vm4095 = vweird.f32 %v4089
    %vm4096 = vweird.f32 %v4090
    %vm4097 = vmor %vm4095, %vm4096
    %v4098 = vsel %vm4097, %v4090, %v4094
    %v4099 = vand.u32 2147483647, %v4089
    %vm4100 = vcmp.eq.f32.partialorder %v4099, 8.507059e+37
    %v4101 = vand.u32 %v4089, 2147483648
    %v4102 = vor.u32 1.1754944e-38, %v4101
    %v4103 = vsel %vm4100, %v4102, %v4098
    %v4104 = vmul.f32 1.0, %v4103
    %v4107 = vrot.slane %v4049, 7
    %v4108 = vsel %vm2061, %v4023, %v4107
    %v4110 = vmul.f32 %v4076, %v4108
    %v4111 = vrot.slane %v3888, 4
    %v4113 = vadd.f32 %v4111, %v4110
    %v4114 = vtanh.pop %v4113
    %v4115 = vsub.f32 1.0, %v4104
    %v4116 = vmul.f32 %v4115, %v4114
    %v4117 = vmul.f32 %v4104, %v3884
    %v4118 = vadd.f32 %v4116, %v4117
    %s4119 = scalar_lea.vmem [#allocation2], 4
    %v4120 = vld [vmem:[%s4119] ss:$8 sm:$0xf]
    %v4121 = vld [vmem:[%s4119] ss:$8 sm:$0x30]
    %v4122 = vor.u32 %v4120, %v4121
    %v4124 = vperm.slane %v4118, 0
    %v4125 = vperm.slane %v4118, 1
    %v4128 = vpack.c.bf16 %v4124, %v4124
    %v4129 = vpack.c.bf16 %v4125, %v4125
    %4130 = vmatpush.bf16.msra.mxu0 %v3026
    %4131 = vmatpush.bf16.msra.mxu0 %v3020
    %4132 = vmatpush.bf16.msra.mxu0 %v3014
    %4133 = vmatpush.bf16.msra.mxu0 %v3008
    %4134 = vmatpush.bf16.msra.mxu0 %v3002
    %4135 = vmatpush.bf16.msra.mxu0 %v2996
    %4136 = vmatpush.bf16.msra.mxu0 %v2990
    %4137 = vmatpush.bf16.msra.mxu0 %v2984
    %4138 = vmatmul.bf16.gmra.mxu0 %v4128
    %v4139 = vpop.f32.mrf.mxu0
    %v4140 = vadd.f32 %v3177, %v4139
    %v4141 = vpop.f32.mrf.mxu0
    %4142 = vdwg.mxu0
    %4143 = vmatpush.bf16.msra.mxu0 %v3074
    %4144 = vmatpush.bf16.msra.mxu0 %v3068
    %4145 = vmatpush.bf16.msra.mxu0 %v3062
    %4146 = vmatpush.bf16.msra.mxu0 %v3056
    %4147 = vmatpush.bf16.msra.mxu0 %v3050
    %4148 = vmatpush.bf16.msra.mxu0 %v3044
    %4149 = vmatpush.bf16.msra.mxu0 %v3038
    %4150 = vmatpush.bf16.msra.mxu0 %v3032
    %4151 = vmatmul.bf16.gmra.mxu0 %v4129
    %v4152 = vpop.f32.mrf.mxu0
    %v4153 = vadd.f32 %v4140, %v4152
    %v4154 = vpop.f32.mrf.mxu0
    %4155 = vdwg.mxu0
    %4156 = vmatpush.bf16.msra.mxu0 %v3027
    %4157 = vmatpush.bf16.msra.mxu0 %v3021
    %4158 = vmatpush.bf16.msra.mxu0 %v3015
    %4159 = vmatpush.bf16.msra.mxu0 %v3009
    %4160 = vmatpush.bf16.msra.mxu0 %v3003
    %4161 = vmatpush.bf16.msra.mxu0 %v2997
    %4162 = vmatpush.bf16.msra.mxu0 %v2991
    %4163 = vmatpush.bf16.msra.mxu0 %v2985
    %4164 = vmatmul.bf16.gmra.mxu0 %v4128
    %v4165 = vpop.f32.mrf.mxu0
    %v4166 = vadd.f32 %v3178, %v4165
    %v4167 = vpop.f32.mrf.mxu0
    %4168 = vdwg.mxu0
    %4169 = vmatpush.bf16.msra.mxu0 %v3075
    %4170 = vmatpush.bf16.msra.mxu0 %v3069
    %4171 = vmatpush.bf16.msra.mxu0 %v3063
    %4172 = vmatpush.bf16.msra.mxu0 %v3057
    %4173 = vmatpush.bf16.msra.mxu0 %v3051
    %4174 = vmatpush.bf16.msra.mxu0 %v3045
    %4175 = vmatpush.bf16.msra.mxu0 %v3039
    %4176 = vmatpush.bf16.msra.mxu0 %v3033
    %4177 = vmatmul.bf16.gmra.mxu0 %v4129
    %v4178 = vpop.f32.mrf.mxu0
    %v4179 = vadd.f32 %v4166, %v4178
    %v4180 = vpop.f32.mrf.mxu0
    %4181 = vdwg.mxu0
    %4182 = vmatpush.bf16.msra.mxu0 %v3028
    %4183 = vmatpush.bf16.msra.mxu0 %v3022
    %4184 = vmatpush.bf16.msra.mxu0 %v3016
    %4185 = vmatpush.bf16.msra.mxu0 %v3010
    %4186 = vmatpush.bf16.msra.mxu0 %v3004
    %4187 = vmatpush.bf16.msra.mxu0 %v2998
    %4188 = vmatpush.bf16.msra.mxu0 %v2992
    %4189 = vmatpush.bf16.msra.mxu0 %v2986
    %4190 = vmatmul.bf16.gmra.mxu0 %v4128
    %v4191 = vpop.f32.mrf.mxu0
    %v4192 = vadd.f32 %v3179, %v4191
    %v4193 = vpop.f32.mrf.mxu0
    %4194 = vdwg.mxu0
    %4195 = vmatpush.bf16.msra.mxu0 %v3076
    %4196 = vmatpush.bf16.msra.mxu0 %v3070
    %4197 = vmatpush.bf16.msra.mxu0 %v3064
    %4198 = vmatpush.bf16.msra.mxu0 %v3058
    %4199 = vmatpush.bf16.msra.mxu0 %v3052
    %4200 = vmatpush.bf16.msra.mxu0 %v3046
    %4201 = vmatpush.bf16.msra.mxu0 %v3040
    %4202 = vmatpush.bf16.msra.mxu0 %v3034
    %4203 = vmatmul.bf16.gmra.mxu0 %v4129
    %v4204 = vpop.f32.mrf.mxu0
    %v4205 = vadd.f32 %v4192, %v4204
    %v4206 = vpop.f32.mrf.mxu0
    %4207 = vdwg.mxu0
    %4208 = vmatpush.bf16.msra.mxu0 %v3029
    %4209 = vmatpush.bf16.msra.mxu0 %v3023
    %4210 = vmatpush.bf16.msra.mxu0 %v3017
    %4211 = vmatpush.bf16.msra.mxu0 %v3011
    %4212 = vmatpush.bf16.msra.mxu0 %v3005
    %4213 = vmatpush.bf16.msra.mxu0 %v2999
    %4214 = vmatpush.bf16.msra.mxu0 %v2993
    %4215 = vmatpush.bf16.msra.mxu0 %v2987
    %4216 = vmatmul.bf16.gmra.mxu0 %v4128
    %v4217 = vpop.f32.mrf.mxu0
    %v4218 = vadd.f32 %v3180, %v4217
    %v4219 = vpop.f32.mrf.mxu0
    %4220 = vdwg.mxu0
    %4221 = vmatpush.bf16.msra.mxu0 %v3077
    %4222 = vmatpush.bf16.msra.mxu0 %v3071
    %4223 = vmatpush.bf16.msra.mxu0 %v3065
    %4224 = vmatpush.bf16.msra.mxu0 %v3059
    %4225 = vmatpush.bf16.msra.mxu0 %v3053
    %4226 = vmatpush.bf16.msra.mxu0 %v3047
    %4227 = vmatpush.bf16.msra.mxu0 %v3041
    %4228 = vmatpush.bf16.msra.mxu0 %v3035
    %4229 = vmatmul.bf16.gmra.mxu0 %v4129
    %v4230 = vpop.f32.mrf.mxu0
    %v4231 = vadd.f32 %v4218, %v4230
    %v4232 = vpop.f32.mrf.mxu0
    %4233 = vdwg.mxu0
    %4234 = vmatpush.bf16.msra.mxu0 %v3030
    %4235 = vmatpush.bf16.msra.mxu0 %v3024
    %4236 = vmatpush.bf16.msra.mxu0 %v3018
    %4237 = vmatpush.bf16.msra.mxu0 %v3012
    %4238 = vmatpush.bf16.msra.mxu0 %v3006
    %4239 = vmatpush.bf16.msra.mxu0 %v3000
    %4240 = vmatpush.bf16.msra.mxu0 %v2994
    %4241 = vmatpush.bf16.msra.mxu0 %v2988
    %4242 = vmatmul.bf16.gmra.mxu0 %v4128
    %v4243 = vpop.f32.mrf.mxu0
    %v4244 = vadd.f32 %v3181, %v4243
    %v4245 = vpop.f32.mrf.mxu0
    %4246 = vdwg.mxu0
    %4247 = vmatpush.bf16.msra.mxu0 %v3078
    %4248 = vmatpush.bf16.msra.mxu0 %v3072
    %4249 = vmatpush.bf16.msra.mxu0 %v3066
    %4250 = vmatpush.bf16.msra.mxu0 %v3060
    %4251 = vmatpush.bf16.msra.mxu0 %v3054
    %4252 = vmatpush.bf16.msra.mxu0 %v3048
    %4253 = vmatpush.bf16.msra.mxu0 %v3042
    %4254 = vmatpush.bf16.msra.mxu0 %v3036
    %4255 = vmatmul.bf16.gmra.mxu0 %v4129
    %v4256 = vpop.f32.mrf.mxu0
    %v4257 = vadd.f32 %v4244, %v4256
    %v4258 = vpop.f32.mrf.mxu0
    %4259 = vdwg.mxu0
    %4260 = vmatpush.bf16.msra.mxu0 %v3031
    %4261 = vmatpush.bf16.msra.mxu0 %v3025
    %4262 = vmatpush.bf16.msra.mxu0 %v3019
    %4263 = vmatpush.bf16.msra.mxu0 %v3013
    %4264 = vmatpush.bf16.msra.mxu0 %v3007
    %4265 = vmatpush.bf16.msra.mxu0 %v3001
    %4266 = vmatpush.bf16.msra.mxu0 %v2995
    %4267 = vmatpush.bf16.msra.mxu0 %v2989
    %4268 = vmatmul.bf16.gmra.mxu0 %v4128
    %v4269 = vpop.f32.mrf.mxu0
    %v4270 = vadd.f32 %v3182, %v4269
    %v4271 = vpop.f32.mrf.mxu0
    %4272 = vdwg.mxu0
    %4273 = vmatpush.bf16.msra.mxu0 %v3079
    %4274 = vmatpush.bf16.msra.mxu0 %v3073
    %4275 = vmatpush.bf16.msra.mxu0 %v3067
    %4276 = vmatpush.bf16.msra.mxu0 %v3061
    %4277 = vmatpush.bf16.msra.mxu0 %v3055
    %4278 = vmatpush.bf16.msra.mxu0 %v3049
    %4279 = vmatpush.bf16.msra.mxu0 %v3043
    %4280 = vmatpush.bf16.msra.mxu0 %v3037
    %4281 = vmatmul.bf16.gmra.mxu0 %v4129
    %v4282 = vpop.f32.mrf.mxu0
    %v4283 = vadd.f32 %v4270, %v4282
    %v4284 = vpop.f32.mrf.mxu0
    %4285 = vdwg.mxu0
    %v4288 = vrot.slane %v4179, 7
    %v4289 = vsel %vm2061, %v4153, %v4288
    %v4291 = vadd.f32 %v4122, %v4289
    %v4292 = vxor.u32 %v4291, 2147483648
    %v4293 = vmul.f32 %v4292, 1.442695
    %v4294 = vpow.pop %v4293
    %v4295 = vadd.f32 %v4294, 1.0
    %v4296 = vrcp.pop %v4295
    %v4297 = vmul.f32 %v4295, %v4296
    %v4298 = vsub.f32 1.0, %v4297
    %v4299 = vmul.f32 %v4296, %v4298
    %v4300 = vadd.f32 %v4296, %v4299
    %vm4301 = vweird.f32 %v4295
    %vm4302 = vweird.f32 %v4296
    %vm4303 = vmor %vm4301, %vm4302
    %v4304 = vsel %vm4303, %v4296, %v4300
    %v4305 = vand.u32 2147483647, %v4295
    %vm4306 = vcmp.eq.f32.partialorder %v4305, 8.507059e+37
    %v4307 = vand.u32 %v4295, 2147483648
    %v4308 = vor.u32 1.1754944e-38, %v4307
    %v4309 = vsel %vm4306, %v4308, %v4304
    %v4310 = vmul.f32 1.0, %v4309
    %v4312 = vrot.slane %v4122, 2
    %v4316 = vrot.slane %v4231, 7
    %v4317 = vsel %vm2061, %v4205, %v4316
    %v4319 = vadd.f32 %v4312, %v4317
    %v4320 = vxor.u32 %v4319, 2147483648
    %v4321 = vmul.f32 %v4320, 1.442695
    %v4322 = vpow.pop %v4321
    %v4323 = vadd.f32 %v4322, 1.0
    %v4324 = vrcp.pop %v4323
    %v4325 = vmul.f32 %v4323, %v4324
    %v4326 = vsub.f32 1.0, %v4325
    %v4327 = vmul.f32 %v4324, %v4326
    %v4328 = vadd.f32 %v4324, %v4327
    %vm4329 = vweird.f32 %v4323
    %vm4330 = vweird.f32 %v4324
    %vm4331 = vmor %vm4329, %vm4330
    %v4332 = vsel %vm4331, %v4324, %v4328
    %v4333 = vand.u32 2147483647, %v4323
    %vm4334 = vcmp.eq.f32.partialorder %v4333, 8.507059e+37
    %v4335 = vand.u32 %v4323, 2147483648
    %v4336 = vor.u32 1.1754944e-38, %v4335
    %v4337 = vsel %vm4334, %v4336, %v4332
    %v4338 = vmul.f32 1.0, %v4337
    %v4341 = vrot.slane %v4283, 7
    %v4342 = vsel %vm2061, %v4257, %v4341
    %v4344 = vmul.f32 %v4310, %v4342
    %v4345 = vrot.slane %v4122, 4
    %v4347 = vadd.f32 %v4345, %v4344
    %v4348 = vtanh.pop %v4347
    %v4349 = vsub.f32 1.0, %v4338
    %v4350 = vmul.f32 %v4349, %v4348
    %v4351 = vmul.f32 %v4338, %v4118
    %v4352 = vadd.f32 %v4350, %v4351
    %s4353 = scalar_lea.vmem [#allocation2], 5
    %v4354 = vld [vmem:[%s4353] ss:$8 sm:$0xf]
    %v4355 = vld [vmem:[%s4353] ss:$8 sm:$0x30]
    %v4356 = vor.u32 %v4354, %v4355
    %v4358 = vperm.slane %v4352, 0
    %v4359 = vperm.slane %v4352, 1
    %v4362 = vpack.c.bf16 %v4358, %v4358
    %v4363 = vpack.c.bf16 %v4359, %v4359
    %4364 = vmatpush.bf16.msra.mxu0 %v3026
    %4365 = vmatpush.bf16.msra.mxu0 %v3020
    %4366 = vmatpush.bf16.msra.mxu0 %v3014
    %4367 = vmatpush.bf16.msra.mxu0 %v3008
    %4368 = vmatpush.bf16.msra.mxu0 %v3002
    %4369 = vmatpush.bf16.msra.mxu0 %v2996
    %4370 = vmatpush.bf16.msra.mxu0 %v2990
    %4371 = vmatpush.bf16.msra.mxu0 %v2984
    %4372 = vmatmul.bf16.gmra.mxu0 %v4362
    %v4373 = vpop.f32.mrf.mxu0
    %v4374 = vadd.f32 %v3177, %v4373
    %v4375 = vpop.f32.mrf.mxu0
    %4376 = vdwg.mxu0
    %4377 = vmatpush.bf16.msra.mxu0 %v3074
    %4378 = vmatpush.bf16.msra.mxu0 %v3068
    %4379 = vmatpush.bf16.msra.mxu0 %v3062
    %4380 = vmatpush.bf16.msra.mxu0 %v3056
    %4381 = vmatpush.bf16.msra.mxu0 %v3050
    %4382 = vmatpush.bf16.msra.mxu0 %v3044
    %4383 = vmatpush.bf16.msra.mxu0 %v3038
    %4384 = vmatpush.bf16.msra.mxu0 %v3032
    %4385 = vmatmul.bf16.gmra.mxu0 %v4363
    %v4386 = vpop.f32.mrf.mxu0
    %v4387 = vadd.f32 %v4374, %v4386
    %v4388 = vpop.f32.mrf.mxu0
    %4389 = vdwg.mxu0
    %4390 = vmatpush.bf16.msra.mxu0 %v3027
    %4391 = vmatpush.bf16.msra.mxu0 %v3021
    %4392 = vmatpush.bf16.msra.mxu0 %v3015
    %4393 = vmatpush.bf16.msra.mxu0 %v3009
    %4394 = vmatpush.bf16.msra.mxu0 %v3003
    %4395 = vmatpush.bf16.msra.mxu0 %v2997
    %4396 = vmatpush.bf16.msra.mxu0 %v2991
    %4397 = vmatpush.bf16.msra.mxu0 %v2985
    %4398 = vmatmul.bf16.gmra.mxu0 %v4362
    %v4399 = vpop.f32.mrf.mxu0
    %v4400 = vadd.f32 %v3178, %v4399
    %v4401 = vpop.f32.mrf.mxu0
    %4402 = vdwg.mxu0
    %4403 = vmatpush.bf16.msra.mxu0 %v3075
    %4404 = vmatpush.bf16.msra.mxu0 %v3069
    %4405 = vmatpush.bf16.msra.mxu0 %v3063
    %4406 = vmatpush.bf16.msra.mxu0 %v3057
    %4407 = vmatpush.bf16.msra.mxu0 %v3051
    %4408 = vmatpush.bf16.msra.mxu0 %v3045
    %4409 = vmatpush.bf16.msra.mxu0 %v3039
    %4410 = vmatpush.bf16.msra.mxu0 %v3033
    %4411 = vmatmul.bf16.gmra.mxu0 %v4363
    %v4412 = vpop.f32.mrf.mxu0
    %v4413 = vadd.f32 %v4400, %v4412
    %v4414 = vpop.f32.mrf.mxu0
    %4415 = vdwg.mxu0
    %4416 = vmatpush.bf16.msra.mxu0 %v3028
    %4417 = vmatpush.bf16.msra.mxu0 %v3022
    %4418 = vmatpush.bf16.msra.mxu0 %v3016
    %4419 = vmatpush.bf16.msra.mxu0 %v3010
    %4420 = vmatpush.bf16.msra.mxu0 %v3004
    %4421 = vmatpush.bf16.msra.mxu0 %v2998
    %4422 = vmatpush.bf16.msra.mxu0 %v2992
    %4423 = vmatpush.bf16.msra.mxu0 %v2986
    %4424 = vmatmul.bf16.gmra.mxu0 %v4362
    %v4425 = vpop.f32.mrf.mxu0
    %v4426 = vadd.f32 %v3179, %v4425
    %v4427 = vpop.f32.mrf.mxu0
    %4428 = vdwg.mxu0
    %4429 = vmatpush.bf16.msra.mxu0 %v3076
    %4430 = vmatpush.bf16.msra.mxu0 %v3070
    %4431 = vmatpush.bf16.msra.mxu0 %v3064
    %4432 = vmatpush.bf16.msra.mxu0 %v3058
    %4433 = vmatpush.bf16.msra.mxu0 %v3052
    %4434 = vmatpush.bf16.msra.mxu0 %v3046
    %4435 = vmatpush.bf16.msra.mxu0 %v3040
    %4436 = vmatpush.bf16.msra.mxu0 %v3034
    %4437 = vmatmul.bf16.gmra.mxu0 %v4363
    %v4438 = vpop.f32.mrf.mxu0
    %v4439 = vadd.f32 %v4426, %v4438
    %v4440 = vpop.f32.mrf.mxu0
    %4441 = vdwg.mxu0
    %4442 = vmatpush.bf16.msra.mxu0 %v3029
    %4443 = vmatpush.bf16.msra.mxu0 %v3023
    %4444 = vmatpush.bf16.msra.mxu0 %v3017
    %4445 = vmatpush.bf16.msra.mxu0 %v3011
    %4446 = vmatpush.bf16.msra.mxu0 %v3005
    %4447 = vmatpush.bf16.msra.mxu0 %v2999
    %4448 = vmatpush.bf16.msra.mxu0 %v2993
    %4449 = vmatpush.bf16.msra.mxu0 %v2987
    %4450 = vmatmul.bf16.gmra.mxu0 %v4362
    %v4451 = vpop.f32.mrf.mxu0
    %v4452 = vadd.f32 %v3180, %v4451
    %v4453 = vpop.f32.mrf.mxu0
    %4454 = vdwg.mxu0
    %4455 = vmatpush.bf16.msra.mxu0 %v3077
    %4456 = vmatpush.bf16.msra.mxu0 %v3071
    %4457 = vmatpush.bf16.msra.mxu0 %v3065
    %4458 = vmatpush.bf16.msra.mxu0 %v3059
    %4459 = vmatpush.bf16.msra.mxu0 %v3053
    %4460 = vmatpush.bf16.msra.mxu0 %v3047
    %4461 = vmatpush.bf16.msra.mxu0 %v3041
    %4462 = vmatpush.bf16.msra.mxu0 %v3035
    %4463 = vmatmul.bf16.gmra.mxu0 %v4363
    %v4464 = vpop.f32.mrf.mxu0
    %v4465 = vadd.f32 %v4452, %v4464
    %v4466 = vpop.f32.mrf.mxu0
    %4467 = vdwg.mxu0
    %4468 = vmatpush.bf16.msra.mxu0 %v3030
    %4469 = vmatpush.bf16.msra.mxu0 %v3024
    %4470 = vmatpush.bf16.msra.mxu0 %v3018
    %4471 = vmatpush.bf16.msra.mxu0 %v3012
    %4472 = vmatpush.bf16.msra.mxu0 %v3006
    %4473 = vmatpush.bf16.msra.mxu0 %v3000
    %4474 = vmatpush.bf16.msra.mxu0 %v2994
    %4475 = vmatpush.bf16.msra.mxu0 %v2988
    %4476 = vmatmul.bf16.gmra.mxu0 %v4362
    %v4477 = vpop.f32.mrf.mxu0
    %v4478 = vadd.f32 %v3181, %v4477
    %v4479 = vpop.f32.mrf.mxu0
    %4480 = vdwg.mxu0
    %4481 = vmatpush.bf16.msra.mxu0 %v3078
    %4482 = vmatpush.bf16.msra.mxu0 %v3072
    %4483 = vmatpush.bf16.msra.mxu0 %v3066
    %4484 = vmatpush.bf16.msra.mxu0 %v3060
    %4485 = vmatpush.bf16.msra.mxu0 %v3054
    %4486 = vmatpush.bf16.msra.mxu0 %v3048
    %4487 = vmatpush.bf16.msra.mxu0 %v3042
    %4488 = vmatpush.bf16.msra.mxu0 %v3036
    %4489 = vmatmul.bf16.gmra.mxu0 %v4363
    %v4490 = vpop.f32.mrf.mxu0
    %v4491 = vadd.f32 %v4478, %v4490
    %v4492 = vpop.f32.mrf.mxu0
    %4493 = vdwg.mxu0
    %4494 = vmatpush.bf16.msra.mxu0 %v3031
    %4495 = vmatpush.bf16.msra.mxu0 %v3025
    %4496 = vmatpush.bf16.msra.mxu0 %v3019
    %4497 = vmatpush.bf16.msra.mxu0 %v3013
    %4498 = vmatpush.bf16.msra.mxu0 %v3007
    %4499 = vmatpush.bf16.msra.mxu0 %v3001
    %4500 = vmatpush.bf16.msra.mxu0 %v2995
    %4501 = vmatpush.bf16.msra.mxu0 %v2989
    %4502 = vmatmul.bf16.gmra.mxu0 %v4362
    %v4503 = vpop.f32.mrf.mxu0
    %v4504 = vadd.f32 %v3182, %v4503
    %v4505 = vpop.f32.mrf.mxu0
    %4506 = vdwg.mxu0
    %4507 = vmatpush.bf16.msra.mxu0 %v3079
    %4508 = vmatpush.bf16.msra.mxu0 %v3073
    %4509 = vmatpush.bf16.msra.mxu0 %v3067
    %4510 = vmatpush.bf16.msra.mxu0 %v3061
    %4511 = vmatpush.bf16.msra.mxu0 %v3055
    %4512 = vmatpush.bf16.msra.mxu0 %v3049
    %4513 = vmatpush.bf16.msra.mxu0 %v3043
    %4514 = vmatpush.bf16.msra.mxu0 %v3037
    %4515 = vmatmul.bf16.gmra.mxu0 %v4363
    %v4516 = vpop.f32.mrf.mxu0
    %v4517 = vadd.f32 %v4504, %v4516
    %v4518 = vpop.f32.mrf.mxu0
    %4519 = vdwg.mxu0
    %v4522 = vrot.slane %v4413, 7
    %v4523 = vsel %vm2061, %v4387, %v4522
    %v4525 = vadd.f32 %v4356, %v4523
    %v4526 = vxor.u32 %v4525, 2147483648
    %v4527 = vmul.f32 %v4526, 1.442695
    %v4528 = vpow.pop %v4527
    %v4529 = vadd.f32 %v4528, 1.0
    %v4530 = vrcp.pop %v4529
    %v4531 = vmul.f32 %v4529, %v4530
    %v4532 = vsub.f32 1.0, %v4531
    %v4533 = vmul.f32 %v4530, %v4532
    %v4534 = vadd.f32 %v4530, %v4533
    %vm4535 = vweird.f32 %v4529
    %vm4536 = vweird.f32 %v4530
    %vm4537 = vmor %vm4535, %vm4536
    %v4538 = vsel %vm4537, %v4530, %v4534
    %v4539 = vand.u32 2147483647, %v4529
    %vm4540 = vcmp.eq.f32.partialorder %v4539, 8.507059e+37
    %v4541 = vand.u32 %v4529, 2147483648
    %v4542 = vor.u32 1.1754944e-38, %v4541
    %v4543 = vsel %vm4540, %v4542, %v4538
    %v4544 = vmul.f32 1.0, %v4543
    %v4546 = vrot.slane %v4356, 2
    %v4550 = vrot.slane %v4465, 7
    %v4551 = vsel %vm2061, %v4439, %v4550
    %v4553 = vadd.f32 %v4546, %v4551
    %v4554 = vxor.u32 %v4553, 2147483648
    %v4555 = vmul.f32 %v4554, 1.442695
    %v4556 = vpow.pop %v4555
    %v4557 = vadd.f32 %v4556, 1.0
    %v4558 = vrcp.pop %v4557
    %v4559 = vmul.f32 %v4557, %v4558
    %v4560 = vsub.f32 1.0, %v4559
    %v4561 = vmul.f32 %v4558, %v4560
    %v4562 = vadd.f32 %v4558, %v4561
    %vm4563 = vweird.f32 %v4557
    %vm4564 = vweird.f32 %v4558
    %vm4565 = vmor %vm4563, %vm4564
    %v4566 = vsel %vm4565, %v4558, %v4562
    %v4567 = vand.u32 2147483647, %v4557
    %vm4568 = vcmp.eq.f32.partialorder %v4567, 8.507059e+37
    %v4569 = vand.u32 %v4557, 2147483648
    %v4570 = vor.u32 1.1754944e-38, %v4569
    %v4571 = vsel %vm4568, %v4570, %v4566
    %v4572 = vmul.f32 1.0, %v4571
    %v4575 = vrot.slane %v4517, 7
    %v4576 = vsel %vm2061, %v4491, %v4575
    %v4578 = vmul.f32 %v4544, %v4576
    %v4579 = vrot.slane %v4356, 4
    %v4581 = vadd.f32 %v4579, %v4578
    %v4582 = vtanh.pop %v4581
    %v4583 = vsub.f32 1.0, %v4572
    %v4584 = vmul.f32 %v4583, %v4582
    %v4585 = vmul.f32 %v4572, %v4352
    %v4586 = vadd.f32 %v4584, %v4585
    %s4587 = scalar_lea.vmem [#allocation2], 6
    %v4588 = vld [vmem:[%s4587] ss:$8 sm:$0xf]
    %v4589 = vld [vmem:[%s4587] ss:$8 sm:$0x30]
    %v4590 = vor.u32 %v4588, %v4589
    %v4592 = vperm.slane %v4586, 0
    %v4593 = vperm.slane %v4586, 1
    %v4596 = vpack.c.bf16 %v4592, %v4592
    %v4597 = vpack.c.bf16 %v4593, %v4593
    %4598 = vmatpush.bf16.msra.mxu0 %v3026
    %4599 = vmatpush.bf16.msra.mxu0 %v3020
    %4600 = vmatpush.bf16.msra.mxu0 %v3014
    %4601 = vmatpush.bf16.msra.mxu0 %v3008
    %4602 = vmatpush.bf16.msra.mxu0 %v3002
    %4603 = vmatpush.bf16.msra.mxu0 %v2996
    %4604 = vmatpush.bf16.msra.mxu0 %v2990
    %4605 = vmatpush.bf16.msra.mxu0 %v2984
    %4606 = vmatmul.bf16.gmra.mxu0 %v4596
    %v4607 = vpop.f32.mrf.mxu0
    %v4608 = vadd.f32 %v3177, %v4607
    %v4609 = vpop.f32.mrf.mxu0
    %4610 = vdwg.mxu0
    %4611 = vmatpush.bf16.msra.mxu0 %v3074
    %4612 = vmatpush.bf16.msra.mxu0 %v3068
    %4613 = vmatpush.bf16.msra.mxu0 %v3062
    %4614 = vmatpush.bf16.msra.mxu0 %v3056
    %4615 = vmatpush.bf16.msra.mxu0 %v3050
    %4616 = vmatpush.bf16.msra.mxu0 %v3044
    %4617 = vmatpush.bf16.msra.mxu0 %v3038
    %4618 = vmatpush.bf16.msra.mxu0 %v3032
    %4619 = vmatmul.bf16.gmra.mxu0 %v4597
    %v4620 = vpop.f32.mrf.mxu0
    %v4621 = vadd.f32 %v4608, %v4620
    %v4622 = vpop.f32.mrf.mxu0
    %4623 = vdwg.mxu0
    %4624 = vmatpush.bf16.msra.mxu0 %v3027
    %4625 = vmatpush.bf16.msra.mxu0 %v3021
    %4626 = vmatpush.bf16.msra.mxu0 %v3015
    %4627 = vmatpush.bf16.msra.mxu0 %v3009
    %4628 = vmatpush.bf16.msra.mxu0 %v3003
    %4629 = vmatpush.bf16.msra.mxu0 %v2997
    %4630 = vmatpush.bf16.msra.mxu0 %v2991
    %4631 = vmatpush.bf16.msra.mxu0 %v2985
    %4632 = vmatmul.bf16.gmra.mxu0 %v4596
    %v4633 = vpop.f32.mrf.mxu0
    %v4634 = vadd.f32 %v3178, %v4633
    %v4635 = vpop.f32.mrf.mxu0
    %4636 = vdwg.mxu0
    %4637 = vmatpush.bf16.msra.mxu0 %v3075
    %4638 = vmatpush.bf16.msra.mxu0 %v3069
    %4639 = vmatpush.bf16.msra.mxu0 %v3063
    %4640 = vmatpush.bf16.msra.mxu0 %v3057
    %4641 = vmatpush.bf16.msra.mxu0 %v3051
    %4642 = vmatpush.bf16.msra.mxu0 %v3045
    %4643 = vmatpush.bf16.msra.mxu0 %v3039
    %4644 = vmatpush.bf16.msra.mxu0 %v3033
    %4645 = vmatmul.bf16.gmra.mxu0 %v4597
    %v4646 = vpop.f32.mrf.mxu0
    %v4647 = vadd.f32 %v4634, %v4646
    %v4648 = vpop.f32.mrf.mxu0
    %4649 = vdwg.mxu0
    %4650 = vmatpush.bf16.msra.mxu0 %v3028
    %4651 = vmatpush.bf16.msra.mxu0 %v3022
    %4652 = vmatpush.bf16.msra.mxu0 %v3016
    %4653 = vmatpush.bf16.msra.mxu0 %v3010
    %4654 = vmatpush.bf16.msra.mxu0 %v3004
    %4655 = vmatpush.bf16.msra.mxu0 %v2998
    %4656 = vmatpush.bf16.msra.mxu0 %v2992
    %4657 = vmatpush.bf16.msra.mxu0 %v2986
    %4658 = vmatmul.bf16.gmra.mxu0 %v4596
    %v4659 = vpop.f32.mrf.mxu0
    %v4660 = vadd.f32 %v3179, %v4659
    %v4661 = vpop.f32.mrf.mxu0
    %4662 = vdwg.mxu0
    %4663 = vmatpush.bf16.msra.mxu0 %v3076
    %4664 = vmatpush.bf16.msra.mxu0 %v3070
    %4665 = vmatpush.bf16.msra.mxu0 %v3064
    %4666 = vmatpush.bf16.msra.mxu0 %v3058
    %4667 = vmatpush.bf16.msra.mxu0 %v3052
    %4668 = vmatpush.bf16.msra.mxu0 %v3046
    %4669 = vmatpush.bf16.msra.mxu0 %v3040
    %4670 = vmatpush.bf16.msra.mxu0 %v3034
    %4671 = vmatmul.bf16.gmra.mxu0 %v4597
    %v4672 = vpop.f32.mrf.mxu0
    %v4673 = vadd.f32 %v4660, %v4672
    %v4674 = vpop.f32.mrf.mxu0
    %4675 = vdwg.mxu0
    %4676 = vmatpush.bf16.msra.mxu0 %v3029
    %4677 = vmatpush.bf16.msra.mxu0 %v3023
    %4678 = vmatpush.bf16.msra.mxu0 %v3017
    %4679 = vmatpush.bf16.msra.mxu0 %v3011
    %4680 = vmatpush.bf16.msra.mxu0 %v3005
    %4681 = vmatpush.bf16.msra.mxu0 %v2999
    %4682 = vmatpush.bf16.msra.mxu0 %v2993
    %4683 = vmatpush.bf16.msra.mxu0 %v2987
    %4684 = vmatmul.bf16.gmra.mxu0 %v4596
    %v4685 = vpop.f32.mrf.mxu0
    %v4686 = vadd.f32 %v3180, %v4685
    %v4687 = vpop.f32.mrf.mxu0
    %4688 = vdwg.mxu0
    %4689 = vmatpush.bf16.msra.mxu0 %v3077
    %4690 = vmatpush.bf16.msra.mxu0 %v3071
    %4691 = vmatpush.bf16.msra.mxu0 %v3065
    %4692 = vmatpush.bf16.msra.mxu0 %v3059
    %4693 = vmatpush.bf16.msra.mxu0 %v3053
    %4694 = vmatpush.bf16.msra.mxu0 %v3047
    %4695 = vmatpush.bf16.msra.mxu0 %v3041
    %4696 = vmatpush.bf16.msra.mxu0 %v3035
    %4697 = vmatmul.bf16.gmra.mxu0 %v4597
    %v4698 = vpop.f32.mrf.mxu0
    %v4699 = vadd.f32 %v4686, %v4698
    %v4700 = vpop.f32.mrf.mxu0
    %4701 = vdwg.mxu0
    %4702 = vmatpush.bf16.msra.mxu0 %v3030
    %4703 = vmatpush.bf16.msra.mxu0 %v3024
    %4704 = vmatpush.bf16.msra.mxu0 %v3018
    %4705 = vmatpush.bf16.msra.mxu0 %v3012
    %4706 = vmatpush.bf16.msra.mxu0 %v3006
    %4707 = vmatpush.bf16.msra.mxu0 %v3000
    %4708 = vmatpush.bf16.msra.mxu0 %v2994
    %4709 = vmatpush.bf16.msra.mxu0 %v2988
    %4710 = vmatmul.bf16.gmra.mxu0 %v4596
    %v4711 = vpop.f32.mrf.mxu0
    %v4712 = vadd.f32 %v3181, %v4711
    %v4713 = vpop.f32.mrf.mxu0
    %4714 = vdwg.mxu0
    %4715 = vmatpush.bf16.msra.mxu0 %v3078
    %4716 = vmatpush.bf16.msra.mxu0 %v3072
    %4717 = vmatpush.bf16.msra.mxu0 %v3066
    %4718 = vmatpush.bf16.msra.mxu0 %v3060
    %4719 = vmatpush.bf16.msra.mxu0 %v3054
    %4720 = vmatpush.bf16.msra.mxu0 %v3048
    %4721 = vmatpush.bf16.msra.mxu0 %v3042
    %4722 = vmatpush.bf16.msra.mxu0 %v3036
    %4723 = vmatmul.bf16.gmra.mxu0 %v4597
    %v4724 = vpop.f32.mrf.mxu0
    %v4725 = vadd.f32 %v4712, %v4724
    %v4726 = vpop.f32.mrf.mxu0
    %4727 = vdwg.mxu0
    %4728 = vmatpush.bf16.msra.mxu0 %v3031
    %4729 = vmatpush.bf16.msra.mxu0 %v3025
    %4730 = vmatpush.bf16.msra.mxu0 %v3019
    %4731 = vmatpush.bf16.msra.mxu0 %v3013
    %4732 = vmatpush.bf16.msra.mxu0 %v3007
    %4733 = vmatpush.bf16.msra.mxu0 %v3001
    %4734 = vmatpush.bf16.msra.mxu0 %v2995
    %4735 = vmatpush.bf16.msra.mxu0 %v2989
    %4736 = vmatmul.bf16.gmra.mxu0 %v4596
    %v4737 = vpop.f32.mrf.mxu0
    %v4738 = vadd.f32 %v3182, %v4737
    %v4739 = vpop.f32.mrf.mxu0
    %4740 = vdwg.mxu0
    %4741 = vmatpush.bf16.msra.mxu0 %v3079
    %4742 = vmatpush.bf16.msra.mxu0 %v3073
    %4743 = vmatpush.bf16.msra.mxu0 %v3067
    %4744 = vmatpush.bf16.msra.mxu0 %v3061
    %4745 = vmatpush.bf16.msra.mxu0 %v3055
    %4746 = vmatpush.bf16.msra.mxu0 %v3049
    %4747 = vmatpush.bf16.msra.mxu0 %v3043
    %4748 = vmatpush.bf16.msra.mxu0 %v3037
    %4749 = vmatmul.bf16.gmra.mxu0 %v4597
    %v4750 = vpop.f32.mrf.mxu0
    %v4751 = vadd.f32 %v4738, %v4750
    %v4752 = vpop.f32.mrf.mxu0
    %4753 = vdwg.mxu0
    %v4756 = vrot.slane %v4647, 7
    %v4757 = vsel %vm2061, %v4621, %v4756
    %v4759 = vadd.f32 %v4590, %v4757
    %v4760 = vxor.u32 %v4759, 2147483648
    %v4761 = vmul.f32 %v4760, 1.442695
    %v4762 = vpow.pop %v4761
    %v4763 = vadd.f32 %v4762, 1.0
    %v4764 = vrcp.pop %v4763
    %v4765 = vmul.f32 %v4763, %v4764
    %v4766 = vsub.f32 1.0, %v4765
    %v4767 = vmul.f32 %v4764, %v4766
    %v4768 = vadd.f32 %v4764, %v4767
    %vm4769 = vweird.f32 %v4763
    %vm4770 = vweird.f32 %v4764
    %vm4771 = vmor %vm4769, %vm4770
    %v4772 = vsel %vm4771, %v4764, %v4768
    %v4773 = vand.u32 2147483647, %v4763
    %vm4774 = vcmp.eq.f32.partialorder %v4773, 8.507059e+37
    %v4775 = vand.u32 %v4763, 2147483648
    %v4776 = vor.u32 1.1754944e-38, %v4775
    %v4777 = vsel %vm4774, %v4776, %v4772
    %v4778 = vmul.f32 1.0, %v4777
    %v4780 = vrot.slane %v4590, 2
    %v4784 = vrot.slane %v4699, 7
    %v4785 = vsel %vm2061, %v4673, %v4784
    %v4787 = vadd.f32 %v4780, %v4785
    %v4788 = vxor.u32 %v4787, 2147483648
    %v4789 = vmul.f32 %v4788, 1.442695
    %v4790 = vpow.pop %v4789
    %v4791 = vadd.f32 %v4790, 1.0
    %v4792 = vrcp.pop %v4791
    %v4793 = vmul.f32 %v4791, %v4792
    %v4794 = vsub.f32 1.0, %v4793
    %v4795 = vmul.f32 %v4792, %v4794
    %v4796 = vadd.f32 %v4792, %v4795
    %vm4797 = vweird.f32 %v4791
    %vm4798 = vweird.f32 %v4792
    %vm4799 = vmor %vm4797, %vm4798
    %v4800 = vsel %vm4799, %v4792, %v4796
    %v4801 = vand.u32 2147483647, %v4791
    %vm4802 = vcmp.eq.f32.partialorder %v4801, 8.507059e+37
    %v4803 = vand.u32 %v4791, 2147483648
    %v4804 = vor.u32 1.1754944e-38, %v4803
    %v4805 = vsel %vm4802, %v4804, %v4800
    %v4806 = vmul.f32 1.0, %v4805
    %v4809 = vrot.slane %v4751, 7
    %v4810 = vsel %vm2061, %v4725, %v4809
    %v4812 = vmul.f32 %v4778, %v4810
    %v4813 = vrot.slane %v4590, 4
    %v4815 = vadd.f32 %v4813, %v4812
    %v4816 = vtanh.pop %v4815
    %v4817 = vsub.f32 1.0, %v4806
    %v4818 = vmul.f32 %v4817, %v4816
    %v4819 = vmul.f32 %v4806, %v4586
    %v4820 = vadd.f32 %v4818, %v4819
    %s4821 = scalar_lea.vmem [#allocation2], 7
    %v4822 = vld [vmem:[%s4821] ss:$8 sm:$0xf]
    %v4823 = vld [vmem:[%s4821] ss:$8 sm:$0x30]
    %v4824 = vor.u32 %v4822, %v4823
    %v4826 = vperm.slane %v4820, 0
    %v4827 = vperm.slane %v4820, 1
    %v4830 = vpack.c.bf16 %v4826, %v4826
    %v4831 = vpack.c.bf16 %v4827, %v4827
    %4832 = vmatpush.bf16.msra.mxu0 %v3026
    %4833 = vmatpush.bf16.msra.mxu0 %v3020
    %4834 = vmatpush.bf16.msra.mxu0 %v3014
    %4835 = vmatpush.bf16.msra.mxu0 %v3008
    %4836 = vmatpush.bf16.msra.mxu0 %v3002
    %4837 = vmatpush.bf16.msra.mxu0 %v2996
    %4838 = vmatpush.bf16.msra.mxu0 %v2990
    %4839 = vmatpush.bf16.msra.mxu0 %v2984
    %4840 = vmatmul.bf16.gmra.mxu0 %v4830
    %v4841 = vpop.f32.mrf.mxu0
    %v4842 = vadd.f32 %v3177, %v4841
    %v4843 = vpop.f32.mrf.mxu0
    %4844 = vdwg.mxu0
    %4845 = vmatpush.bf16.msra.mxu0 %v3074
    %4846 = vmatpush.bf16.msra.mxu0 %v3068
    %4847 = vmatpush.bf16.msra.mxu0 %v3062
    %4848 = vmatpush.bf16.msra.mxu0 %v3056
    %4849 = vmatpush.bf16.msra.mxu0 %v3050
    %4850 = vmatpush.bf16.msra.mxu0 %v3044
    %4851 = vmatpush.bf16.msra.mxu0 %v3038
    %4852 = vmatpush.bf16.msra.mxu0 %v3032
    %4853 = vmatmul.bf16.gmra.mxu0 %v4831
    %v4854 = vpop.f32.mrf.mxu0
    %v4855 = vadd.f32 %v4842, %v4854
    %v4856 = vpop.f32.mrf.mxu0
    %4857 = vdwg.mxu0
    %4858 = vmatpush.bf16.msra.mxu0 %v3027
    %4859 = vmatpush.bf16.msra.mxu0 %v3021
    %4860 = vmatpush.bf16.msra.mxu0 %v3015
    %4861 = vmatpush.bf16.msra.mxu0 %v3009
    %4862 = vmatpush.bf16.msra.mxu0 %v3003
    %4863 = vmatpush.bf16.msra.mxu0 %v2997
    %4864 = vmatpush.bf16.msra.mxu0 %v2991
    %4865 = vmatpush.bf16.msra.mxu0 %v2985
    %4866 = vmatmul.bf16.gmra.mxu0 %v4830
    %v4867 = vpop.f32.mrf.mxu0
    %v4868 = vadd.f32 %v3178, %v4867
    %v4869 = vpop.f32.mrf.mxu0
    %4870 = vdwg.mxu0
    %4871 = vmatpush.bf16.msra.mxu0 %v3075
    %4872 = vmatpush.bf16.msra.mxu0 %v3069
    %4873 = vmatpush.bf16.msra.mxu0 %v3063
    %4874 = vmatpush.bf16.msra.mxu0 %v3057
    %4875 = vmatpush.bf16.msra.mxu0 %v3051
    %4876 = vmatpush.bf16.msra.mxu0 %v3045
    %4877 = vmatpush.bf16.msra.mxu0 %v3039
    %4878 = vmatpush.bf16.msra.mxu0 %v3033
    %4879 = vmatmul.bf16.gmra.mxu0 %v4831
    %v4880 = vpop.f32.mrf.mxu0
    %v4881 = vadd.f32 %v4868, %v4880
    %v4882 = vpop.f32.mrf.mxu0
    %4883 = vdwg.mxu0
    %4884 = vmatpush.bf16.msra.mxu0 %v3028
    %4885 = vmatpush.bf16.msra.mxu0 %v3022
    %4886 = vmatpush.bf16.msra.mxu0 %v3016
    %4887 = vmatpush.bf16.msra.mxu0 %v3010
    %4888 = vmatpush.bf16.msra.mxu0 %v3004
    %4889 = vmatpush.bf16.msra.mxu0 %v2998
    %4890 = vmatpush.bf16.msra.mxu0 %v2992
    %4891 = vmatpush.bf16.msra.mxu0 %v2986
    %4892 = vmatmul.bf16.gmra.mxu0 %v4830
    %v4893 = vpop.f32.mrf.mxu0
    %v4894 = vadd.f32 %v3179, %v4893
    %v4895 = vpop.f32.mrf.mxu0
    %4896 = vdwg.mxu0
    %4897 = vmatpush.bf16.msra.mxu0 %v3076
    %4898 = vmatpush.bf16.msra.mxu0 %v3070
    %4899 = vmatpush.bf16.msra.mxu0 %v3064
    %4900 = vmatpush.bf16.msra.mxu0 %v3058
    %4901 = vmatpush.bf16.msra.mxu0 %v3052
    %4902 = vmatpush.bf16.msra.mxu0 %v3046
    %4903 = vmatpush.bf16.msra.mxu0 %v3040
    %4904 = vmatpush.bf16.msra.mxu0 %v3034
    %4905 = vmatmul.bf16.gmra.mxu0 %v4831
    %v4906 = vpop.f32.mrf.mxu0
    %v4907 = vadd.f32 %v4894, %v4906
    %v4908 = vpop.f32.mrf.mxu0
    %4909 = vdwg.mxu0
    %4910 = vmatpush.bf16.msra.mxu0 %v3029
    %4911 = vmatpush.bf16.msra.mxu0 %v3023
    %4912 = vmatpush.bf16.msra.mxu0 %v3017
    %4913 = vmatpush.bf16.msra.mxu0 %v3011
    %4914 = vmatpush.bf16.msra.mxu0 %v3005
    %4915 = vmatpush.bf16.msra.mxu0 %v2999
    %4916 = vmatpush.bf16.msra.mxu0 %v2993
    %4917 = vmatpush.bf16.msra.mxu0 %v2987
    %4918 = vmatmul.bf16.gmra.mxu0 %v4830
    %v4919 = vpop.f32.mrf.mxu0
    %v4920 = vadd.f32 %v3180, %v4919
    %v4921 = vpop.f32.mrf.mxu0
    %4922 = vdwg.mxu0
    %4923 = vmatpush.bf16.msra.mxu0 %v3077
    %4924 = vmatpush.bf16.msra.mxu0 %v3071
    %4925 = vmatpush.bf16.msra.mxu0 %v3065
    %4926 = vmatpush.bf16.msra.mxu0 %v3059
    %4927 = vmatpush.bf16.msra.mxu0 %v3053
    %4928 = vmatpush.bf16.msra.mxu0 %v3047
    %4929 = vmatpush.bf16.msra.mxu0 %v3041
    %4930 = vmatpush.bf16.msra.mxu0 %v3035
    %4931 = vmatmul.bf16.gmra.mxu0 %v4831
    %v4932 = vpop.f32.mrf.mxu0
    %v4933 = vadd.f32 %v4920, %v4932
    %v4934 = vpop.f32.mrf.mxu0
    %4935 = vdwg.mxu0
    %4936 = vmatpush.bf16.msra.mxu0 %v3030
    %4937 = vmatpush.bf16.msra.mxu0 %v3024
    %4938 = vmatpush.bf16.msra.mxu0 %v3018
    %4939 = vmatpush.bf16.msra.mxu0 %v3012
    %4940 = vmatpush.bf16.msra.mxu0 %v3006
    %4941 = vmatpush.bf16.msra.mxu0 %v3000
    %4942 = vmatpush.bf16.msra.mxu0 %v2994
    %4943 = vmatpush.bf16.msra.mxu0 %v2988
    %4944 = vmatmul.bf16.gmra.mxu0 %v4830
    %v4945 = vpop.f32.mrf.mxu0
    %v4946 = vadd.f32 %v3181, %v4945
    %v4947 = vpop.f32.mrf.mxu0
    %4948 = vdwg.mxu0
    %4949 = vmatpush.bf16.msra.mxu0 %v3078
    %4950 = vmatpush.bf16.msra.mxu0 %v3072
    %4951 = vmatpush.bf16.msra.mxu0 %v3066
    %4952 = vmatpush.bf16.msra.mxu0 %v3060
    %4953 = vmatpush.bf16.msra.mxu0 %v3054
    %4954 = vmatpush.bf16.msra.mxu0 %v3048
    %4955 = vmatpush.bf16.msra.mxu0 %v3042
    %4956 = vmatpush.bf16.msra.mxu0 %v3036
    %4957 = vmatmul.bf16.gmra.mxu0 %v4831
    %v4958 = vpop.f32.mrf.mxu0
    %v4959 = vadd.f32 %v4946, %v4958
    %v4960 = vpop.f32.mrf.mxu0
    %4961 = vdwg.mxu0
    %4962 = vmatpush.bf16.msra.mxu0 %v3031
    %4963 = vmatpush.bf16.msra.mxu0 %v3025
    %4964 = vmatpush.bf16.msra.mxu0 %v3019
    %4965 = vmatpush.bf16.msra.mxu0 %v3013
    %4966 = vmatpush.bf16.msra.mxu0 %v3007
    %4967 = vmatpush.bf16.msra.mxu0 %v3001
    %4968 = vmatpush.bf16.msra.mxu0 %v2995
    %4969 = vmatpush.bf16.msra.mxu0 %v2989
    %4970 = vmatmul.bf16.gmra.mxu0 %v4830
    %v4971 = vpop.f32.mrf.mxu0
    %v4972 = vadd.f32 %v3182, %v4971
    %v4973 = vpop.f32.mrf.mxu0
    %4974 = vdwg.mxu0
    %4975 = vmatpush.bf16.msra.mxu0 %v3079
    %4976 = vmatpush.bf16.msra.mxu0 %v3073
    %4977 = vmatpush.bf16.msra.mxu0 %v3067
    %4978 = vmatpush.bf16.msra.mxu0 %v3061
    %4979 = vmatpush.bf16.msra.mxu0 %v3055
    %4980 = vmatpush.bf16.msra.mxu0 %v3049
    %4981 = vmatpush.bf16.msra.mxu0 %v3043
    %4982 = vmatpush.bf16.msra.mxu0 %v3037
    %4983 = vmatmul.bf16.gmra.mxu0 %v4831
    %v4984 = vpop.f32.mrf.mxu0
    %v4985 = vadd.f32 %v4972, %v4984
    %v4986 = vpop.f32.mrf.mxu0
    %4987 = vdwg.mxu0
    %v4990 = vrot.slane %v4881, 7
    %v4991 = vsel %vm2061, %v4855, %v4990
    %v4993 = vadd.f32 %v4824, %v4991
    %v4994 = vxor.u32 %v4993, 2147483648
    %v4995 = vmul.f32 %v4994, 1.442695
    %v4996 = vpow.pop %v4995
    %v4997 = vadd.f32 %v4996, 1.0
    %v4998 = vrcp.pop %v4997
    %v4999 = vmul.f32 %v4997, %v4998
    %v5000 = vsub.f32 1.0, %v4999
    %v5001 = vmul.f32 %v4998, %v5000
    %v5002 = vadd.f32 %v4998, %v5001
    %vm5003 = vweird.f32 %v4997
    %vm5004 = vweird.f32 %v4998
    %vm5005 = vmor %vm5003, %vm5004
    %v5006 = vsel %vm5005, %v4998, %v5002
    %v5007 = vand.u32 2147483647, %v4997
    %vm5008 = vcmp.eq.f32.partialorder %v5007, 8.507059e+37
    %v5009 = vand.u32 %v4997, 2147483648
    %v5010 = vor.u32 1.1754944e-38, %v5009
    %v5011 = vsel %vm5008, %v5010, %v5006
    %v5012 = vmul.f32 1.0, %v5011
    %v5014 = vrot.slane %v4824, 2
    %v5018 = vrot.slane %v4933, 7
    %v5019 = vsel %vm2061, %v4907, %v5018
    %v5021 = vadd.f32 %v5014, %v5019
    %v5022 = vxor.u32 %v5021, 2147483648
    %v5023 = vmul.f32 %v5022, 1.442695
    %v5024 = vpow.pop %v5023
    %v5025 = vadd.f32 %v5024, 1.0
    %v5026 = vrcp.pop %v5025
    %v5027 = vmul.f32 %v5025, %v5026
    %v5028 = vsub.f32 1.0, %v5027
    %v5029 = vmul.f32 %v5026, %v5028
    %v5030 = vadd.f32 %v5026, %v5029
    %vm5031 = vweird.f32 %v5025
    %vm5032 = vweird.f32 %v5026
    %vm5033 = vmor %vm5031, %vm5032
    %v5034 = vsel %vm5033, %v5026, %v5030
    %v5035 = vand.u32 2147483647, %v5025
    %vm5036 = vcmp.eq.f32.partialorder %v5035, 8.507059e+37
    %v5037 = vand.u32 %v5025, 2147483648
    %v5038 = vor.u32 1.1754944e-38, %v5037
    %v5039 = vsel %vm5036, %v5038, %v5034
    %v5040 = vmul.f32 1.0, %v5039
    %v5043 = vrot.slane %v4985, 7
    %v5044 = vsel %vm2061, %v4959, %v5043
    %v5046 = vmul.f32 %v5012, %v5044
    %v5047 = vrot.slane %v4824, 4
    %v5049 = vadd.f32 %v5047, %v5046
    %v5050 = vtanh.pop %v5049
    %v5051 = vsub.f32 1.0, %v5040
    %v5052 = vmul.f32 %v5051, %v5050
    %v5053 = vmul.f32 %v5040, %v4820
    %v5054 = vadd.f32 %v5052, %v5053
    %v5056 = vperm.slane %v5054, 0
    %v5057 = vperm.slane %v5054, 1
    %v5060 = vsel %vm2061, %v3422, %v3656
    %v5061 = vsel %vm2061, %v3423, %v3657
    %vm5062 = vcmask 1041408
    %v5063 = vsel %vm5062, %v5060, %v3890
    %v5064 = vsel %vm5062, %v5061, %v3891
    %vm5065 = vcmask 1042432
    %v5066 = vsel %vm5065, %v5063, %v4124
    %v5067 = vsel %vm5065, %v5064, %v4125
    %vm5068 = vcmask 1043456
    %v5069 = vsel %vm5068, %v5066, %v4358
    %v5070 = vsel %vm5068, %v5067, %v4359
    %vm5071 = vcmask 1044480
    %v5072 = vsel %vm5071, %v5069, %v4592
    %v5073 = vsel %vm5071, %v5070, %v4593
    %vm5074 = vcmask 1045504
    %v5075 = vsel %vm5074, %v5072, %v4826
    %v5076 = vsel %vm5074, %v5073, %v4827
    %vm5077 = vcmask 1046528
    %v5078 = vsel %vm5077, %v5075, %v5056
    %v5079 = vsel %vm5077, %v5076, %v5057
    %v5080 = vpack.c.bf16 %v5078, %v5078
    %v5081 = vpack.c.bf16 %v5079, %v5079
    %v5082 = vld [vmem:[#allocation18] sm:$0xff]
    %v5083 = vld [vmem:[#allocation18 + $0x8] sm:$0xff]
    %v5084 = vld [vmem:[#allocation18 + $0x10] sm:$0xff]
    %v5085 = vld [vmem:[#allocation18 + $0x18] sm:$0xff]
    %v5086 = vld [vmem:[#allocation18 + $0x20] sm:$0xff]
    %v5087 = vld [vmem:[#allocation18 + $0x28] sm:$0xff]
    %v5088 = vld [vmem:[#allocation18 + $0x30] sm:$0xff]
    %v5089 = vld [vmem:[#allocation18 + $0x38] sm:$0xff]
    %v5090 = vld [vmem:[#allocation18 + $0x40] sm:$0xff]
    %v5091 = vld [vmem:[#allocation18 + $0x48] sm:$0xff]
    %v5092 = vld [vmem:[#allocation18 + $0x50] sm:$0xff]
    %v5093 = vld [vmem:[#allocation18 + $0x58] sm:$0xff]
    %v5094 = vld [vmem:[#allocation18 + $0x60] sm:$0xff]
    %v5095 = vld [vmem:[#allocation18 + $0x68] sm:$0xff]
    %v5096 = vld [vmem:[#allocation18 + $0x70] sm:$0xff]
    %v5097 = vld [vmem:[#allocation18 + $0x78] sm:$0xff]
    %v5098 = vld [vmem:[#allocation18 + $0x80] sm:$0xff]
    %v5099 = vld [vmem:[#allocation18 + $0x88] sm:$0xff]
    %v5100 = vld [vmem:[#allocation18 + $0x90] sm:$0xff]
    %v5101 = vld [vmem:[#allocation18 + $0x98] sm:$0xff]
    %v5102 = vld [vmem:[#allocation18 + $0xa0] sm:$0xff]
    %v5103 = vld [vmem:[#allocation18 + $0xa8] sm:$0xff]
    %v5104 = vld [vmem:[#allocation18 + $0xb0] sm:$0xff]
    %v5105 = vld [vmem:[#allocation18 + $0xb8] sm:$0xff]
    %v5106 = vld [vmem:[#allocation18 + $0xc0] sm:$0xff]
    %v5107 = vld [vmem:[#allocation18 + $0xc8] sm:$0xff]
    %v5108 = vld [vmem:[#allocation18 + $0xd0] sm:$0xff]
    %v5109 = vld [vmem:[#allocation18 + $0xd8] sm:$0xff]
    %v5110 = vld [vmem:[#allocation18 + $0xe0] sm:$0xff]
    %v5111 = vld [vmem:[#allocation18 + $0xe8] sm:$0xff]
    %v5112 = vld [vmem:[#allocation18 + $0xf0] sm:$0xff]
    %v5113 = vld [vmem:[#allocation18 + $0xf8] sm:$0xff]
    %v5114 = vld [vmem:[#allocation18 + $0x100] sm:$0xff]
    %v5115 = vld [vmem:[#allocation18 + $0x108] sm:$0xff]
    %v5116 = vld [vmem:[#allocation18 + $0x110] sm:$0xff]
    %v5117 = vld [vmem:[#allocation18 + $0x118] sm:$0xff]
    %v5118 = vld [vmem:[#allocation18 + $0x120] sm:$0xff]
    %v5119 = vld [vmem:[#allocation18 + $0x128] sm:$0xff]
    %v5120 = vld [vmem:[#allocation18 + $0x130] sm:$0xff]
    %v5121 = vld [vmem:[#allocation18 + $0x138] sm:$0xff]
    %v5122 = vld [vmem:[#allocation18 + $0x140] sm:$0xff]
    %v5123 = vld [vmem:[#allocation18 + $0x148] sm:$0xff]
    %v5124 = vld [vmem:[#allocation18 + $0x150] sm:$0xff]
    %v5125 = vld [vmem:[#allocation18 + $0x158] sm:$0xff]
    %v5126 = vld [vmem:[#allocation18 + $0x160] sm:$0xff]
    %v5127 = vld [vmem:[#allocation18 + $0x168] sm:$0xff]
    %v5128 = vld [vmem:[#allocation18 + $0x170] sm:$0xff]
    %v5129 = vld [vmem:[#allocation18 + $0x178] sm:$0xff]
    %v5130 = vld [vmem:[#allocation18 + $0x180] sm:$0xff]
    %v5131 = vld [vmem:[#allocation18 + $0x188] sm:$0xff]
    %v5132 = vld [vmem:[#allocation18 + $0x190] sm:$0xff]
    %v5133 = vld [vmem:[#allocation18 + $0x198] sm:$0xff]
    %v5134 = vld [vmem:[#allocation18 + $0x1a0] sm:$0xff]
    %v5135 = vld [vmem:[#allocation18 + $0x1a8] sm:$0xff]
    %v5136 = vld [vmem:[#allocation18 + $0x1b0] sm:$0xff]
    %v5137 = vld [vmem:[#allocation18 + $0x1b8] sm:$0xff]
    %v5138 = vld [vmem:[#allocation18 + $0x1c0] sm:$0xff]
    %v5139 = vld [vmem:[#allocation18 + $0x1c8] sm:$0xff]
    %v5140 = vld [vmem:[#allocation18 + $0x1d0] sm:$0xff]
    %v5141 = vld [vmem:[#allocation18 + $0x1d8] sm:$0xff]
    %v5142 = vld [vmem:[#allocation18 + $0x1e0] sm:$0xff]
    %v5143 = vld [vmem:[#allocation18 + $0x1e8] sm:$0xff]
    %v5144 = vld [vmem:[#allocation18 + $0x1f0] sm:$0xff]
    %v5145 = vld [vmem:[#allocation18 + $0x1f8] sm:$0xff]
    %v5147 = vperm.slane %v224, 0
    %v5148 = vperm.slane %v224, 1
    %v5149 = vperm.slane %v224, 2
    %v5150 = vperm.slane %v224, 3
    %v5219 = vunpack.c.l.b16 %v5082
    %v5220 = vunpack.c.h.b16 %v5082
    %v5221 = vunpack.c.l.b16 %v5083
    %v5222 = vunpack.c.h.b16 %v5083
    %v5223 = vunpack.c.l.b16 %v5084
    %v5224 = vunpack.c.h.b16 %v5084
    %v5225 = vunpack.c.l.b16 %v5085
    %v5226 = vunpack.c.h.b16 %v5085
    %v5227 = vunpack.c.l.b16 %v5086
    %v5228 = vunpack.c.h.b16 %v5086
    %v5229 = vunpack.c.l.b16 %v5087
    %v5230 = vunpack.c.h.b16 %v5087
    %v5231 = vunpack.c.l.b16 %v5088
    %v5232 = vunpack.c.h.b16 %v5088
    %v5233 = vunpack.c.l.b16 %v5089
    %v5234 = vunpack.c.h.b16 %v5089
    %v5235 = vunpack.c.l.b16 %v5090
    %v5236 = vunpack.c.h.b16 %v5090
    %v5237 = vunpack.c.l.b16 %v5091
    %v5238 = vunpack.c.h.b16 %v5091
    %v5239 = vunpack.c.l.b16 %v5092
    %v5240 = vunpack.c.h.b16 %v5092
    %v5241 = vunpack.c.l.b16 %v5093
    %v5242 = vunpack.c.h.b16 %v5093
    %v5243 = vunpack.c.l.b16 %v5094
    %v5244 = vunpack.c.h.b16 %v5094
    %v5245 = vunpack.c.l.b16 %v5095
    %v5246 = vunpack.c.h.b16 %v5095
    %v5247 = vunpack.c.l.b16 %v5096
    %v5248 = vunpack.c.h.b16 %v5096
    %v5249 = vunpack.c.l.b16 %v5097
    %v5250 = vunpack.c.h.b16 %v5097
    %v5251 = vunpack.c.l.b16 %v5098
    %v5252 = vunpack.c.h.b16 %v5098
    %v5253 = vunpack.c.l.b16 %v5099
    %v5254 = vunpack.c.h.b16 %v5099
    %v5255 = vunpack.c.l.b16 %v5100
    %v5256 = vunpack.c.h.b16 %v5100
    %v5257 = vunpack.c.l.b16 %v5101
    %v5258 = vunpack.c.h.b16 %v5101
    %v5259 = vunpack.c.l.b16 %v5102
    %v5260 = vunpack.c.h.b16 %v5102
    %v5261 = vunpack.c.l.b16 %v5103
    %v5262 = vunpack.c.h.b16 %v5103
    %v5263 = vunpack.c.l.b16 %v5104
    %v5264 = vunpack.c.h.b16 %v5104
    %v5265 = vunpack.c.l.b16 %v5105
    %v5266 = vunpack.c.h.b16 %v5105
    %v5267 = vunpack.c.l.b16 %v5106
    %v5268 = vunpack.c.h.b16 %v5106
    %v5269 = vunpack.c.l.b16 %v5107
    %v5270 = vunpack.c.h.b16 %v5107
    %v5271 = vunpack.c.l.b16 %v5108
    %v5272 = vunpack.c.h.b16 %v5108
    %v5273 = vunpack.c.l.b16 %v5109
    %v5274 = vunpack.c.h.b16 %v5109
    %v5275 = vunpack.c.l.b16 %v5110
    %v5276 = vunpack.c.h.b16 %v5110
    %v5277 = vunpack.c.l.b16 %v5111
    %v5278 = vunpack.c.h.b16 %v5111
    %v5279 = vunpack.c.l.b16 %v5112
    %v5280 = vunpack.c.h.b16 %v5112
    %v5281 = vunpack.c.l.b16 %v5113
    %v5282 = vunpack.c.h.b16 %v5113
    %v5283 = vunpack.c.l.b16 %v5114
    %v5284 = vunpack.c.h.b16 %v5114
    %v5285 = vunpack.c.l.b16 %v5115
    %v5286 = vunpack.c.h.b16 %v5115
    %v5287 = vunpack.c.l.b16 %v5116
    %v5288 = vunpack.c.h.b16 %v5116
    %v5289 = vunpack.c.l.b16 %v5117
    %v5290 = vunpack.c.h.b16 %v5117
    %v5291 = vunpack.c.l.b16 %v5118
    %v5292 = vunpack.c.h.b16 %v5118
    %v5293 = vunpack.c.l.b16 %v5119
    %v5294 = vunpack.c.h.b16 %v5119
    %v5295 = vunpack.c.l.b16 %v5120
    %v5296 = vunpack.c.h.b16 %v5120
    %v5297 = vunpack.c.l.b16 %v5121
    %v5298 = vunpack.c.h.b16 %v5121
    %v5299 = vunpack.c.l.b16 %v5122
    %v5300 = vunpack.c.h.b16 %v5122
    %v5301 = vunpack.c.l.b16 %v5123
    %v5302 = vunpack.c.h.b16 %v5123
    %v5303 = vunpack.c.l.b16 %v5124
    %v5304 = vunpack.c.h.b16 %v5124
    %v5305 = vunpack.c.l.b16 %v5125
    %v5306 = vunpack.c.h.b16 %v5125
    %v5307 = vunpack.c.l.b16 %v5126
    %v5308 = vunpack.c.h.b16 %v5126
    %v5309 = vunpack.c.l.b16 %v5127
    %v5310 = vunpack.c.h.b16 %v5127
    %v5311 = vunpack.c.l.b16 %v5128
    %v5312 = vunpack.c.h.b16 %v5128
    %v5313 = vunpack.c.l.b16 %v5129
    %v5314 = vunpack.c.h.b16 %v5129
    %v5315 = vunpack.c.l.b16 %v5130
    %v5316 = vunpack.c.h.b16 %v5130
    %v5317 = vunpack.c.l.b16 %v5131
    %v5318 = vunpack.c.h.b16 %v5131
    %v5319 = vunpack.c.l.b16 %v5132
    %v5320 = vunpack.c.h.b16 %v5132
    %v5321 = vunpack.c.l.b16 %v5133
    %v5322 = vunpack.c.h.b16 %v5133
    %v5323 = vunpack.c.l.b16 %v5134
    %v5324 = vunpack.c.h.b16 %v5134
    %v5325 = vunpack.c.l.b16 %v5135
    %v5326 = vunpack.c.h.b16 %v5135
    %v5327 = vunpack.c.l.b16 %v5136
    %v5328 = vunpack.c.h.b16 %v5136
    %v5329 = vunpack.c.l.b16 %v5137
    %v5330 = vunpack.c.h.b16 %v5137
    %v5331 = vunpack.c.l.b16 %v5138
    %v5332 = vunpack.c.h.b16 %v5138
    %v5333 = vunpack.c.l.b16 %v5139
    %v5334 = vunpack.c.h.b16 %v5139
    %v5335 = vunpack.c.l.b16 %v5140
    %v5336 = vunpack.c.h.b16 %v5140
    %v5337 = vunpack.c.l.b16 %v5141
    %v5338 = vunpack.c.h.b16 %v5141
    %v5339 = vunpack.c.l.b16 %v5142
    %v5340 = vunpack.c.h.b16 %v5142
    %v5341 = vunpack.c.l.b16 %v5143
    %v5342 = vunpack.c.h.b16 %v5143
    %v5343 = vunpack.c.l.b16 %v5144
    %v5344 = vunpack.c.h.b16 %v5144
    %v5345 = vunpack.c.l.b16 %v5145
    %v5346 = vunpack.c.h.b16 %v5145
    %v5347 = vpack.c.b16 %v5223, %v5219
    %v5348 = vpack.c.b16 %v5224, %v5220
    %v5349 = vpack.c.b16 %v5225, %v5221
    %v5350 = vpack.c.b16 %v5226, %v5222
    %v5351 = vpack.c.b16 %v5231, %v5227
    %v5352 = vpack.c.b16 %v5232, %v5228
    %v5353 = vpack.c.b16 %v5233, %v5229
    %v5354 = vpack.c.b16 %v5234, %v5230
    %v5355 = vpack.c.b16 %v5239, %v5235
    %v5356 = vpack.c.b16 %v5240, %v5236
    %v5357 = vpack.c.b16 %v5241, %v5237
    %v5358 = vpack.c.b16 %v5242, %v5238
    %v5359 = vpack.c.b16 %v5247, %v5243
    %v5360 = vpack.c.b16 %v5248, %v5244
    %v5361 = vpack.c.b16 %v5249, %v5245
    %v5362 = vpack.c.b16 %v5250, %v5246
    %v5363 = vpack.c.b16 %v5255, %v5251
    %v5364 = vpack.c.b16 %v5256, %v5252
    %v5365 = vpack.c.b16 %v5257, %v5253
    %v5366 = vpack.c.b16 %v5258, %v5254
    %v5367 = vpack.c.b16 %v5263, %v5259
    %v5368 = vpack.c.b16 %v5264, %v5260
    %v5369 = vpack.c.b16 %v5265, %v5261
    %v5370 = vpack.c.b16 %v5266, %v5262
    %v5371 = vpack.c.b16 %v5271, %v5267
    %v5372 = vpack.c.b16 %v5272, %v5268
    %v5373 = vpack.c.b16 %v5273, %v5269
    %v5374 = vpack.c.b16 %v5274, %v5270
    %v5375 = vpack.c.b16 %v5279, %v5275
    %v5376 = vpack.c.b16 %v5280, %v5276
    %v5377 = vpack.c.b16 %v5281, %v5277
    %v5378 = vpack.c.b16 %v5282, %v5278
    %v5379 = vpack.c.b16 %v5287, %v5283
    %v5380 = vpack.c.b16 %v5288, %v5284
    %v5381 = vpack.c.b16 %v5289, %v5285
    %v5382 = vpack.c.b16 %v5290, %v5286
    %v5383 = vpack.c.b16 %v5295, %v5291
    %v5384 = vpack.c.b16 %v5296, %v5292
    %v5385 = vpack.c.b16 %v5297, %v5293
    %v5386 = vpack.c.b16 %v5298, %v5294
    %v5387 = vpack.c.b16 %v5303, %v5299
    %v5388 = vpack.c.b16 %v5304, %v5300
    %v5389 = vpack.c.b16 %v5305, %v5301
    %v5390 = vpack.c.b16 %v5306, %v5302
    %v5391 = vpack.c.b16 %v5311, %v5307
    %v5392 = vpack.c.b16 %v5312, %v5308
    %v5393 = vpack.c.b16 %v5313, %v5309
    %v5394 = vpack.c.b16 %v5314, %v5310
    %v5395 = vpack.c.b16 %v5319, %v5315
    %v5396 = vpack.c.b16 %v5320, %v5316
    %v5397 = vpack.c.b16 %v5321, %v5317
    %v5398 = vpack.c.b16 %v5322, %v5318
    %v5399 = vpack.c.b16 %v5327, %v5323
    %v5400 = vpack.c.b16 %v5328, %v5324
    %v5401 = vpack.c.b16 %v5329, %v5325
    %v5402 = vpack.c.b16 %v5330, %v5326
    %v5403 = vpack.c.b16 %v5335, %v5331
    %v5404 = vpack.c.b16 %v5336, %v5332
    %v5405 = vpack.c.b16 %v5337, %v5333
    %v5406 = vpack.c.b16 %v5338, %v5334
    %v5407 = vpack.c.b16 %v5343, %v5339
    %v5408 = vpack.c.b16 %v5344, %v5340
    %v5409 = vpack.c.b16 %v5345, %v5341
    %v5410 = vpack.c.b16 %v5346, %v5342
    %5475 = vmatpush.bf16.msra.mxu0 %v5375
    %5476 = vmatpush.bf16.msra.mxu0 %v5371
    %5477 = vmatpush.bf16.msra.mxu0 %v5367
    %5478 = vmatpush.bf16.msra.mxu0 %v5363
    %5479 = vmatpush.bf16.msra.mxu0 %v5359
    %5480 = vmatpush.bf16.msra.mxu0 %v5355
    %5481 = vmatpush.bf16.msra.mxu0 %v5351
    %5482 = vmatpush.bf16.msra.mxu0 %v5347
    %5483 = vmatmul.bf16.gmra.mxu0 %v5080
    %v5484 = vpop.f32.mrf.mxu0
    %v5485 = vadd.f32 %v5147, %v5484
    %v5486 = vpop.f32.mrf.mxu0
    %5487 = vdwg.mxu0
    %5488 = vmatpush.bf16.msra.mxu0 %v5407
    %5489 = vmatpush.bf16.msra.mxu0 %v5403
    %5490 = vmatpush.bf16.msra.mxu0 %v5399
    %5491 = vmatpush.bf16.msra.mxu0 %v5395
    %5492 = vmatpush.bf16.msra.mxu0 %v5391
    %5493 = vmatpush.bf16.msra.mxu0 %v5387
    %5494 = vmatpush.bf16.msra.mxu0 %v5383
    %5495 = vmatpush.bf16.msra.mxu0 %v5379
    %5496 = vmatmul.bf16.gmra.mxu0 %v5081
    %v5497 = vpop.f32.mrf.mxu0
    %v5498 = vadd.f32 %v5485, %v5497
    %v5499 = vpop.f32.mrf.mxu0
    %5500 = vdwg.mxu0
    %5501 = vmatpush.bf16.msra.mxu0 %v5376
    %5502 = vmatpush.bf16.msra.mxu0 %v5372
    %5503 = vmatpush.bf16.msra.mxu0 %v5368
    %5504 = vmatpush.bf16.msra.mxu0 %v5364
    %5505 = vmatpush.bf16.msra.mxu0 %v5360
    %5506 = vmatpush.bf16.msra.mxu0 %v5356
    %5507 = vmatpush.bf16.msra.mxu0 %v5352
    %5508 = vmatpush.bf16.msra.mxu0 %v5348
    %5509 = vmatmul.bf16.gmra.mxu0 %v5080
    %v5510 = vpop.f32.mrf.mxu0
    %v5511 = vadd.f32 %v5148, %v5510
    %v5512 = vpop.f32.mrf.mxu0
    %5513 = vdwg.mxu0
    %5514 = vmatpush.bf16.msra.mxu0 %v5408
    %5515 = vmatpush.bf16.msra.mxu0 %v5404
    %5516 = vmatpush.bf16.msra.mxu0 %v5400
    %5517 = vmatpush.bf16.msra.mxu0 %v5396
    %5518 = vmatpush.bf16.msra.mxu0 %v5392
    %5519 = vmatpush.bf16.msra.mxu0 %v5388
    %5520 = vmatpush.bf16.msra.mxu0 %v5384
    %5521 = vmatpush.bf16.msra.mxu0 %v5380
    %5522 = vmatmul.bf16.gmra.mxu0 %v5081
    %v5523 = vpop.f32.mrf.mxu0
    %v5524 = vadd.f32 %v5511, %v5523
    %v5525 = vpop.f32.mrf.mxu0
    %5526 = vdwg.mxu0
    %5527 = vmatpush.bf16.msra.mxu0 %v5377
    %5528 = vmatpush.bf16.msra.mxu0 %v5373
    %5529 = vmatpush.bf16.msra.mxu0 %v5369
    %5530 = vmatpush.bf16.msra.mxu0 %v5365
    %5531 = vmatpush.bf16.msra.mxu0 %v5361
    %5532 = vmatpush.bf16.msra.mxu0 %v5357
    %5533 = vmatpush.bf16.msra.mxu0 %v5353
    %5534 = vmatpush.bf16.msra.mxu0 %v5349
    %5535 = vmatmul.bf16.gmra.mxu0 %v5080
    %v5536 = vpop.f32.mrf.mxu0
    %v5537 = vadd.f32 %v5149, %v5536
    %v5538 = vpop.f32.mrf.mxu0
    %5539 = vdwg.mxu0
    %5540 = vmatpush.bf16.msra.mxu0 %v5409
    %5541 = vmatpush.bf16.msra.mxu0 %v5405
    %5542 = vmatpush.bf16.msra.mxu0 %v5401
    %5543 = vmatpush.bf16.msra.mxu0 %v5397
    %5544 = vmatpush.bf16.msra.mxu0 %v5393
    %5545 = vmatpush.bf16.msra.mxu0 %v5389
    %5546 = vmatpush.bf16.msra.mxu0 %v5385
    %5547 = vmatpush.bf16.msra.mxu0 %v5381
    %5548 = vmatmul.bf16.gmra.mxu0 %v5081
    %v5549 = vpop.f32.mrf.mxu0
    %v5550 = vadd.f32 %v5537, %v5549
    %v5551 = vpop.f32.mrf.mxu0
    %5552 = vdwg.mxu0
    %5553 = vmatpush.bf16.msra.mxu0 %v5378
    %5554 = vmatpush.bf16.msra.mxu0 %v5374
    %5555 = vmatpush.bf16.msra.mxu0 %v5370
    %5556 = vmatpush.bf16.msra.mxu0 %v5366
    %5557 = vmatpush.bf16.msra.mxu0 %v5362
    %5558 = vmatpush.bf16.msra.mxu0 %v5358
    %5559 = vmatpush.bf16.msra.mxu0 %v5354
    %5560 = vmatpush.bf16.msra.mxu0 %v5350
    %5561 = vmatmul.bf16.gmra.mxu0 %v5080
    %v5562 = vpop.f32.mrf.mxu0
    %v5563 = vadd.f32 %v5150, %v5562
    %v5564 = vpop.f32.mrf.mxu0
    %5565 = vdwg.mxu0
    %5566 = vmatpush.bf16.msra.mxu0 %v5410
    %5567 = vmatpush.bf16.msra.mxu0 %v5406
    %5568 = vmatpush.bf16.msra.mxu0 %v5402
    %5569 = vmatpush.bf16.msra.mxu0 %v5398
    %5570 = vmatpush.bf16.msra.mxu0 %v5394
    %5571 = vmatpush.bf16.msra.mxu0 %v5390
    %5572 = vmatpush.bf16.msra.mxu0 %v5386
    %5573 = vmatpush.bf16.msra.mxu0 %v5382
    %5574 = vmatmul.bf16.gmra.mxu0 %v5081
    %v5575 = vpop.f32.mrf.mxu0
    %v5576 = vadd.f32 %v5563, %v5575
    %v5577 = vpop.f32.mrf.mxu0
    %5578 = vdwg.mxu0
    %5579 = vst [vmem:[#allocation20] sm:$0xff] %v5498
    %5580 = vst [vmem:[#allocation20 + $0x8] sm:$0xff] %v5524
    %5581 = vst [vmem:[#allocation20 + $0x10] sm:$0xff] %v5550
    %5582 = vst [vmem:[#allocation20 + $0x18] sm:$0xff] %v5576
    // Predicated region
    $region106: #{forward.1} parent=1 // pred_check
      _
    $region107: #{forward.1} parent=1 // pred_check_branch
      %5584 = sbr.rel (0) target = $region109
    $region108: #{forward.1} parent=1 // pred_region
      _
    $region109: #{forward.1} parent=1 // pred_fallthru
      _
    // Predicated region
    $region110: #{forward.1} parent=1 // pred_check
      _
    $region111: #{forward.1} parent=1 // pred_check_branch
      %5586 = sbr.rel (0) target = $region113
    $region112: #{forward.1} parent=1 // pred_region
      %5588 = vsyncadd [#allocation5], 0
      %s5590 = sshll.u32 [#allocation20], 4
      %s5591 = int_to_ptr.vmem [resolvable:$true] %s5590
      %s5592 = sshll.u32 %s17, 4
      %s5593 = int_to_ptr.hbm [resolvable:$true] %s5592
      %5595 = dma.vmem_to_hbm [thread:$0]  %s5591, 512, %s5593, [#allocation5]
    $region113: #{forward.1} parent=1 // pred_fallthru
      _
    // Predicated region
    $region114: #{forward.1} parent=1 // pred_check
      _
    $region115: #{forward.1} parent=1 // pred_check_branch
      %5597 = sbr.rel (0) target = $region117
    $region116: #{forward.1} parent=1 // pred_region
      _
    $region117: #{forward.1} parent=1 // pred_fallthru
      _
    // Predicated region
    $region118: #{forward.1} parent=1 // pred_check
      _
    $region119: #{forward.1} parent=1 // pred_check_branch
      %5599 = sbr.rel (0) target = $region121
    $region120: #{forward.1} parent=1 // pred_region
      %5601 = dma.done [#allocation5], 512
    $region121: #{forward.1} parent=1 // pred_fallthru
      _
    %5602 = vsyncpa [#allocation4], 1
    %5603 = vsyncpa [#allocation7], 1
    %5604 = vsyncpa [#allocation10], 1
    %5605 = vsyncpa [#allocation13], 1
    %5606 = vsyncpa [#allocation16], 1
    %5607 = vsyncpa [#allocation19], 1
    %5608 = vsyncpa [#allocation5], 1

</llo_original>
